<compile_context>
chip_gen: v7x
topology: tpu7x:2x2x1
jax: 0.10.0
libtpu: 0.0.40
codegen_flags: <defaults>
</compile_context>

<pallas_src>
import jax
import jax.numpy as jnp
from jax.experimental import pallas as pl
from jax.experimental.pallas import tpu as pltpu


LAYER_DIMS = [(784, 520), (520, 320), (320, 240), (240, 120), (120, 10)]
NUM_CLASSES = 10
LANE = 128


def _round_up(n, m):
    return ((n + m - 1) // m) * m


OUT_PAD = _round_up(NUM_CLASSES, LANE)             # 128


def _default_tile_rows():
    """256 rows fills the 256-wide MXU on v6e/v7x; 128 on v5e."""
    try:
        kind = jax.devices()[0].device_kind.lower()
    except Exception:
        kind = ""
    if ("v5 lite" in kind) or ("v5e" in kind) or ("v5litepod" in kind):
        return 128
    return 256


def _choose_tiling(B, tb_max):
    """Adaptive batch tile; always >= 2 grid tiles so both v7x TCs get work."""
    if B <= 2 * tb_max:
        tb = max(16, _round_up((B + 1) // 2, 16))
        n_tiles = 2
    else:
        tb = tb_max
        n_tiles = pl.cdiv(B, tb)
    return tb, n_tiles


def _make_kernel(tb, n_half):
    """Fused 5-layer MLP + softmax kernel for one (tb, 784) batch tile."""
    half = tb // n_half

    def kernel(x_ref,
               w1_ref, b1_ref,
               w2_ref, b2_ref,
               w3_ref, b3_ref,
               w4_ref, b4_ref,
               w5_ref, b5_ref,
               out_ref):
        ws = (w1_ref, w2_ref, w3_ref, w4_ref, w5_ref)
        bs = (b1_ref, b2_ref, b3_ref, b4_ref, b5_ref)

        def stream(h):
            # Hidden layers: bf16 matmul, f32 accumulate, bias + ReLU, back to bf16.
            for li in range(4):
                h = jnp.dot(h, ws[li][...],
                            preferred_element_type=jnp.float32) + bs[li][...]
                h = jnp.maximum(h, 0.0).astype(jnp.bfloat16)
            # Final layer + numerically stable softmax over the real 10 classes.
            logits = jnp.dot(h, ws[4][...],
                             preferred_element_type=jnp.float32) + bs[4][...]
            col = jax.lax.broadcasted_iota(jnp.int32, logits.shape, dimension=1)
            logits = jnp.where(col < NUM_CLASSES, logits, -jnp.inf)
            m = jnp.max(logits, axis=-1, keepdims=True)
            e = jnp.exp(logits - m)
            denom = jnp.sum(e, axis=-1, keepdims=True)
            return (e * pl.reciprocal(denom, approx=True)).astype(out_ref.dtype)

        # Independent half-tile row streams (n_half=2 for big tiles) let the
        # LLO scheduler overlap one half's MXU work with the other's VPU
        # epilogue. Slices are static and 16-row aligned (bf16 sublane tile).
        for s in range(n_half):
            r0 = s * half
            out_ref[r0:r0 + half, :] = stream(x_ref[r0:r0 + half, :])

    return kernel


def mnistclassify_forward(x, padded_params, *, tb=None):
    """x: (B, 1, 28, 28) or (B, 784) float32.
    padded_params: list of (W_bf16 (in_pad, out_pad), b_f32 (1, out_pad))."""
    x = x.reshape(-1, 784)                       # x.view(-1, 784)
    B = x.shape[0]

    if tb is None:
        tb = _default_tile_rows()
    tb_eff, n_tiles = _choose_tiling(B, tb)
    B_pad = n_tiles * tb_eff

    # Pad only the batch axis (no 784->896 feature pad); cast to bf16 for MXU.
    x_p = jnp.pad(x, ((0, B_pad - B), (0, 0))).astype(jnp.bfloat16)

    flat_args = [x_p]
    in_specs = [pl.BlockSpec((tb_eff, 784), lambda i: (i, 0))]
    for w_p, b_p in padded_params:
        flat_args.append(w_p)
        flat_args.append(b_p)
        # Weights/biases: full-array blocks, constant index_map -> resident in
        # VMEM across all batch tiles (DMA'd once).
        in_specs.append(pl.BlockSpec(w_p.shape, lambda i: (0, 0)))
        in_specs.append(pl.BlockSpec(b_p.shape, lambda i: (0, 0)))

    n_half = 2 if (tb_eff >= 64 and tb_eff % 32 == 0) else 1
    kernel = _make_kernel(tb_eff, n_half)

    out_padded = pl.pallas_call(
        kernel,
        out_shape=jax.ShapeDtypeStruct((B_pad, OUT_PAD), jnp.bfloat16),
        grid=(n_tiles,),
        in_specs=in_specs,
        out_specs=pl.BlockSpec((tb_eff, OUT_PAD), lambda i: (i, 0)),
        compiler_params=pltpu.CompilerParams(
            dimension_semantics=("parallel",),
            vmem_limit_bytes=32 << 20,
        ),
    )(*flat_args)

    # bf16 store halves writeback; upcast outside to match torch's f32 output.
    return out_padded[:B, :NUM_CLASSES].astype(jnp.float32)


def init_params(key):
    """Deterministic init mimicking nn.Linear default (uniform +/- 1/sqrt(fan_in)).
    Returns unpadded f32 params (W stored pre-transposed as (in, out))."""
    params = []
    for (fan_in, fan_out) in LAYER_DIMS:
        key, kw, kb = jax.random.split(key, 3)
        bound = 1.0 / jnp.sqrt(fan_in)
        w_t = jax.random.uniform(kw, (fan_in, fan_out), jnp.float32, -bound, bound)
        b = jax.random.uniform(kb, (fan_out,), jnp.float32, -bound, bound)
        params.append((w_t, b))
    return params


def pad_params(base_params):
    """Zero-pad to 128-lane multiples (weights bf16, biases f32).
    Layer 1 keeps its 784 input rows (matches the unpadded x block);
    later layers pad fan_in to the previous layer's padded width."""
    padded = []
    for idx, ((fan_in, fan_out), (w, b)) in enumerate(zip(LAYER_DIMS, base_params)):
        in_p = fan_in if idx == 0 else _round_up(fan_in, LANE)
        out_p = _round_up(fan_out, LANE)
        w_p = jnp.pad(w, ((0, in_p - fan_in), (0, out_p - fan_out))).astype(jnp.bfloat16)
        b_p = jnp.pad(b, (0, out_p - fan_out)).reshape(1, out_p).astype(jnp.float32)
        padded.append((w_p, b_p))
    return padded


def reference_forward(x, base_params):
    """Pure-JAX f32 reference matching the PyTorch forward."""
    h = x.reshape(-1, 784)
    n = len(base_params)
    for i, (w, b) in enumerate(base_params):
        h = h @ w + b
        if i < n - 1:
            h = jnp.maximum(h, 0.0)
    return jax.nn.softmax(h, axis=-1)


if __name__ == "__main__":
    key = jax.random.PRNGKey(0)
    key, kx1, kx2 = jax.random.split(key, 3)

    base_params = init_params(key)
    padded_params = pad_params(base_params)

    # 1) Small MNIST-like batch: (B, 1, 28, 28) NCHW -> adaptive 2 x 16-row tiles.
    B1 = 8
    x1 = jax.random.normal(kx1, (B1, 1, 28, 28), dtype=jnp.float32)
    out1 = jax.block_until_ready(mnistclassify_forward(x1, padded_params))
    assert out1.shape == (B1, NUM_CLASSES)
    assert bool(jnp.allclose(jnp.sum(out1, axis=-1), 1.0, atol=5e-3))
    ref1 = reference_forward(x1, base_params)
    assert bool(jnp.allclose(out1, ref1, atol=5e-2))

    # 2) Larger batch: exercises the half-tile-split path (tb=64, two 32-row streams).
    B2 = 128
    x2 = jax.random.normal(kx2, (B2, 784), dtype=jnp.float32)
    out2 = jax.block_until_ready(mnistclassify_forward(x2, padded_params))
    assert out2.shape == (B2, NUM_CLASSES)
    assert bool(jnp.allclose(jnp.sum(out2, axis=-1), 1.0, atol=5e-3))
    ref2 = reference_forward(x2, base_params)
    assert bool(jnp.allclose(out2, ref2, atol=5e-2))

    print("KERNEL_OK")
</pallas_src>

<mosaic_0001>
module attributes {stable_mosaic.version = 11 : i64} {
  func.func @kernel(%arg0: i32, %arg1: memref<16x784xbf16, #tpu.memory_space<vmem>>, %arg2: memref<784x640xbf16, #tpu.memory_space<vmem>>, %arg3: memref<1x640xf32, #tpu.memory_space<vmem>>, %arg4: memref<640x384xbf16, #tpu.memory_space<vmem>>, %arg5: memref<1x384xf32, #tpu.memory_space<vmem>>, %arg6: memref<384x256xbf16, #tpu.memory_space<vmem>>, %arg7: memref<1x256xf32, #tpu.memory_space<vmem>>, %arg8: memref<256x128xbf16, #tpu.memory_space<vmem>>, %arg9: memref<1x128xf32, #tpu.memory_space<vmem>>, %arg10: memref<128x128xbf16, #tpu.memory_space<vmem>>, %arg11: memref<1x128xf32, #tpu.memory_space<vmem>>, %arg12: memref<16x128xbf16, #tpu.memory_space<vmem>>) attributes {dimension_semantics = [#tpu.dimension_semantics<parallel>], iteration_bounds = array<i64: 2>, scalar_prefetch = 0 : i64, scratch_operands = 0 : i64, tpu.core_type = #tpu.core_type<tc>, window_params = [{transform_indices = @transform_0, window_bounds = array<i64: 16, 784>}, {pipeline_mode = #tpu.pipeline_mode<synchronous>, transform_indices = @transform_1, window_bounds = array<i64: 784, 640>}, {pipeline_mode = #tpu.pipeline_mode<synchronous>, transform_indices = @transform_2, window_bounds = array<i64: 1, 640>}, {pipeline_mode = #tpu.pipeline_mode<synchronous>, transform_indices = @transform_3, window_bounds = array<i64: 640, 384>}, {pipeline_mode = #tpu.pipeline_mode<synchronous>, transform_indices = @transform_4, window_bounds = array<i64: 1, 384>}, {pipeline_mode = #tpu.pipeline_mode<synchronous>, transform_indices = @transform_5, window_bounds = array<i64: 384, 256>}, {pipeline_mode = #tpu.pipeline_mode<synchronous>, transform_indices = @transform_6, window_bounds = array<i64: 1, 256>}, {pipeline_mode = #tpu.pipeline_mode<synchronous>, transform_indices = @transform_7, window_bounds = array<i64: 256, 128>}, {pipeline_mode = #tpu.pipeline_mode<synchronous>, transform_indices = @transform_8, window_bounds = array<i64: 1, 128>}, {pipeline_mode = #tpu.pipeline_mode<synchronous>, transform_indices = @transform_9, window_bounds = array<i64: 128, 128>}, {pipeline_mode = #tpu.pipeline_mode<synchronous>, transform_indices = @transform_10, window_bounds = array<i64: 1, 128>}, {transform_indices = @transform_11, window_bounds = array<i64: 16, 128>}]} {
    %c0 = arith.constant 0 : index
    %c0_0 = arith.constant 0 : index
    %0 = vector.load %arg1[%c0, %c0_0] : memref<16x784xbf16, #tpu.memory_space<vmem>>, vector<16x784xbf16>
    %c0_1 = arith.constant 0 : index
    %c0_2 = arith.constant 0 : index
    %1 = vector.load %arg2[%c0_1, %c0_2] : memref<784x640xbf16, #tpu.memory_space<vmem>>, vector<784x640xbf16>
    %cst = arith.constant dense<0.000000e+00> : vector<16x640xf32>
    %2 = tpu.matmul %0, %1, %cst {dimension_numbers = #tpu.dot_dimension_numbers<[1], [0], [0], [1], [0, 0, 1, 1], [], []>} : vector<16x784xbf16>, vector<784x640xbf16>, vector<16x640xf32> -> vector<16x640xf32>
    %c0_3 = arith.constant 0 : index
    %c0_4 = arith.constant 0 : index
    %3 = vector.load %arg3[%c0_3, %c0_4] : memref<1x640xf32, #tpu.memory_space<vmem>>, vector<1x640xf32>
    %4 = vector.broadcast %3 : vector<1x640xf32> to vector<16x640xf32>
    %5 = arith.addf %2, %4 : vector<16x640xf32>
    %cst_5 = arith.constant 0.000000e+00 : f32
    %6 = vector.broadcast %cst_5 : f32 to vector<16x640xf32>
    %7 = arith.maximumf %5, %6 : vector<16x640xf32>
    %8 = arith.truncf %7 : vector<16x640xf32> to vector<16x640xbf16>
    %c0_6 = arith.constant 0 : index
    %c0_7 = arith.constant 0 : index
    %9 = vector.load %arg4[%c0_6, %c0_7] : memref<640x384xbf16, #tpu.memory_space<vmem>>, vector<640x384xbf16>
    %cst_8 = arith.constant dense<0.000000e+00> : vector<16x384xf32>
    %10 = tpu.matmul %8, %9, %cst_8 {dimension_numbers = #tpu.dot_dimension_numbers<[1], [0], [0], [1], [0, 0, 1, 1], [], []>} : vector<16x640xbf16>, vector<640x384xbf16>, vector<16x384xf32> -> vector<16x384xf32>
    %c0_9 = arith.constant 0 : index
    %c0_10 = arith.constant 0 : index
    %11 = vector.load %arg5[%c0_9, %c0_10] : memref<1x384xf32, #tpu.memory_space<vmem>>, vector<1x384xf32>
    %12 = vector.broadcast %11 : vector<1x384xf32> to vector<16x384xf32>
    %13 = arith.addf %10, %12 : vector<16x384xf32>
    %cst_11 = arith.constant 0.000000e+00 : f32
    %14 = vector.broadcast %cst_11 : f32 to vector<16x384xf32>
    %15 = arith.maximumf %13, %14 : vector<16x384xf32>
    %16 = arith.truncf %15 : vector<16x384xf32> to vector<16x384xbf16>
    %c0_12 = arith.constant 0 : index
    %c0_13 = arith.constant 0 : index
    %17 = vector.load %arg6[%c0_12, %c0_13] : memref<384x256xbf16, #tpu.memory_space<vmem>>, vector<384x256xbf16>
    %cst_14 = arith.constant dense<0.000000e+00> : vector<16x256xf32>
    %18 = tpu.matmul %16, %17, %cst_14 {dimension_numbers = #tpu.dot_dimension_numbers<[1], [0], [0], [1], [0, 0, 1, 1], [], []>} : vector<16x384xbf16>, vector<384x256xbf16>, vector<16x256xf32> -> vector<16x256xf32>
    %c0_15 = arith.constant 0 : index
    %c0_16 = arith.constant 0 : index
    %19 = vector.load %arg7[%c0_15, %c0_16] : memref<1x256xf32, #tpu.memory_space<vmem>>, vector<1x256xf32>
    %20 = vector.broadcast %19 : vector<1x256xf32> to vector<16x256xf32>
    %21 = arith.addf %18, %20 : vector<16x256xf32>
    %cst_17 = arith.constant 0.000000e+00 : f32
    %22 = vector.broadcast %cst_17 : f32 to vector<16x256xf32>
    %23 = arith.maximumf %21, %22 : vector<16x256xf32>
    %24 = arith.truncf %23 : vector<16x256xf32> to vector<16x256xbf16>
    %c0_18 = arith.constant 0 : index
    %c0_19 = arith.constant 0 : index
    %25 = vector.load %arg8[%c0_18, %c0_19] : memref<256x128xbf16, #tpu.memory_space<vmem>>, vector<256x128xbf16>
    %cst_20 = arith.constant dense<0.000000e+00> : vector<16x128xf32>
    %26 = tpu.matmul %24, %25, %cst_20 {dimension_numbers = #tpu.dot_dimension_numbers<[1], [0], [0], [1], [0, 0, 1, 1], [], []>} : vector<16x256xbf16>, vector<256x128xbf16>, vector<16x128xf32> -> vector<16x128xf32>
    %c0_21 = arith.constant 0 : index
    %c0_22 = arith.constant 0 : index
    %27 = vector.load %arg9[%c0_21, %c0_22] : memref<1x128xf32, #tpu.memory_space<vmem>>, vector<1x128xf32>
    %28 = vector.broadcast %27 : vector<1x128xf32> to vector<16x128xf32>
    %29 = arith.addf %26, %28 : vector<16x128xf32>
    %cst_23 = arith.constant 0.000000e+00 : f32
    %30 = vector.broadcast %cst_23 : f32 to vector<16x128xf32>
    %31 = arith.maximumf %29, %30 : vector<16x128xf32>
    %32 = arith.truncf %31 : vector<16x128xf32> to vector<16x128xbf16>
    %c0_24 = arith.constant 0 : index
    %c0_25 = arith.constant 0 : index
    %33 = vector.load %arg10[%c0_24, %c0_25] : memref<128x128xbf16, #tpu.memory_space<vmem>>, vector<128x128xbf16>
    %cst_26 = arith.constant dense<0.000000e+00> : vector<16x128xf32>
    %34 = tpu.matmul %32, %33, %cst_26 {dimension_numbers = #tpu.dot_dimension_numbers<[1], [0], [0], [1], [0, 0, 1, 1], [], []>} : vector<16x128xbf16>, vector<128x128xbf16>, vector<16x128xf32> -> vector<16x128xf32>
    %c0_27 = arith.constant 0 : index
    %c0_28 = arith.constant 0 : index
    %35 = vector.load %arg11[%c0_27, %c0_28] : memref<1x128xf32, #tpu.memory_space<vmem>>, vector<1x128xf32>
    %36 = vector.broadcast %35 : vector<1x128xf32> to vector<16x128xf32>
    %37 = arith.addf %34, %36 : vector<16x128xf32>
    %38 = tpu.iota {dimensions = array<i32: 1>} : vector<16x128xi32>
    %c10_i32 = arith.constant 10 : i32
    %39 = vector.broadcast %c10_i32 : i32 to vector<16x128xi32>
    %40 = arith.cmpi slt, %38, %39 : vector<16x128xi32>
    %cst_29 = arith.constant 0xFF800000 : f32
    %41 = vector.broadcast %cst_29 : f32 to vector<16x128xf32>
    %42 = arith.select %40, %37, %41 : vector<16x128xi1>, vector<16x128xf32>
    %cst_30 = arith.constant dense<0xFF800000> : vector<16xf32>
    %43 = vector.multi_reduction <maximumf>, %42, %cst_30 [1] : vector<16x128xf32> to vector<16xf32>
    %44 = vector.shape_cast %43 : vector<16xf32> to vector<16x1xf32>
    %45 = vector.broadcast %44 : vector<16x1xf32> to vector<16x128xf32>
    %46 = arith.subf %42, %45 : vector<16x128xf32>
    %47 = math.exp %46 : vector<16x128xf32>
    %cst_31 = arith.constant dense<0.000000e+00> : vector<16xf32>
    %48 = vector.multi_reduction <add>, %47, %cst_31 [1] : vector<16x128xf32> to vector<16xf32>
    %49 = vector.shape_cast %48 : vector<16xf32> to vector<16x1xf32>
    %50 = tpu.reciprocal %49 {approx = true} : vector<16x1xf32> -> vector<16x1xf32>
    %51 = vector.broadcast %50 : vector<16x1xf32> to vector<16x128xf32>
    %52 = arith.mulf %47, %51 : vector<16x128xf32>
    %53 = arith.truncf %52 : vector<16x128xf32> to vector<16x128xbf16>
    %c0_32 = arith.constant 0 : index
    %c0_33 = arith.constant 0 : index
    %54 = vector.load %arg12[%c0_32, %c0_33] : memref<16x128xbf16, #tpu.memory_space<vmem>>, vector<16x128xbf16>
    tpu.vector_store %arg12[%c0_32, %c0_33], %53 {strides = array<i32>} : memref<16x128xbf16, #tpu.memory_space<vmem>>, vector<16x128xbf16>,
    return
  }
  func.func @transform_0(%arg0: i32) -> (i32, i32) {
    %c0_i32 = arith.constant 0 : i32
    %c0_i32_0 = arith.constant 0 : i32
    return %arg0, %c0_i32 : i32, i32
  }
  func.func @transform_1(%arg0: i32) -> (i32, i32) {
    %c0_i32 = arith.constant 0 : i32
    %c0_i32_0 = arith.constant 0 : i32
    %c0_i32_1 = arith.constant 0 : i32
    return %c0_i32, %c0_i32_0 : i32, i32
  }
  func.func @transform_2(%arg0: i32) -> (i32, i32) {
    %c0_i32 = arith.constant 0 : i32
    %c0_i32_0 = arith.constant 0 : i32
    %c0_i32_1 = arith.constant 0 : i32
    return %c0_i32, %c0_i32_0 : i32, i32
  }
  func.func @transform_3(%arg0: i32) -> (i32, i32) {
    %c0_i32 = arith.constant 0 : i32
    %c0_i32_0 = arith.constant 0 : i32
    %c0_i32_1 = arith.constant 0 : i32
    return %c0_i32, %c0_i32_0 : i32, i32
  }
  func.func @transform_4(%arg0: i32) -> (i32, i32) {
    %c0_i32 = arith.constant 0 : i32
    %c0_i32_0 = arith.constant 0 : i32
    %c0_i32_1 = arith.constant 0 : i32
    return %c0_i32, %c0_i32_0 : i32, i32
  }
  func.func @transform_5(%arg0: i32) -> (i32, i32) {
    %c0_i32 = arith.constant 0 : i32
    %c0_i32_0 = arith.constant 0 : i32
    %c0_i32_1 = arith.constant 0 : i32
    return %c0_i32, %c0_i32_0 : i32, i32
  }
  func.func @transform_6(%arg0: i32) -> (i32, i32) {
    %c0_i32 = arith.constant 0 : i32
    %c0_i32_0 = arith.constant 0 : i32
    %c0_i32_1 = arith.constant 0 : i32
    return %c0_i32, %c0_i32_0 : i32, i32
  }
  func.func @transform_7(%arg0: i32) -> (i32, i32) {
    %c0_i32 = arith.constant 0 : i32
    %c0_i32_0 = arith.constant 0 : i32
    %c0_i32_1 = arith.constant 0 : i32
    return %c0_i32, %c0_i32_0 : i32, i32
  }
  func.func @transform_8(%arg0: i32) -> (i32, i32) {
    %c0_i32 = arith.constant 0 : i32
    %c0_i32_0 = arith.constant 0 : i32
    %c0_i32_1 = arith.constant 0 : i32
    return %c0_i32, %c0_i32_0 : i32, i32
  }
  func.func @transform_9(%arg0: i32) -> (i32, i32) {
    %c0_i32 = arith.constant 0 : i32
    %c0_i32_0 = arith.constant 0 : i32
    %c0_i32_1 = arith.constant 0 : i32
    return %c0_i32, %c0_i32_0 : i32, i32
  }
  func.func @transform_10(%arg0: i32) -> (i32, i32) {
    %c0_i32 = arith.constant 0 : i32
    %c0_i32_0 = arith.constant 0 : i32
    %c0_i32_1 = arith.constant 0 : i32
    return %c0_i32, %c0_i32_0 : i32, i32
  }
  func.func @transform_11(%arg0: i32) -> (i32, i32) {
    %c0_i32 = arith.constant 0 : i32
    %c0_i32_0 = arith.constant 0 : i32
    return %arg0, %c0_i32 : i32, i32
  }
}

</mosaic_0001>

<llo_original>
// kernel: tpu_custom_call.1
$region0: #{tpu_custom_call.1}
  #allocation0 [shape = 'u32[]', space=smem, size = 0x4, offset = 0x4, fixed_abs, tag = 'smem constant byte address 0x4 - core index']
  #allocation1 [shape = 'u32[144,128]{1,0:T(1,128)}', space=vmem, size = 0x12000, scoped, tag = 'internal scratch']
  %s0 = inlined_call_operand.hbm [shape: bf16[32,784], index: 0, kind: input, shape index: {}]
  %s1 = inlined_call_operand.hbm [shape: bf16[784,640], index: 1, kind: input, shape index: {}]
  %s2 = inlined_call_operand.vmem [shape: f32[1,640], index: 2, kind: input, shape index: {}]
  %s3 = inlined_call_operand.hbm [shape: bf16[640,384], index: 3, kind: input, shape index: {}]
  %s4 = inlined_call_operand.vmem [shape: f32[1,384], index: 4, kind: input, shape index: {}]
  %s5 = inlined_call_operand.hbm [shape: bf16[384,256], index: 5, kind: input, shape index: {}]
  %s6 = inlined_call_operand.vmem [shape: f32[1,256], index: 6, kind: input, shape index: {}]
  %s7 = inlined_call_operand.hbm [shape: bf16[256,128], index: 7, kind: input, shape index: {}]
  %s8 = inlined_call_operand.vmem [shape: f32[1,128], index: 8, kind: input, shape index: {}]
  %s9 = inlined_call_operand.hbm [shape: bf16[128,128], index: 9, kind: input, shape index: {}]
  %s10 = inlined_call_operand.vmem [shape: f32[1,128], index: 10, kind: input, shape index: {}]
  %s11 = inlined_call_operand.hbm [shape: bf16[32,128], index: 11, kind: output, shape index: {}]
  %s12 = sld [smem:[#allocation0]]
  $region101: #{tpu_custom_call.1} parent=0
    _
  %s14 = ssub.s32 1, %s12
  %s15 = scalar_select 0, %s14, %s12
  $region1: #{tpu_custom_call.1} parent=0
    #allocation2 [shape = 'u8[57344]{0}', space=vmem, size = 0xe000, scoped, tag = 'input window, operand 0']
    #allocation3 [shape = 's32[2]{0}', space=sflag, size = 0x8, scoped, tag = 'scoped memory for tpu_custom_call.1']
    #allocation4 [shape = 's32[2]{0}', space=sflag, size = 0x8, scoped, tag = 'scoped memory for tpu_custom_call.1']
    #allocation5 [shape = 'u8[1003520]{0}', space=vmem, size = 0xf5000, scoped, tag = 'input window, operand 1, single buffered']
    #allocation6 [shape = 's32[1]{0}', space=sflag, size = 0x4, scoped, tag = 'scoped memory for tpu_custom_call.1']
    #allocation7 [shape = 'u8[491520]{0}', space=vmem, size = 0x78000, scoped, tag = 'input window, operand 3, single buffered']
    #allocation8 [shape = 'u8[196608]{0}', space=vmem, size = 0x30000, scoped, tag = 'input window, operand 5, single buffered']
    #allocation9 [shape = 's32[1]{0}', space=sflag, size = 0x4, scoped, tag = 'scoped memory for tpu_custom_call.1']
    #allocation10 [shape = 'u8[65536]{0}', space=vmem, size = 0x10000, scoped, tag = 'input window, operand 7, single buffered']
    #allocation11 [shape = 'u8[32768]{0}', space=vmem, size = 0x8000, scoped, tag = 'input window, operand 9, single buffered']
    #allocation12 [shape = 's32[1]{0}', space=sflag, size = 0x4, scoped, tag = 'scoped memory for tpu_custom_call.1']
    #allocation13 [shape = 'u8[8192]{0}', space=vmem, size = 0x2000, scoped, tag = 'output window, operand 0']
    %16 = vsyncpa [#allocation3], 0
    %s17 = scalar_lea.sflag [#allocation3], 1
    %18 = vsyncpa %s17, 0
    %19 = vsyncpa [#allocation6], 0
    %20 = vsyncpa [#allocation9], 0
    %21 = vsyncpa [#allocation12], 0
    %22 = vsyncpa [#allocation4], 0
    %s23 = scalar_lea.sflag [#allocation4], 1
    %24 = vsyncpa %s23, 0
    loop: start=0, step=1, limit=4
    $region2: #{tpu_custom_call.1} parent=1 // loop_pre_header
      _
    $region3: #{tpu_custom_call.1} parent=1 // loop_header
      %s26 = sphi 0, %s30
      %p27 = scmp.ge.s32.totalorder %s26, 4
      %s36 = sphi 0, %s38
      %s39 = sphi 0, %s36
      %s40 = sphi 0, %s39
      %s56 = sphi 0, %s40
      %s60 = sphi 0, %s60
      %s62 = sphi 0, %s60
      %s63 = sphi 0, %s62
      %s77 = sphi 0, %s63
      %s81 = sphi 0, %s81
      %s83 = sphi 0, %s81
      %s84 = sphi 0, %s83
      %s98 = sphi 0, %s84
      %s102 = sphi 0, %s102
      %s104 = sphi 0, %s102
      %s105 = sphi 0, %s104
      %s119 = sphi 0, %s105
      %s123 = sphi 0, %s123
      %s125 = sphi 0, %s123
      %s126 = sphi 0, %s125
      %s140 = sphi 0, %s126
      %s144 = sphi 0, %s144
      %s146 = sphi 0, %s144
      %s147 = sphi 0, %s146
      %s161 = sphi 0, %s147
      %s165 = sphi 0, %s165
      %s167 = sphi 0, %s165
      %s168 = sphi 0, %s167
      %s182 = sphi 0, %s168
      %s186 = sphi 0, %s186
      %s188 = sphi 0, %s186
      %s189 = sphi 0, %s188
      %s203 = sphi 0, %s189
      %s207 = sphi 0, %s207
      %s209 = sphi 0, %s207
      %s210 = sphi 0, %s209
      %s224 = sphi 0, %s210
      %s228 = sphi 0, %s228
      %s230 = sphi 0, %s228
      %s231 = sphi 0, %s230
      %s245 = sphi 0, %s231
      %s249 = sphi 0, %s249
      %s251 = sphi 0, %s249
      %s252 = sphi 0, %s251
      %s266 = sphi 0, %s252
      %s272 = sphi 0, %s274
      %s275 = sphi 0, %s272
      %s276 = sphi 0, %s275
      %s292 = sphi 0, %s276
    $region4: #{tpu_custom_call.1} parent=1 // loop_header_branch
      %29 = sbr.rel (%p27) target = $region8
    $region5: #{tpu_custom_call.1} parent=1 // loop_body
      %s31 = ssub.s32 %s26, 1
      %s32 = ssub.s32 %s26, 2
      %s33 = sadd.s32 %s26, 1
      %s34 = ssub.s32 %s26, %s33
      %p35 = scmp.eq.s32.totalorder %s34, 0
      %s37 = sadd.s32 %s36, 1
      %s38 = scalar_select %p35, %s36, %s37
      %p41 = pneg %p35
      %p42 = scmp.eq.s32.totalorder %s26, 1
      %p43 = por %p41, %p42
      %p44 = scmp.ne.s32.totalorder %s36, %s39
      %p45 = scmp.eq.s32.totalorder %s26, 0
      %p46 = por %p44, %p45
      %p47 = scmp.ne.s32.totalorder %s36, %s39
      %p48 = scmp.eq.s32.totalorder %s31, 1
      %p49 = por %p47, %p48
      %p50 = scmp.ne.s32.totalorder %s39, %s40
      %p51 = scmp.eq.s32.totalorder %s31, 0
      %p52 = por %p50, %p51
      %p53 = scmp.ne.s32.totalorder %s39, %s40
      %p54 = scmp.eq.s32.totalorder %s32, 1
      %p55 = por %p53, %p54
      %p57 = scmp.ne.s32.totalorder %s40, %s56
      %p58 = scmp.eq.s32.totalorder %s32, 0
      %p59 = por %p57, %p58
      %s61 = sadd.s32 %s60, 1
      %p64 = scmp.eq.s32.totalorder %s26, 1
      %p65 = scmp.ne.s32.totalorder %s60, %s62
      %p66 = scmp.eq.s32.totalorder %s26, 0
      %p67 = por %p65, %p66
      %p68 = scmp.ne.s32.totalorder %s60, %s62
      %p69 = scmp.eq.s32.totalorder %s31, 1
      %p70 = por %p68, %p69
      %p71 = scmp.ne.s32.totalorder %s62, %s63
      %p72 = scmp.eq.s32.totalorder %s31, 0
      %p73 = por %p71, %p72
      %p74 = scmp.ne.s32.totalorder %s62, %s63
      %p75 = scmp.eq.s32.totalorder %s32, 1
      %p76 = por %p74, %p75
      %p78 = scmp.ne.s32.totalorder %s63, %s77
      %p79 = scmp.eq.s32.totalorder %s32, 0
      %p80 = por %p78, %p79
      %s82 = sadd.s32 %s81, 1
      %p85 = scmp.eq.s32.totalorder %s26, 1
      %p86 = scmp.ne.s32.totalorder %s81, %s83
      %p87 = scmp.eq.s32.totalorder %s26, 0
      %p88 = por %p86, %p87
      %p89 = scmp.ne.s32.totalorder %s81, %s83
      %p90 = scmp.eq.s32.totalorder %s31, 1
      %p91 = por %p89, %p90
      %p92 = scmp.ne.s32.totalorder %s83, %s84
      %p93 = scmp.eq.s32.totalorder %s31, 0
      %p94 = por %p92, %p93
      %p95 = scmp.ne.s32.totalorder %s83, %s84
      %p96 = scmp.eq.s32.totalorder %s32, 1
      %p97 = por %p95, %p96
      %p99 = scmp.ne.s32.totalorder %s84, %s98
      %p100 = scmp.eq.s32.totalorder %s32, 0
      %p101 = por %p99, %p100
      %s103 = sadd.s32 %s102, 1
      %p106 = scmp.eq.s32.totalorder %s26, 1
      %p107 = scmp.ne.s32.totalorder %s102, %s104
      %p108 = scmp.eq.s32.totalorder %s26, 0
      %p109 = por %p107, %p108
      %p110 = scmp.ne.s32.totalorder %s102, %s104
      %p111 = scmp.eq.s32.totalorder %s31, 1
      %p112 = por %p110, %p111
      %p113 = scmp.ne.s32.totalorder %s104, %s105
      %p114 = scmp.eq.s32.totalorder %s31, 0
      %p115 = por %p113, %p114
      %p116 = scmp.ne.s32.totalorder %s104, %s105
      %p117 = scmp.eq.s32.totalorder %s32, 1
      %p118 = por %p116, %p117
      %p120 = scmp.ne.s32.totalorder %s105, %s119
      %p121 = scmp.eq.s32.totalorder %s32, 0
      %p122 = por %p120, %p121
      %s124 = sadd.s32 %s123, 1
      %p127 = scmp.eq.s32.totalorder %s26, 1
      %p128 = scmp.ne.s32.totalorder %s123, %s125
      %p129 = scmp.eq.s32.totalorder %s26, 0
      %p130 = por %p128, %p129
      %p131 = scmp.ne.s32.totalorder %s123, %s125
      %p132 = scmp.eq.s32.totalorder %s31, 1
      %p133 = por %p131, %p132
      %p134 = scmp.ne.s32.totalorder %s125, %s126
      %p135 = scmp.eq.s32.totalorder %s31, 0
      %p136 = por %p134, %p135
      %p137 = scmp.ne.s32.totalorder %s125, %s126
      %p138 = scmp.eq.s32.totalorder %s32, 1
      %p139 = por %p137, %p138
      %p141 = scmp.ne.s32.totalorder %s126, %s140
      %p142 = scmp.eq.s32.totalorder %s32, 0
      %p143 = por %p141, %p142
      %s145 = sadd.s32 %s144, 1
      %p148 = scmp.eq.s32.totalorder %s26, 1
      %p149 = scmp.ne.s32.totalorder %s144, %s146
      %p150 = scmp.eq.s32.totalorder %s26, 0
      %p151 = por %p149, %p150
      %p152 = scmp.ne.s32.totalorder %s144, %s146
      %p153 = scmp.eq.s32.totalorder %s31, 1
      %p154 = por %p152, %p153
      %p155 = scmp.ne.s32.totalorder %s146, %s147
      %p156 = scmp.eq.s32.totalorder %s31, 0
      %p157 = por %p155, %p156
      %p158 = scmp.ne.s32.totalorder %s146, %s147
      %p159 = scmp.eq.s32.totalorder %s32, 1
      %p160 = por %p158, %p159
      %p162 = scmp.ne.s32.totalorder %s147, %s161
      %p163 = scmp.eq.s32.totalorder %s32, 0
      %p164 = por %p162, %p163
      %s166 = sadd.s32 %s165, 1
      %p169 = scmp.eq.s32.totalorder %s26, 1
      %p170 = scmp.ne.s32.totalorder %s165, %s167
      %p171 = scmp.eq.s32.totalorder %s26, 0
      %p172 = por %p170, %p171
      %p173 = scmp.ne.s32.totalorder %s165, %s167
      %p174 = scmp.eq.s32.totalorder %s31, 1
      %p175 = por %p173, %p174
      %p176 = scmp.ne.s32.totalorder %s167, %s168
      %p177 = scmp.eq.s32.totalorder %s31, 0
      %p178 = por %p176, %p177
      %p179 = scmp.ne.s32.totalorder %s167, %s168
      %p180 = scmp.eq.s32.totalorder %s32, 1
      %p181 = por %p179, %p180
      %p183 = scmp.ne.s32.totalorder %s168, %s182
      %p184 = scmp.eq.s32.totalorder %s32, 0
      %p185 = por %p183, %p184
      %s187 = sadd.s32 %s186, 1
      %p190 = scmp.eq.s32.totalorder %s26, 1
      %p191 = scmp.ne.s32.totalorder %s186, %s188
      %p192 = scmp.eq.s32.totalorder %s26, 0
      %p193 = por %p191, %p192
      %p194 = scmp.ne.s32.totalorder %s186, %s188
      %p195 = scmp.eq.s32.totalorder %s31, 1
      %p196 = por %p194, %p195
      %p197 = scmp.ne.s32.totalorder %s188, %s189
      %p198 = scmp.eq.s32.totalorder %s31, 0
      %p199 = por %p197, %p198
      %p200 = scmp.ne.s32.totalorder %s188, %s189
      %p201 = scmp.eq.s32.totalorder %s32, 1
      %p202 = por %p200, %p201
      %p204 = scmp.ne.s32.totalorder %s189, %s203
      %p205 = scmp.eq.s32.totalorder %s32, 0
      %p206 = por %p204, %p205
      %s208 = sadd.s32 %s207, 1
      %p211 = scmp.eq.s32.totalorder %s26, 1
      %p212 = scmp.ne.s32.totalorder %s207, %s209
      %p213 = scmp.eq.s32.totalorder %s26, 0
      %p214 = por %p212, %p213
      %p215 = scmp.ne.s32.totalorder %s207, %s209
      %p216 = scmp.eq.s32.totalorder %s31, 1
      %p217 = por %p215, %p216
      %p218 = scmp.ne.s32.totalorder %s209, %s210
      %p219 = scmp.eq.s32.totalorder %s31, 0
      %p220 = por %p218, %p219
      %p221 = scmp.ne.s32.totalorder %s209, %s210
      %p222 = scmp.eq.s32.totalorder %s32, 1
      %p223 = por %p221, %p222
      %p225 = scmp.ne.s32.totalorder %s210, %s224
      %p226 = scmp.eq.s32.totalorder %s32, 0
      %p227 = por %p225, %p226
      %s229 = sadd.s32 %s228, 1
      %p232 = scmp.eq.s32.totalorder %s26, 1
      %p233 = scmp.ne.s32.totalorder %s228, %s230
      %p234 = scmp.eq.s32.totalorder %s26, 0
      %p235 = por %p233, %p234
      %p236 = scmp.ne.s32.totalorder %s228, %s230
      %p237 = scmp.eq.s32.totalorder %s31, 1
      %p238 = por %p236, %p237
      %p239 = scmp.ne.s32.totalorder %s230, %s231
      %p240 = scmp.eq.s32.totalorder %s31, 0
      %p241 = por %p239, %p240
      %p242 = scmp.ne.s32.totalorder %s230, %s231
      %p243 = scmp.eq.s32.totalorder %s32, 1
      %p244 = por %p242, %p243
      %p246 = scmp.ne.s32.totalorder %s231, %s245
      %p247 = scmp.eq.s32.totalorder %s32, 0
      %p248 = por %p246, %p247
      %s250 = sadd.s32 %s249, 1
      %p253 = scmp.eq.s32.totalorder %s26, 1
      %p254 = scmp.ne.s32.totalorder %s249, %s251
      %p255 = scmp.eq.s32.totalorder %s26, 0
      %p256 = por %p254, %p255
      %p257 = scmp.ne.s32.totalorder %s249, %s251
      %p258 = scmp.eq.s32.totalorder %s31, 1
      %p259 = por %p257, %p258
      %p260 = scmp.ne.s32.totalorder %s251, %s252
      %p261 = scmp.eq.s32.totalorder %s31, 0
      %p262 = por %p260, %p261
      %p263 = scmp.ne.s32.totalorder %s251, %s252
      %p264 = scmp.eq.s32.totalorder %s32, 1
      %p265 = por %p263, %p264
      %p267 = scmp.ne.s32.totalorder %s252, %s266
      %p268 = scmp.eq.s32.totalorder %s32, 0
      %p269 = por %p267, %p268
      %s270 = ssub.s32 %s26, %s33
      %p271 = scmp.eq.s32.totalorder %s270, 0
      %s273 = sadd.s32 %s272, 1
      %s274 = scalar_select %p271, %s272, %s273
      %p277 = pneg %p271
      %p278 = scmp.eq.s32.totalorder %s26, 1
      %p279 = por %p277, %p278
      %p280 = scmp.ne.s32.totalorder %s272, %s275
      %p281 = scmp.eq.s32.totalorder %s26, 0
      %p282 = por %p280, %p281
      %p283 = scmp.ne.s32.totalorder %s272, %s275
      %p284 = scmp.eq.s32.totalorder %s31, 1
      %p285 = por %p283, %p284
      %p286 = scmp.ne.s32.totalorder %s275, %s276
      %p287 = scmp.eq.s32.totalorder %s31, 0
      %p288 = por %p286, %p287
      %p289 = scmp.ne.s32.totalorder %s275, %s276
      %p290 = scmp.eq.s32.totalorder %s32, 1
      %p291 = por %p289, %p290
      %p293 = scmp.ne.s32.totalorder %s276, %s292
      %p294 = scmp.eq.s32.totalorder %s32, 0
      %p295 = por %p293, %p294
      %p296 = scmp.le.s32.totalorder 1, %s26
      %p297 = scmp.lt.s32.totalorder %s26, 3
      %p298 = pnand %p296, %p297
      %p299 = pneg %p298
      // Predicated region
      $region9: #{tpu_custom_call.1} parent=5 // pred_check
        _
      $region10: #{tpu_custom_call.1} parent=5 // pred_check_branch
        %301 = sbr.rel (%p298) target = $region12
      $region11: #{tpu_custom_call.1} parent=5 // pred_region
        %s302 = ssub.s32 %s26, 1
        // Predicated region
        $region13: #{tpu_custom_call.1} parent=11 // pred_check
          %p303 = pneg %p73
        $region14: #{tpu_custom_call.1} parent=11 // pred_check_branch
          %305 = sbr.rel (%p303) target = $region16
        $region15: #{tpu_custom_call.1} parent=11 // pred_region
          %s307 = ssub.s32 31360, 31360
          %308 = vsyncadd [#allocation6], %s307
          %s309 = sshll.u32 [#allocation5], 4
          %s310 = int_to_ptr.vmem [resolvable:$true] %s309
          %315 = dma.hbm_to_vmem [thread:$0]  %s1, 31360, %s310, [#allocation6], 320, 320, 20
        $region16: #{tpu_custom_call.1} parent=11 // pred_fallthru
          _
        // Predicated region
        $region17: #{tpu_custom_call.1} parent=11 // pred_check
          %p316 = pneg %p94
        $region18: #{tpu_custom_call.1} parent=11 // pred_check_branch
          %318 = sbr.rel (%p316) target = $region20
        $region19: #{tpu_custom_call.1} parent=11 // pred_region
          _
        $region20: #{tpu_custom_call.1} parent=11 // pred_fallthru
          _
        // Predicated region
        $region21: #{tpu_custom_call.1} parent=11 // pred_check
          %p319 = pneg %p115
        $region22: #{tpu_custom_call.1} parent=11 // pred_check_branch
          %321 = sbr.rel (%p319) target = $region24
        $region23: #{tpu_custom_call.1} parent=11 // pred_region
          %s323 = ssub.s32 15360, 15360
          %324 = vsyncadd [#allocation6], %s323
          %s325 = sshll.u32 [#allocation7], 4
          %s326 = int_to_ptr.vmem [resolvable:$true] %s325
          %331 = dma.hbm_to_vmem [thread:$0]  %s3, 15360, %s326, [#allocation6], 192, 192, 12
        $region24: #{tpu_custom_call.1} parent=11 // pred_fallthru
          _
        // Predicated region
        $region25: #{tpu_custom_call.1} parent=11 // pred_check
          %p332 = pneg %p136
        $region26: #{tpu_custom_call.1} parent=11 // pred_check_branch
          %334 = sbr.rel (%p332) target = $region28
        $region27: #{tpu_custom_call.1} parent=11 // pred_region
          _
        $region28: #{tpu_custom_call.1} parent=11 // pred_fallthru
          _
        // Predicated region
        $region29: #{tpu_custom_call.1} parent=11 // pred_check
          %p335 = pneg %p157
        $region30: #{tpu_custom_call.1} parent=11 // pred_check_branch
          %337 = sbr.rel (%p335) target = $region32
        $region31: #{tpu_custom_call.1} parent=11 // pred_region
          %s339 = ssub.s32 6144, 6144
          %340 = vsyncadd [#allocation9], %s339
          %s341 = sshll.u32 [#allocation8], 4
          %s342 = int_to_ptr.vmem [resolvable:$true] %s341
          %347 = dma.hbm_to_vmem [thread:$0]  %s5, 6144, %s342, [#allocation9], 128, 128, 8
        $region32: #{tpu_custom_call.1} parent=11 // pred_fallthru
          _
        // Predicated region
        $region33: #{tpu_custom_call.1} parent=11 // pred_check
          %p348 = pneg %p178
        $region34: #{tpu_custom_call.1} parent=11 // pred_check_branch
          %350 = sbr.rel (%p348) target = $region36
        $region35: #{tpu_custom_call.1} parent=11 // pred_region
          _
        $region36: #{tpu_custom_call.1} parent=11 // pred_fallthru
          _
        // Predicated region
        $region37: #{tpu_custom_call.1} parent=11 // pred_check
          %p351 = pneg %p199
        $region38: #{tpu_custom_call.1} parent=11 // pred_check_branch
          %353 = sbr.rel (%p351) target = $region40
        $region39: #{tpu_custom_call.1} parent=11 // pred_region
          %s355 = ssub.s32 2048, 2048
          %356 = vsyncadd [#allocation9], %s355
          %s357 = sshll.u32 [#allocation10], 4
          %s358 = int_to_ptr.vmem [resolvable:$true] %s357
          %363 = dma.hbm_to_vmem [thread:$0]  %s7, 2048, %s358, [#allocation9], 64, 64, 4
        $region40: #{tpu_custom_call.1} parent=11 // pred_fallthru
          _
        // Predicated region
        $region41: #{tpu_custom_call.1} parent=11 // pred_check
          %p364 = pneg %p220
        $region42: #{tpu_custom_call.1} parent=11 // pred_check_branch
          %366 = sbr.rel (%p364) target = $region44
        $region43: #{tpu_custom_call.1} parent=11 // pred_region
          _
        $region44: #{tpu_custom_call.1} parent=11 // pred_fallthru
          _
        // Predicated region
        $region45: #{tpu_custom_call.1} parent=11 // pred_check
          %p367 = pneg %p241
        $region46: #{tpu_custom_call.1} parent=11 // pred_check_branch
          %369 = sbr.rel (%p367) target = $region48
        $region47: #{tpu_custom_call.1} parent=11 // pred_region
          %s371 = ssub.s32 1024, 1024
          %372 = vsyncadd [#allocation12], %s371
          %s373 = sshll.u32 [#allocation11], 4
          %s374 = int_to_ptr.vmem [resolvable:$true] %s373
          %379 = dma.hbm_to_vmem [thread:$0]  %s9, 1024, %s374, [#allocation12], 64, 64, 4
        $region48: #{tpu_custom_call.1} parent=11 // pred_fallthru
          _
        // Predicated region
        $region49: #{tpu_custom_call.1} parent=11 // pred_check
          %p380 = pneg %p262
        $region50: #{tpu_custom_call.1} parent=11 // pred_check_branch
          %382 = sbr.rel (%p380) target = $region52
        $region51: #{tpu_custom_call.1} parent=11 // pred_region
          _
        $region52: #{tpu_custom_call.1} parent=11 // pred_fallthru
          _
      $region12: #{tpu_custom_call.1} parent=5 // pred_fallthru
        _
      %p383 = scmp.lt.s32.totalorder %s26, 2
      // Predicated region
      $region53: #{tpu_custom_call.1} parent=5 // pred_check
        %p384 = pneg %p383
      $region54: #{tpu_custom_call.1} parent=5 // pred_check_branch
        %386 = sbr.rel (%p384) target = $region56
      $region55: #{tpu_custom_call.1} parent=5 // pred_region
        // Predicated region
        $region57: #{tpu_custom_call.1} parent=55 // pred_check
          %p387 = pneg %p46
        $region58: #{tpu_custom_call.1} parent=55 // pred_check_branch
          %389 = sbr.rel (%p387) target = $region60
        $region59: #{tpu_custom_call.1} parent=55 // pred_region
          %s390 = sand.u32 %s36, 1
          %s391 = scalar_lea.sflag [#allocation3], %s390
          %s392 = sand.u32 %s36, 1
          %s393 = smul.addr %s392, 56
          %s394 = scalar_lea.vmem [#allocation2], %s393
          %s395 = smul.u32 2, %s26
          %s397 = ssub.s32 896, 896
          %398 = vsyncadd %s391, %s397
          %s399 = smul.addr %s395, 7
          %s400 = smul.addr %s399, 64
          %s401 = scalar_lea.hbm %s0, %s400
          %s402 = sshll.u32 %s394, 4
          %s403 = int_to_ptr.vmem [resolvable:$true] %s402
          %408 = dma.hbm_to_vmem [thread:$0]  %s401, 896, %s403, %s391, 448, 448, 28
        $region60: #{tpu_custom_call.1} parent=55 // pred_fallthru
          _
      $region56: #{tpu_custom_call.1} parent=5 // pred_fallthru
        _
      %p409 = scmp.le.s32.totalorder 1, %s26
      %p410 = scmp.lt.s32.totalorder %s26, 3
      %p411 = pnand %p409, %p410
      %p412 = pneg %p411
      // Predicated region
      $region61: #{tpu_custom_call.1} parent=5 // pred_check
        _
      $region62: #{tpu_custom_call.1} parent=5 // pred_check_branch
        %414 = sbr.rel (%p411) target = $region64
      $region63: #{tpu_custom_call.1} parent=5 // pred_region
        %s415 = ssub.s32 %s26, 1
        %s416 = sand.u32 %s39, 1
        %s417 = scalar_lea.sflag [#allocation3], %s416
        %s418 = sand.u32 %s39, 1
        %s419 = smul.addr %s418, 56
        %s420 = scalar_lea.vmem [#allocation2], %s419
        // Predicated region
        $region65: #{tpu_custom_call.1} parent=63 // pred_check
          %p421 = pneg %p52
        $region66: #{tpu_custom_call.1} parent=63 // pred_check_branch
          %423 = sbr.rel (%p421) target = $region68
        $region67: #{tpu_custom_call.1} parent=63 // pred_region
          %424 = dma.done %s417, 896
        $region68: #{tpu_custom_call.1} parent=63 // pred_fallthru
          _
        // Predicated region
        $region69: #{tpu_custom_call.1} parent=63 // pred_check
          %p425 = pneg %p73
        $region70: #{tpu_custom_call.1} parent=63 // pred_check_branch
          %427 = sbr.rel (%p425) target = $region72
        $region71: #{tpu_custom_call.1} parent=63 // pred_region
          %428 = dma.done [#allocation6], 31360
        $region72: #{tpu_custom_call.1} parent=63 // pred_fallthru
          _
        // Predicated region
        $region73: #{tpu_custom_call.1} parent=63 // pred_check
          %p429 = pneg %p115
        $region74: #{tpu_custom_call.1} parent=63 // pred_check_branch
          %431 = sbr.rel (%p429) target = $region76
        $region75: #{tpu_custom_call.1} parent=63 // pred_region
          %432 = dma.done [#allocation6], 15360
        $region76: #{tpu_custom_call.1} parent=63 // pred_fallthru
          _
        // Predicated region
        $region77: #{tpu_custom_call.1} parent=63 // pred_check
          %p433 = pneg %p157
        $region78: #{tpu_custom_call.1} parent=63 // pred_check_branch
          %435 = sbr.rel (%p433) target = $region80
        $region79: #{tpu_custom_call.1} parent=63 // pred_region
          %436 = dma.done [#allocation9], 6144
        $region80: #{tpu_custom_call.1} parent=63 // pred_fallthru
          _
        // Predicated region
        $region81: #{tpu_custom_call.1} parent=63 // pred_check
          %p437 = pneg %p199
        $region82: #{tpu_custom_call.1} parent=63 // pred_check_branch
          %439 = sbr.rel (%p437) target = $region84
        $region83: #{tpu_custom_call.1} parent=63 // pred_region
          %440 = dma.done [#allocation9], 2048
        $region84: #{tpu_custom_call.1} parent=63 // pred_fallthru
          _
        // Predicated region
        $region85: #{tpu_custom_call.1} parent=63 // pred_check
          %p441 = pneg %p241
        $region86: #{tpu_custom_call.1} parent=63 // pred_check_branch
          %443 = sbr.rel (%p441) target = $region88
        $region87: #{tpu_custom_call.1} parent=63 // pred_region
          %444 = dma.done [#allocation12], 1024
        $region88: #{tpu_custom_call.1} parent=63 // pred_fallthru
          _
        %s445 = sand.u32 %s39, 1
        %s446 = scalar_lea.sflag [#allocation3], %s445
        %s447 = sand.u32 %s39, 1
        %s448 = smul.addr %s447, 56
        %s449 = scalar_lea.vmem [#allocation2], %s448
        %p450 = pneg %p52
        %p451 = pneg %p49
        %p452 = pneg %p73
        %p453 = pneg %p70
        %p454 = pneg %p94
        %p455 = pneg %p91
        %p456 = pneg %p115
        %p457 = pneg %p112
        %p458 = pneg %p136
        %p459 = pneg %p133
        %p460 = pneg %p157
        %p461 = pneg %p154
        %p462 = pneg %p178
        %p463 = pneg %p175
        %p464 = pneg %p199
        %p465 = pneg %p196
        %p466 = pneg %p220
        %p467 = pneg %p217
        %p468 = pneg %p241
        %p469 = pneg %p238
        %p470 = pneg %p262
        %p471 = pneg %p259
        %p472 = pneg %p288
        %p473 = pneg %p285
        %s474 = sand.u32 %s275, 1
        %s475 = scalar_lea.sflag [#allocation4], %s474
        %s476 = sand.u32 %s275, 1
        %s477 = smul.addr %s476, 8
        %s478 = scalar_lea.vmem [#allocation13], %s477
        %s479 = smul.u32 2, %s31
        %s480 = smul.u32 2, %s31
        %v482 = vld [vmem:[%s420] sm:$0xff]
        %v483 = vld [vmem:[%s420 + $0x8] sm:$0xff]
        %v484 = vld [vmem:[%s420 + $0x10] sm:$0xff]
        %v485 = vld [vmem:[%s420 + $0x18] sm:$0xf]
        %v486 = vld [vmem:[%s420 + $0x1c] sm:$0xff]
        %v487 = vld [vmem:[%s420 + $0x24] sm:$0xff]
        %v488 = vld [vmem:[%s420 + $0x2c] sm:$0xff]
        %v489 = vld [vmem:[%s420 + $0x34] sm:$0xf]
        %v490 = vld [vmem:[#allocation5] sm:$0xff]
        %v491 = vld [vmem:[#allocation5 + $0x8] sm:$0xff]
        %v492 = vld [vmem:[#allocation5 + $0x10] sm:$0xf]
        %v493 = vld [vmem:[#allocation5 + $0x14] sm:$0xff]
        %v494 = vld [vmem:[#allocation5 + $0x1c] sm:$0xff]
        %v495 = vld [vmem:[#allocation5 + $0x24] sm:$0xf]
        %v496 = vld [vmem:[#allocation5 + $0x28] sm:$0xff]
        %v497 = vld [vmem:[#allocation5 + $0x30] sm:$0xff]
        %v498 = vld [vmem:[#allocation5 + $0x38] sm:$0xf]
        %v499 = vld [vmem:[#allocation5 + $0x3c] sm:$0xff]
        %v500 = vld [vmem:[#allocation5 + $0x44] sm:$0xff]
        %v501 = vld [vmem:[#allocation5 + $0x4c] sm:$0xf]
        %v502 = vld [vmem:[#allocation5 + $0x50] sm:$0xff]
        %v503 = vld [vmem:[#allocation5 + $0x58] sm:$0xff]
        %v504 = vld [vmem:[#allocation5 + $0x60] sm:$0xf]
        %v505 = vld [vmem:[#allocation5 + $0x64] sm:$0xff]
        %v506 = vld [vmem:[#allocation5 + $0x6c] sm:$0xff]
        %v507 = vld [vmem:[#allocation5 + $0x74] sm:$0xf]
        %v508 = vld [vmem:[#allocation5 + $0x78] sm:$0xff]
        %v509 = vld [vmem:[#allocation5 + $0x80] sm:$0xff]
        %v510 = vld [vmem:[#allocation5 + $0x88] sm:$0xf]
        %v511 = vld [vmem:[#allocation5 + $0x8c] sm:$0xff]
        %v512 = vld [vmem:[#allocation5 + $0x94] sm:$0xff]
        %v513 = vld [vmem:[#allocation5 + $0x9c] sm:$0xf]
        %v514 = vld [vmem:[#allocation5 + $0xa0] sm:$0xff]
        %v515 = vld [vmem:[#allocation5 + $0xa8] sm:$0xff]
        %v516 = vld [vmem:[#allocation5 + $0xb0] sm:$0xf]
        %v517 = vld [vmem:[#allocation5 + $0xb4] sm:$0xff]
        %v518 = vld [vmem:[#allocation5 + $0xbc] sm:$0xff]
        %v519 = vld [vmem:[#allocation5 + $0xc4] sm:$0xf]
        %v520 = vld [vmem:[#allocation5 + $0xc8] sm:$0xff]
        %v521 = vld [vmem:[#allocation5 + $0xd0] sm:$0xff]
        %v522 = vld [vmem:[#allocation5 + $0xd8] sm:$0xf]
        %v523 = vld [vmem:[#allocation5 + $0xdc] sm:$0xff]
        %v524 = vld [vmem:[#allocation5 + $0xe4] sm:$0xff]
        %v525 = vld [vmem:[#allocation5 + $0xec] sm:$0xf]
        %v526 = vld [vmem:[#allocation5 + $0xf0] sm:$0xff]
        %v527 = vld [vmem:[#allocation5 + $0xf8] sm:$0xff]
        %v528 = vld [vmem:[#allocation5 + $0x100] sm:$0xf]
        %v529 = vld [vmem:[#allocation5 + $0x104] sm:$0xff]
        %v530 = vld [vmem:[#allocation5 + $0x10c] sm:$0xff]
        %v531 = vld [vmem:[#allocation5 + $0x114] sm:$0xf]
        %v532 = vld [vmem:[#allocation5 + $0x118] sm:$0xff]
        %v533 = vld [vmem:[#allocation5 + $0x120] sm:$0xff]
        %v534 = vld [vmem:[#allocation5 + $0x128] sm:$0xf]
        %v535 = vld [vmem:[#allocation5 + $0x12c] sm:$0xff]
        %v536 = vld [vmem:[#allocation5 + $0x134] sm:$0xff]
        %v537 = vld [vmem:[#allocation5 + $0x13c] sm:$0xf]
        %v538 = vld [vmem:[#allocation5 + $0x140] sm:$0xff]
        %v539 = vld [vmem:[#allocation5 + $0x148] sm:$0xff]
        %v540 = vld [vmem:[#allocation5 + $0x150] sm:$0xf]
        %v541 = vld [vmem:[#allocation5 + $0x154] sm:$0xff]
        %v542 = vld [vmem:[#allocation5 + $0x15c] sm:$0xff]
        %v543 = vld [vmem:[#allocation5 + $0x164] sm:$0xf]
        %v544 = vld [vmem:[#allocation5 + $0x168] sm:$0xff]
        %v545 = vld [vmem:[#allocation5 + $0x170] sm:$0xff]
        %v546 = vld [vmem:[#allocation5 + $0x178] sm:$0xf]
        %v547 = vld [vmem:[#allocation5 + $0x17c] sm:$0xff]
        %v548 = vld [vmem:[#allocation5 + $0x184] sm:$0xff]
        %v549 = vld [vmem:[#allocation5 + $0x18c] sm:$0xf]
        %v550 = vld [vmem:[#allocation5 + $0x190] sm:$0xff]
        %v551 = vld [vmem:[#allocation5 + $0x198] sm:$0xff]
        %v552 = vld [vmem:[#allocation5 + $0x1a0] sm:$0xf]
        %v553 = vld [vmem:[#allocation5 + $0x1a4] sm:$0xff]
        %v554 = vld [vmem:[#allocation5 + $0x1ac] sm:$0xff]
        %v555 = vld [vmem:[#allocation5 + $0x1b4] sm:$0xf]
        %v556 = vld [vmem:[#allocation5 + $0x1b8] sm:$0xff]
        %v557 = vld [vmem:[#allocation5 + $0x1c0] sm:$0xff]
        %v558 = vld [vmem:[#allocation5 + $0x1c8] sm:$0xf]
        %v559 = vld [vmem:[#allocation5 + $0x1cc] sm:$0xff]
        %v560 = vld [vmem:[#allocation5 + $0x1d4] sm:$0xff]
        %v561 = vld [vmem:[#allocation5 + $0x1dc] sm:$0xf]
        %v562 = vld [vmem:[#allocation5 + $0x1e0] sm:$0xff]
        %v563 = vld [vmem:[#allocation5 + $0x1e8] sm:$0xff]
        %v564 = vld [vmem:[#allocation5 + $0x1f0] sm:$0xf]
        %v565 = vld [vmem:[#allocation5 + $0x1f4] sm:$0xff]
        %v566 = vld [vmem:[#allocation5 + $0x1fc] sm:$0xff]
        %v567 = vld [vmem:[#allocation5 + $0x204] sm:$0xf]
        %v568 = vld [vmem:[#allocation5 + $0x208] sm:$0xff]
        %v569 = vld [vmem:[#allocation5 + $0x210] sm:$0xff]
        %v570 = vld [vmem:[#allocation5 + $0x218] sm:$0xf]
        %v571 = vld [vmem:[#allocation5 + $0x21c] sm:$0xff]
        %v572 = vld [vmem:[#allocation5 + $0x224] sm:$0xff]
        %v573 = vld [vmem:[#allocation5 + $0x22c] sm:$0xf]
        %v574 = vld [vmem:[#allocation5 + $0x230] sm:$0xff]
        %v575 = vld [vmem:[#allocation5 + $0x238] sm:$0xff]
        %v576 = vld [vmem:[#allocation5 + $0x240] sm:$0xf]
        %v577 = vld [vmem:[#allocation5 + $0x244] sm:$0xff]
        %v578 = vld [vmem:[#allocation5 + $0x24c] sm:$0xff]
        %v579 = vld [vmem:[#allocation5 + $0x254] sm:$0xf]
        %v580 = vld [vmem:[#allocation5 + $0x258] sm:$0xff]
        %v581 = vld [vmem:[#allocation5 + $0x260] sm:$0xff]
        %v582 = vld [vmem:[#allocation5 + $0x268] sm:$0xf]
        %v583 = vld [vmem:[#allocation5 + $0x26c] sm:$0xff]
        %v584 = vld [vmem:[#allocation5 + $0x274] sm:$0xff]
        %v585 = vld [vmem:[#allocation5 + $0x27c] sm:$0xf]
        %v586 = vld [vmem:[#allocation5 + $0x280] sm:$0xff]
        %v587 = vld [vmem:[#allocation5 + $0x288] sm:$0xff]
        %v588 = vld [vmem:[#allocation5 + $0x290] sm:$0xf]
        %v589 = vld [vmem:[#allocation5 + $0x294] sm:$0xff]
        %v590 = vld [vmem:[#allocation5 + $0x29c] sm:$0xff]
        %v591 = vld [vmem:[#allocation5 + $0x2a4] sm:$0xf]
        %v592 = vld [vmem:[#allocation5 + $0x2a8] sm:$0xff]
        %v593 = vld [vmem:[#allocation5 + $0x2b0] sm:$0xff]
        %v594 = vld [vmem:[#allocation5 + $0x2b8] sm:$0xf]
        %v595 = vld [vmem:[#allocation5 + $0x2bc] sm:$0xff]
        %v596 = vld [vmem:[#allocation5 + $0x2c4] sm:$0xff]
        %v597 = vld [vmem:[#allocation5 + $0x2cc] sm:$0xf]
        %v598 = vld [vmem:[#allocation5 + $0x2d0] sm:$0xff]
        %v599 = vld [vmem:[#allocation5 + $0x2d8] sm:$0xff]
        %v600 = vld [vmem:[#allocation5 + $0x2e0] sm:$0xf]
        %v601 = vld [vmem:[#allocation5 + $0x2e4] sm:$0xff]
        %v602 = vld [vmem:[#allocation5 + $0x2ec] sm:$0xff]
        %v603 = vld [vmem:[#allocation5 + $0x2f4] sm:$0xf]
        %v604 = vld [vmem:[#allocation5 + $0x2f8] sm:$0xff]
        %v605 = vld [vmem:[#allocation5 + $0x300] sm:$0xff]
        %v606 = vld [vmem:[#allocation5 + $0x308] sm:$0xf]
        %v607 = vld [vmem:[#allocation5 + $0x30c] sm:$0xff]
        %v608 = vld [vmem:[#allocation5 + $0x314] sm:$0xff]
        %v609 = vld [vmem:[#allocation5 + $0x31c] sm:$0xf]
        %v610 = vld [vmem:[#allocation5 + $0x320] sm:$0xff]
        %v611 = vld [vmem:[#allocation5 + $0x328] sm:$0xff]
        %v612 = vld [vmem:[#allocation5 + $0x330] sm:$0xf]
        %v613 = vld [vmem:[#allocation5 + $0x334] sm:$0xff]
        %v614 = vld [vmem:[#allocation5 + $0x33c] sm:$0xff]
        %v615 = vld [vmem:[#allocation5 + $0x344] sm:$0xf]
        %v616 = vld [vmem:[#allocation5 + $0x348] sm:$0xff]
        %v617 = vld [vmem:[#allocation5 + $0x350] sm:$0xff]
        %v618 = vld [vmem:[#allocation5 + $0x358] sm:$0xf]
        %v619 = vld [vmem:[#allocation5 + $0x35c] sm:$0xff]
        %v620 = vld [vmem:[#allocation5 + $0x364] sm:$0xff]
        %v621 = vld [vmem:[#allocation5 + $0x36c] sm:$0xf]
        %v622 = vld [vmem:[#allocation5 + $0x370] sm:$0xff]
        %v623 = vld [vmem:[#allocation5 + $0x378] sm:$0xff]
        %v624 = vld [vmem:[#allocation5 + $0x380] sm:$0xf]
        %v625 = vld [vmem:[#allocation5 + $0x384] sm:$0xff]
        %v626 = vld [vmem:[#allocation5 + $0x38c] sm:$0xff]
        %v627 = vld [vmem:[#allocation5 + $0x394] sm:$0xf]
        %v628 = vld [vmem:[#allocation5 + $0x398] sm:$0xff]
        %v629 = vld [vmem:[#allocation5 + $0x3a0] sm:$0xff]
        %v630 = vld [vmem:[#allocation5 + $0x3a8] sm:$0xf]
        %v631 = vld [vmem:[#allocation5 + $0x3ac] sm:$0xff]
        %v632 = vld [vmem:[#allocation5 + $0x3b4] sm:$0xff]
        %v633 = vld [vmem:[#allocation5 + $0x3bc] sm:$0xf]
        %v634 = vld [vmem:[#allocation5 + $0x3c0] sm:$0xff]
        %v635 = vld [vmem:[#allocation5 + $0x3c8] sm:$0xff]
        %v636 = vld [vmem:[#allocation5 + $0x3d0] sm:$0xf]
        %v637 = vld [vmem:[#allocation5 + $0x3d4] sm:$0xff]
        %v638 = vld [vmem:[#allocation5 + $0x3dc] sm:$0xff]
        %v639 = vld [vmem:[#allocation5 + $0x3e4] sm:$0xf]
        %v640 = vld [vmem:[#allocation5 + $0x3e8] sm:$0xff]
        %v641 = vld [vmem:[#allocation5 + $0x3f0] sm:$0xff]
        %v642 = vld [vmem:[#allocation5 + $0x3f8] sm:$0xf]
        %v643 = vld [vmem:[#allocation5 + $0x3fc] sm:$0xff]
        %v644 = vld [vmem:[#allocation5 + $0x404] sm:$0xff]
        %v645 = vld [vmem:[#allocation5 + $0x40c] sm:$0xf]
        %v646 = vld [vmem:[#allocation5 + $0x410] sm:$0xff]
        %v647 = vld [vmem:[#allocation5 + $0x418] sm:$0xff]
        %v648 = vld [vmem:[#allocation5 + $0x420] sm:$0xf]
        %v649 = vld [vmem:[#allocation5 + $0x424] sm:$0xff]
        %v650 = vld [vmem:[#allocation5 + $0x42c] sm:$0xff]
        %v651 = vld [vmem:[#allocation5 + $0x434] sm:$0xf]
        %v652 = vld [vmem:[#allocation5 + $0x438] sm:$0xff]
        %v653 = vld [vmem:[#allocation5 + $0x440] sm:$0xff]
        %v654 = vld [vmem:[#allocation5 + $0x448] sm:$0xf]
        %v655 = vld [vmem:[#allocation5 + $0x44c] sm:$0xff]
        %v656 = vld [vmem:[#allocation5 + $0x454] sm:$0xff]
        %v657 = vld [vmem:[#allocation5 + $0x45c] sm:$0xf]
        %v658 = vld [vmem:[#allocation5 + $0x460] sm:$0xff]
        %v659 = vld [vmem:[#allocation5 + $0x468] sm:$0xff]
        %v660 = vld [vmem:[#allocation5 + $0x470] sm:$0xf]
        %v661 = vld [vmem:[#allocation5 + $0x474] sm:$0xff]
        %v662 = vld [vmem:[#allocation5 + $0x47c] sm:$0xff]
        %v663 = vld [vmem:[#allocation5 + $0x484] sm:$0xf]
        %v664 = vld [vmem:[#allocation5 + $0x488] sm:$0xff]
        %v665 = vld [vmem:[#allocation5 + $0x490] sm:$0xff]
        %v666 = vld [vmem:[#allocation5 + $0x498] sm:$0xf]
        %v667 = vld [vmem:[#allocation5 + $0x49c] sm:$0xff]
        %v668 = vld [vmem:[#allocation5 + $0x4a4] sm:$0xff]
        %v669 = vld [vmem:[#allocation5 + $0x4ac] sm:$0xf]
        %v670 = vld [vmem:[#allocation5 + $0x4b0] sm:$0xff]
        %v671 = vld [vmem:[#allocation5 + $0x4b8] sm:$0xff]
        %v672 = vld [vmem:[#allocation5 + $0x4c0] sm:$0xf]
        %v673 = vld [vmem:[#allocation5 + $0x4c4] sm:$0xff]
        %v674 = vld [vmem:[#allocation5 + $0x4cc] sm:$0xff]
        %v675 = vld [vmem:[#allocation5 + $0x4d4] sm:$0xf]
        %v676 = vld [vmem:[#allocation5 + $0x4d8] sm:$0xff]
        %v677 = vld [vmem:[#allocation5 + $0x4e0] sm:$0xff]
        %v678 = vld [vmem:[#allocation5 + $0x4e8] sm:$0xf]
        %v679 = vld [vmem:[#allocation5 + $0x4ec] sm:$0xff]
        %v680 = vld [vmem:[#allocation5 + $0x4f4] sm:$0xff]
        %v681 = vld [vmem:[#allocation5 + $0x4fc] sm:$0xf]
        %v682 = vld [vmem:[#allocation5 + $0x500] sm:$0xff]
        %v683 = vld [vmem:[#allocation5 + $0x508] sm:$0xff]
        %v684 = vld [vmem:[#allocation5 + $0x510] sm:$0xf]
        %v685 = vld [vmem:[#allocation5 + $0x514] sm:$0xff]
        %v686 = vld [vmem:[#allocation5 + $0x51c] sm:$0xff]
        %v687 = vld [vmem:[#allocation5 + $0x524] sm:$0xf]
        %v688 = vld [vmem:[#allocation5 + $0x528] sm:$0xff]
        %v689 = vld [vmem:[#allocation5 + $0x530] sm:$0xff]
        %v690 = vld [vmem:[#allocation5 + $0x538] sm:$0xf]
        %v691 = vld [vmem:[#allocation5 + $0x53c] sm:$0xff]
        %v692 = vld [vmem:[#allocation5 + $0x544] sm:$0xff]
        %v693 = vld [vmem:[#allocation5 + $0x54c] sm:$0xf]
        %v694 = vld [vmem:[#allocation5 + $0x550] sm:$0xff]
        %v695 = vld [vmem:[#allocation5 + $0x558] sm:$0xff]
        %v696 = vld [vmem:[#allocation5 + $0x560] sm:$0xf]
        %v697 = vld [vmem:[#allocation5 + $0x564] sm:$0xff]
        %v698 = vld [vmem:[#allocation5 + $0x56c] sm:$0xff]
        %v699 = vld [vmem:[#allocation5 + $0x574] sm:$0xf]
        %v700 = vld [vmem:[#allocation5 + $0x578] sm:$0xff]
        %v701 = vld [vmem:[#allocation5 + $0x580] sm:$0xff]
        %v702 = vld [vmem:[#allocation5 + $0x588] sm:$0xf]
        %v703 = vld [vmem:[#allocation5 + $0x58c] sm:$0xff]
        %v704 = vld [vmem:[#allocation5 + $0x594] sm:$0xff]
        %v705 = vld [vmem:[#allocation5 + $0x59c] sm:$0xf]
        %v706 = vld [vmem:[#allocation5 + $0x5a0] sm:$0xff]
        %v707 = vld [vmem:[#allocation5 + $0x5a8] sm:$0xff]
        %v708 = vld [vmem:[#allocation5 + $0x5b0] sm:$0xf]
        %v709 = vld [vmem:[#allocation5 + $0x5b4] sm:$0xff]
        %v710 = vld [vmem:[#allocation5 + $0x5bc] sm:$0xff]
        %v711 = vld [vmem:[#allocation5 + $0x5c4] sm:$0xf]
        %v712 = vld [vmem:[#allocation5 + $0x5c8] sm:$0xff]
        %v713 = vld [vmem:[#allocation5 + $0x5d0] sm:$0xff]
        %v714 = vld [vmem:[#allocation5 + $0x5d8] sm:$0xf]
        %v715 = vld [vmem:[#allocation5 + $0x5dc] sm:$0xff]
        %v716 = vld [vmem:[#allocation5 + $0x5e4] sm:$0xff]
        %v717 = vld [vmem:[#allocation5 + $0x5ec] sm:$0xf]
        %v718 = vld [vmem:[#allocation5 + $0x5f0] sm:$0xff]
        %v719 = vld [vmem:[#allocation5 + $0x5f8] sm:$0xff]
        %v720 = vld [vmem:[#allocation5 + $0x600] sm:$0xf]
        %v721 = vld [vmem:[#allocation5 + $0x604] sm:$0xff]
        %v722 = vld [vmem:[#allocation5 + $0x60c] sm:$0xff]
        %v723 = vld [vmem:[#allocation5 + $0x614] sm:$0xf]
        %v724 = vld [vmem:[#allocation5 + $0x618] sm:$0xff]
        %v725 = vld [vmem:[#allocation5 + $0x620] sm:$0xff]
        %v726 = vld [vmem:[#allocation5 + $0x628] sm:$0xf]
        %v727 = vld [vmem:[#allocation5 + $0x62c] sm:$0xff]
        %v728 = vld [vmem:[#allocation5 + $0x634] sm:$0xff]
        %v729 = vld [vmem:[#allocation5 + $0x63c] sm:$0xf]
        %v730 = vld [vmem:[#allocation5 + $0x640] sm:$0xff]
        %v731 = vld [vmem:[#allocation5 + $0x648] sm:$0xff]
        %v732 = vld [vmem:[#allocation5 + $0x650] sm:$0xf]
        %v733 = vld [vmem:[#allocation5 + $0x654] sm:$0xff]
        %v734 = vld [vmem:[#allocation5 + $0x65c] sm:$0xff]
        %v735 = vld [vmem:[#allocation5 + $0x664] sm:$0xf]
        %v736 = vld [vmem:[#allocation5 + $0x668] sm:$0xff]
        %v737 = vld [vmem:[#allocation5 + $0x670] sm:$0xff]
        %v738 = vld [vmem:[#allocation5 + $0x678] sm:$0xf]
        %v739 = vld [vmem:[#allocation5 + $0x67c] sm:$0xff]
        %v740 = vld [vmem:[#allocation5 + $0x684] sm:$0xff]
        %v741 = vld [vmem:[#allocation5 + $0x68c] sm:$0xf]
        %v742 = vld [vmem:[#allocation5 + $0x690] sm:$0xff]
        %v743 = vld [vmem:[#allocation5 + $0x698] sm:$0xff]
        %v744 = vld [vmem:[#allocation5 + $0x6a0] sm:$0xf]
        %v745 = vld [vmem:[#allocation5 + $0x6a4] sm:$0xff]
        %v746 = vld [vmem:[#allocation5 + $0x6ac] sm:$0xff]
        %v747 = vld [vmem:[#allocation5 + $0x6b4] sm:$0xf]
        %v748 = vld [vmem:[#allocation5 + $0x6b8] sm:$0xff]
        %v749 = vld [vmem:[#allocation5 + $0x6c0] sm:$0xff]
        %v750 = vld [vmem:[#allocation5 + $0x6c8] sm:$0xf]
        %v751 = vld [vmem:[#allocation5 + $0x6cc] sm:$0xff]
        %v752 = vld [vmem:[#allocation5 + $0x6d4] sm:$0xff]
        %v753 = vld [vmem:[#allocation5 + $0x6dc] sm:$0xf]
        %v754 = vld [vmem:[#allocation5 + $0x6e0] sm:$0xff]
        %v755 = vld [vmem:[#allocation5 + $0x6e8] sm:$0xff]
        %v756 = vld [vmem:[#allocation5 + $0x6f0] sm:$0xf]
        %v757 = vld [vmem:[#allocation5 + $0x6f4] sm:$0xff]
        %v758 = vld [vmem:[#allocation5 + $0x6fc] sm:$0xff]
        %v759 = vld [vmem:[#allocation5 + $0x704] sm:$0xf]
        %v760 = vld [vmem:[#allocation5 + $0x708] sm:$0xff]
        %v761 = vld [vmem:[#allocation5 + $0x710] sm:$0xff]
        %v762 = vld [vmem:[#allocation5 + $0x718] sm:$0xf]
        %v763 = vld [vmem:[#allocation5 + $0x71c] sm:$0xff]
        %v764 = vld [vmem:[#allocation5 + $0x724] sm:$0xff]
        %v765 = vld [vmem:[#allocation5 + $0x72c] sm:$0xf]
        %v766 = vld [vmem:[#allocation5 + $0x730] sm:$0xff]
        %v767 = vld [vmem:[#allocation5 + $0x738] sm:$0xff]
        %v768 = vld [vmem:[#allocation5 + $0x740] sm:$0xf]
        %v769 = vld [vmem:[#allocation5 + $0x744] sm:$0xff]
        %v770 = vld [vmem:[#allocation5 + $0x74c] sm:$0xff]
        %v771 = vld [vmem:[#allocation5 + $0x754] sm:$0xf]
        %v772 = vld [vmem:[#allocation5 + $0x758] sm:$0xff]
        %v773 = vld [vmem:[#allocation5 + $0x760] sm:$0xff]
        %v774 = vld [vmem:[#allocation5 + $0x768] sm:$0xf]
        %v775 = vld [vmem:[#allocation5 + $0x76c] sm:$0xff]
        %v776 = vld [vmem:[#allocation5 + $0x774] sm:$0xff]
        %v777 = vld [vmem:[#allocation5 + $0x77c] sm:$0xf]
        %v778 = vld [vmem:[#allocation5 + $0x780] sm:$0xff]
        %v779 = vld [vmem:[#allocation5 + $0x788] sm:$0xff]
        %v780 = vld [vmem:[#allocation5 + $0x790] sm:$0xf]
        %v781 = vld [vmem:[#allocation5 + $0x794] sm:$0xff]
        %v782 = vld [vmem:[#allocation5 + $0x79c] sm:$0xff]
        %v783 = vld [vmem:[#allocation5 + $0x7a4] sm:$0xf]
        %v784 = vld [vmem:[%s2] sm:$0x1f]
        %v786 = vlaneseq
        %v787 = vshrl.u32 %v786, 7
        %v788 = vsub.s32 0, %v787
        %v789 = vrot.slane %v784, %v788
        %v790 = vlaneseq
        %v791 = vshrl.u32 %v790, 7
        %v792 = vsub.s32 1, %v791
        %v793 = vrot.slane %v784, %v792
        %v794 = vlaneseq
        %v795 = vshrl.u32 %v794, 7
        %v796 = vsub.s32 2, %v795
        %v797 = vrot.slane %v784, %v796
        %v798 = vlaneseq
        %v799 = vshrl.u32 %v798, 7
        %v800 = vsub.s32 3, %v799
        %v801 = vrot.slane %v784, %v800
        %v802 = vlaneseq
        %v803 = vshrl.u32 %v802, 7
        %v804 = vsub.s32 4, %v803
        %v805 = vrot.slane %v784, %v804
        %v819 = vunpack.c.l.b16 %v482
        %v820 = vunpack.c.h.b16 %v482
        %v821 = vunpack.c.l.b16 %v483
        %v822 = vunpack.c.h.b16 %v483
        %v823 = vunpack.c.l.b16 %v484
        %v824 = vunpack.c.h.b16 %v484
        %v825 = vunpack.c.l.b16 %v485
        %v826 = vunpack.c.l.b16 %v486
        %v827 = vunpack.c.h.b16 %v486
        %v828 = vunpack.c.l.b16 %v487
        %v829 = vunpack.c.h.b16 %v487
        %v830 = vunpack.c.l.b16 %v488
        %v831 = vunpack.c.h.b16 %v488
        %v832 = vunpack.c.l.b16 %v489
        %v833 = vpack.c.b16 %v826, %v819
        %v834 = vpack.c.b16 %v827, %v820
        %v835 = vpack.c.b16 %v828, %v821
        %v836 = vpack.c.b16 %v829, %v822
        %v837 = vpack.c.b16 %v830, %v823
        %v838 = vpack.c.b16 %v831, %v824
        %v839 = vpack.c.b16 %v832, %v825
        %v1140 = vunpack.c.l.b16 %v490
        %v1141 = vunpack.c.h.b16 %v490
        %v1142 = vunpack.c.l.b16 %v491
        %v1143 = vunpack.c.h.b16 %v491
        %v1144 = vunpack.c.l.b16 %v492
        %v1145 = vunpack.c.l.b16 %v493
        %v1146 = vunpack.c.h.b16 %v493
        %v1147 = vunpack.c.l.b16 %v494
        %v1148 = vunpack.c.h.b16 %v494
        %v1149 = vunpack.c.l.b16 %v495
        %v1150 = vunpack.c.l.b16 %v496
        %v1151 = vunpack.c.h.b16 %v496
        %v1152 = vunpack.c.l.b16 %v497
        %v1153 = vunpack.c.h.b16 %v497
        %v1154 = vunpack.c.l.b16 %v498
        %v1155 = vunpack.c.l.b16 %v499
        %v1156 = vunpack.c.h.b16 %v499
        %v1157 = vunpack.c.l.b16 %v500
        %v1158 = vunpack.c.h.b16 %v500
        %v1159 = vunpack.c.l.b16 %v501
        %v1160 = vunpack.c.l.b16 %v502
        %v1161 = vunpack.c.h.b16 %v502
        %v1162 = vunpack.c.l.b16 %v503
        %v1163 = vunpack.c.h.b16 %v503
        %v1164 = vunpack.c.l.b16 %v504
        %v1165 = vunpack.c.l.b16 %v505
        %v1166 = vunpack.c.h.b16 %v505
        %v1167 = vunpack.c.l.b16 %v506
        %v1168 = vunpack.c.h.b16 %v506
        %v1169 = vunpack.c.l.b16 %v507
        %v1170 = vunpack.c.l.b16 %v508
        %v1171 = vunpack.c.h.b16 %v508
        %v1172 = vunpack.c.l.b16 %v509
        %v1173 = vunpack.c.h.b16 %v509
        %v1174 = vunpack.c.l.b16 %v510
        %v1175 = vunpack.c.l.b16 %v511
        %v1176 = vunpack.c.h.b16 %v511
        %v1177 = vunpack.c.l.b16 %v512
        %v1178 = vunpack.c.h.b16 %v512
        %v1179 = vunpack.c.l.b16 %v513
        %v1180 = vunpack.c.l.b16 %v514
        %v1181 = vunpack.c.h.b16 %v514
        %v1182 = vunpack.c.l.b16 %v515
        %v1183 = vunpack.c.h.b16 %v515
        %v1184 = vunpack.c.l.b16 %v516
        %v1185 = vunpack.c.l.b16 %v517
        %v1186 = vunpack.c.h.b16 %v517
        %v1187 = vunpack.c.l.b16 %v518
        %v1188 = vunpack.c.h.b16 %v518
        %v1189 = vunpack.c.l.b16 %v519
        %v1190 = vunpack.c.l.b16 %v520
        %v1191 = vunpack.c.h.b16 %v520
        %v1192 = vunpack.c.l.b16 %v521
        %v1193 = vunpack.c.h.b16 %v521
        %v1194 = vunpack.c.l.b16 %v522
        %v1195 = vunpack.c.l.b16 %v523
        %v1196 = vunpack.c.h.b16 %v523
        %v1197 = vunpack.c.l.b16 %v524
        %v1198 = vunpack.c.h.b16 %v524
        %v1199 = vunpack.c.l.b16 %v525
        %v1200 = vunpack.c.l.b16 %v526
        %v1201 = vunpack.c.h.b16 %v526
        %v1202 = vunpack.c.l.b16 %v527
        %v1203 = vunpack.c.h.b16 %v527
        %v1204 = vunpack.c.l.b16 %v528
        %v1205 = vunpack.c.l.b16 %v529
        %v1206 = vunpack.c.h.b16 %v529
        %v1207 = vunpack.c.l.b16 %v530
        %v1208 = vunpack.c.h.b16 %v530
        %v1209 = vunpack.c.l.b16 %v531
        %v1210 = vunpack.c.l.b16 %v532
        %v1211 = vunpack.c.h.b16 %v532
        %v1212 = vunpack.c.l.b16 %v533
        %v1213 = vunpack.c.h.b16 %v533
        %v1214 = vunpack.c.l.b16 %v534
        %v1215 = vunpack.c.l.b16 %v535
        %v1216 = vunpack.c.h.b16 %v535
        %v1217 = vunpack.c.l.b16 %v536
        %v1218 = vunpack.c.h.b16 %v536
        %v1219 = vunpack.c.l.b16 %v537
        %v1220 = vunpack.c.l.b16 %v538
        %v1221 = vunpack.c.h.b16 %v538
        %v1222 = vunpack.c.l.b16 %v539
        %v1223 = vunpack.c.h.b16 %v539
        %v1224 = vunpack.c.l.b16 %v540
        %v1225 = vunpack.c.l.b16 %v541
        %v1226 = vunpack.c.h.b16 %v541
        %v1227 = vunpack.c.l.b16 %v542
        %v1228 = vunpack.c.h.b16 %v542
        %v1229 = vunpack.c.l.b16 %v543
        %v1230 = vunpack.c.l.b16 %v544
        %v1231 = vunpack.c.h.b16 %v544
        %v1232 = vunpack.c.l.b16 %v545
        %v1233 = vunpack.c.h.b16 %v545
        %v1234 = vunpack.c.l.b16 %v546
        %v1235 = vunpack.c.l.b16 %v547
        %v1236 = vunpack.c.h.b16 %v547
        %v1237 = vunpack.c.l.b16 %v548
        %v1238 = vunpack.c.h.b16 %v548
        %v1239 = vunpack.c.l.b16 %v549
        %v1240 = vunpack.c.l.b16 %v550
        %v1241 = vunpack.c.h.b16 %v550
        %v1242 = vunpack.c.l.b16 %v551
        %v1243 = vunpack.c.h.b16 %v551
        %v1244 = vunpack.c.l.b16 %v552
        %v1245 = vunpack.c.l.b16 %v553
        %v1246 = vunpack.c.h.b16 %v553
        %v1247 = vunpack.c.l.b16 %v554
        %v1248 = vunpack.c.h.b16 %v554
        %v1249 = vunpack.c.l.b16 %v555
        %v1250 = vunpack.c.l.b16 %v556
        %v1251 = vunpack.c.h.b16 %v556
        %v1252 = vunpack.c.l.b16 %v557
        %v1253 = vunpack.c.h.b16 %v557
        %v1254 = vunpack.c.l.b16 %v558
        %v1255 = vunpack.c.l.b16 %v559
        %v1256 = vunpack.c.h.b16 %v559
        %v1257 = vunpack.c.l.b16 %v560
        %v1258 = vunpack.c.h.b16 %v560
        %v1259 = vunpack.c.l.b16 %v561
        %v1260 = vunpack.c.l.b16 %v562
        %v1261 = vunpack.c.h.b16 %v562
        %v1262 = vunpack.c.l.b16 %v563
        %v1263 = vunpack.c.h.b16 %v563
        %v1264 = vunpack.c.l.b16 %v564
        %v1265 = vunpack.c.l.b16 %v565
        %v1266 = vunpack.c.h.b16 %v565
        %v1267 = vunpack.c.l.b16 %v566
        %v1268 = vunpack.c.h.b16 %v566
        %v1269 = vunpack.c.l.b16 %v567
        %v1270 = vunpack.c.l.b16 %v568
        %v1271 = vunpack.c.h.b16 %v568
        %v1272 = vunpack.c.l.b16 %v569
        %v1273 = vunpack.c.h.b16 %v569
        %v1274 = vunpack.c.l.b16 %v570
        %v1275 = vunpack.c.l.b16 %v571
        %v1276 = vunpack.c.h.b16 %v571
        %v1277 = vunpack.c.l.b16 %v572
        %v1278 = vunpack.c.h.b16 %v572
        %v1279 = vunpack.c.l.b16 %v573
        %v1280 = vunpack.c.l.b16 %v574
        %v1281 = vunpack.c.h.b16 %v574
        %v1282 = vunpack.c.l.b16 %v575
        %v1283 = vunpack.c.h.b16 %v575
        %v1284 = vunpack.c.l.b16 %v576
        %v1285 = vunpack.c.l.b16 %v577
        %v1286 = vunpack.c.h.b16 %v577
        %v1287 = vunpack.c.l.b16 %v578
        %v1288 = vunpack.c.h.b16 %v578
        %v1289 = vunpack.c.l.b16 %v579
        %v1290 = vunpack.c.l.b16 %v580
        %v1291 = vunpack.c.h.b16 %v580
        %v1292 = vunpack.c.l.b16 %v581
        %v1293 = vunpack.c.h.b16 %v581
        %v1294 = vunpack.c.l.b16 %v582
        %v1295 = vunpack.c.l.b16 %v583
        %v1296 = vunpack.c.h.b16 %v583
        %v1297 = vunpack.c.l.b16 %v584
        %v1298 = vunpack.c.h.b16 %v584
        %v1299 = vunpack.c.l.b16 %v585
        %v1300 = vunpack.c.l.b16 %v586
        %v1301 = vunpack.c.h.b16 %v586
        %v1302 = vunpack.c.l.b16 %v587
        %v1303 = vunpack.c.h.b16 %v587
        %v1304 = vunpack.c.l.b16 %v588
        %v1305 = vunpack.c.l.b16 %v589
        %v1306 = vunpack.c.h.b16 %v589
        %v1307 = vunpack.c.l.b16 %v590
        %v1308 = vunpack.c.h.b16 %v590
        %v1309 = vunpack.c.l.b16 %v591
        %v1310 = vunpack.c.l.b16 %v592
        %v1311 = vunpack.c.h.b16 %v592
        %v1312 = vunpack.c.l.b16 %v593
        %v1313 = vunpack.c.h.b16 %v593
        %v1314 = vunpack.c.l.b16 %v594
        %v1315 = vunpack.c.l.b16 %v595
        %v1316 = vunpack.c.h.b16 %v595
        %v1317 = vunpack.c.l.b16 %v596
        %v1318 = vunpack.c.h.b16 %v596
        %v1319 = vunpack.c.l.b16 %v597
        %v1320 = vunpack.c.l.b16 %v598
        %v1321 = vunpack.c.h.b16 %v598
        %v1322 = vunpack.c.l.b16 %v599
        %v1323 = vunpack.c.h.b16 %v599
        %v1324 = vunpack.c.l.b16 %v600
        %v1325 = vunpack.c.l.b16 %v601
        %v1326 = vunpack.c.h.b16 %v601
        %v1327 = vunpack.c.l.b16 %v602
        %v1328 = vunpack.c.h.b16 %v602
        %v1329 = vunpack.c.l.b16 %v603
        %v1330 = vunpack.c.l.b16 %v604
        %v1331 = vunpack.c.h.b16 %v604
        %v1332 = vunpack.c.l.b16 %v605
        %v1333 = vunpack.c.h.b16 %v605
        %v1334 = vunpack.c.l.b16 %v606
        %v1335 = vunpack.c.l.b16 %v607
        %v1336 = vunpack.c.h.b16 %v607
        %v1337 = vunpack.c.l.b16 %v608
        %v1338 = vunpack.c.h.b16 %v608
        %v1339 = vunpack.c.l.b16 %v609
        %v1340 = vunpack.c.l.b16 %v610
        %v1341 = vunpack.c.h.b16 %v610
        %v1342 = vunpack.c.l.b16 %v611
        %v1343 = vunpack.c.h.b16 %v611
        %v1344 = vunpack.c.l.b16 %v612
        %v1345 = vunpack.c.l.b16 %v613
        %v1346 = vunpack.c.h.b16 %v613
        %v1347 = vunpack.c.l.b16 %v614
        %v1348 = vunpack.c.h.b16 %v614
        %v1349 = vunpack.c.l.b16 %v615
        %v1350 = vunpack.c.l.b16 %v616
        %v1351 = vunpack.c.h.b16 %v616
        %v1352 = vunpack.c.l.b16 %v617
        %v1353 = vunpack.c.h.b16 %v617
        %v1354 = vunpack.c.l.b16 %v618
        %v1355 = vunpack.c.l.b16 %v619
        %v1356 = vunpack.c.h.b16 %v619
        %v1357 = vunpack.c.l.b16 %v620
        %v1358 = vunpack.c.h.b16 %v620
        %v1359 = vunpack.c.l.b16 %v621
        %v1360 = vunpack.c.l.b16 %v622
        %v1361 = vunpack.c.h.b16 %v622
        %v1362 = vunpack.c.l.b16 %v623
        %v1363 = vunpack.c.h.b16 %v623
        %v1364 = vunpack.c.l.b16 %v624
        %v1365 = vunpack.c.l.b16 %v625
        %v1366 = vunpack.c.h.b16 %v625
        %v1367 = vunpack.c.l.b16 %v626
        %v1368 = vunpack.c.h.b16 %v626
        %v1369 = vunpack.c.l.b16 %v627
        %v1370 = vunpack.c.l.b16 %v628
        %v1371 = vunpack.c.h.b16 %v628
        %v1372 = vunpack.c.l.b16 %v629
        %v1373 = vunpack.c.h.b16 %v629
        %v1374 = vunpack.c.l.b16 %v630
        %v1375 = vunpack.c.l.b16 %v631
        %v1376 = vunpack.c.h.b16 %v631
        %v1377 = vunpack.c.l.b16 %v632
        %v1378 = vunpack.c.h.b16 %v632
        %v1379 = vunpack.c.l.b16 %v633
        %v1380 = vunpack.c.l.b16 %v634
        %v1381 = vunpack.c.h.b16 %v634
        %v1382 = vunpack.c.l.b16 %v635
        %v1383 = vunpack.c.h.b16 %v635
        %v1384 = vunpack.c.l.b16 %v636
        %v1385 = vunpack.c.l.b16 %v637
        %v1386 = vunpack.c.h.b16 %v637
        %v1387 = vunpack.c.l.b16 %v638
        %v1388 = vunpack.c.h.b16 %v638
        %v1389 = vunpack.c.l.b16 %v639
        %v1390 = vunpack.c.l.b16 %v640
        %v1391 = vunpack.c.h.b16 %v640
        %v1392 = vunpack.c.l.b16 %v641
        %v1393 = vunpack.c.h.b16 %v641
        %v1394 = vunpack.c.l.b16 %v642
        %v1395 = vunpack.c.l.b16 %v643
        %v1396 = vunpack.c.h.b16 %v643
        %v1397 = vunpack.c.l.b16 %v644
        %v1398 = vunpack.c.h.b16 %v644
        %v1399 = vunpack.c.l.b16 %v645
        %v1400 = vunpack.c.l.b16 %v646
        %v1401 = vunpack.c.h.b16 %v646
        %v1402 = vunpack.c.l.b16 %v647
        %v1403 = vunpack.c.h.b16 %v647
        %v1404 = vunpack.c.l.b16 %v648
        %v1405 = vunpack.c.l.b16 %v649
        %v1406 = vunpack.c.h.b16 %v649
        %v1407 = vunpack.c.l.b16 %v650
        %v1408 = vunpack.c.h.b16 %v650
        %v1409 = vunpack.c.l.b16 %v651
        %v1410 = vunpack.c.l.b16 %v652
        %v1411 = vunpack.c.h.b16 %v652
        %v1412 = vunpack.c.l.b16 %v653
        %v1413 = vunpack.c.h.b16 %v653
        %v1414 = vunpack.c.l.b16 %v654
        %v1415 = vunpack.c.l.b16 %v655
        %v1416 = vunpack.c.h.b16 %v655
        %v1417 = vunpack.c.l.b16 %v656
        %v1418 = vunpack.c.h.b16 %v656
        %v1419 = vunpack.c.l.b16 %v657
        %v1420 = vunpack.c.l.b16 %v658
        %v1421 = vunpack.c.h.b16 %v658
        %v1422 = vunpack.c.l.b16 %v659
        %v1423 = vunpack.c.h.b16 %v659
        %v1424 = vunpack.c.l.b16 %v660
        %v1425 = vunpack.c.l.b16 %v661
        %v1426 = vunpack.c.h.b16 %v661
        %v1427 = vunpack.c.l.b16 %v662
        %v1428 = vunpack.c.h.b16 %v662
        %v1429 = vunpack.c.l.b16 %v663
        %v1430 = vunpack.c.l.b16 %v664
        %v1431 = vunpack.c.h.b16 %v664
        %v1432 = vunpack.c.l.b16 %v665
        %v1433 = vunpack.c.h.b16 %v665
        %v1434 = vunpack.c.l.b16 %v666
        %v1435 = vunpack.c.l.b16 %v667
        %v1436 = vunpack.c.h.b16 %v667
        %v1437 = vunpack.c.l.b16 %v668
        %v1438 = vunpack.c.h.b16 %v668
        %v1439 = vunpack.c.l.b16 %v669
        %v1440 = vunpack.c.l.b16 %v670
        %v1441 = vunpack.c.h.b16 %v670
        %v1442 = vunpack.c.l.b16 %v671
        %v1443 = vunpack.c.h.b16 %v671
        %v1444 = vunpack.c.l.b16 %v672
        %v1445 = vunpack.c.l.b16 %v673
        %v1446 = vunpack.c.h.b16 %v673
        %v1447 = vunpack.c.l.b16 %v674
        %v1448 = vunpack.c.h.b16 %v674
        %v1449 = vunpack.c.l.b16 %v675
        %v1450 = vunpack.c.l.b16 %v676
        %v1451 = vunpack.c.h.b16 %v676
        %v1452 = vunpack.c.l.b16 %v677
        %v1453 = vunpack.c.h.b16 %v677
        %v1454 = vunpack.c.l.b16 %v678
        %v1455 = vunpack.c.l.b16 %v679
        %v1456 = vunpack.c.h.b16 %v679
        %v1457 = vunpack.c.l.b16 %v680
        %v1458 = vunpack.c.h.b16 %v680
        %v1459 = vunpack.c.l.b16 %v681
        %v1460 = vunpack.c.l.b16 %v682
        %v1461 = vunpack.c.h.b16 %v682
        %v1462 = vunpack.c.l.b16 %v683
        %v1463 = vunpack.c.h.b16 %v683
        %v1464 = vunpack.c.l.b16 %v684
        %v1465 = vunpack.c.l.b16 %v685
        %v1466 = vunpack.c.h.b16 %v685
        %v1467 = vunpack.c.l.b16 %v686
        %v1468 = vunpack.c.h.b16 %v686
        %v1469 = vunpack.c.l.b16 %v687
        %v1470 = vunpack.c.l.b16 %v688
        %v1471 = vunpack.c.h.b16 %v688
        %v1472 = vunpack.c.l.b16 %v689
        %v1473 = vunpack.c.h.b16 %v689
        %v1474 = vunpack.c.l.b16 %v690
        %v1475 = vunpack.c.l.b16 %v691
        %v1476 = vunpack.c.h.b16 %v691
        %v1477 = vunpack.c.l.b16 %v692
        %v1478 = vunpack.c.h.b16 %v692
        %v1479 = vunpack.c.l.b16 %v693
        %v1480 = vunpack.c.l.b16 %v694
        %v1481 = vunpack.c.h.b16 %v694
        %v1482 = vunpack.c.l.b16 %v695
        %v1483 = vunpack.c.h.b16 %v695
        %v1484 = vunpack.c.l.b16 %v696
        %v1485 = vunpack.c.l.b16 %v697
        %v1486 = vunpack.c.h.b16 %v697
        %v1487 = vunpack.c.l.b16 %v698
        %v1488 = vunpack.c.h.b16 %v698
        %v1489 = vunpack.c.l.b16 %v699
        %v1490 = vunpack.c.l.b16 %v700
        %v1491 = vunpack.c.h.b16 %v700
        %v1492 = vunpack.c.l.b16 %v701
        %v1493 = vunpack.c.h.b16 %v701
        %v1494 = vunpack.c.l.b16 %v702
        %v1495 = vunpack.c.l.b16 %v703
        %v1496 = vunpack.c.h.b16 %v703
        %v1497 = vunpack.c.l.b16 %v704
        %v1498 = vunpack.c.h.b16 %v704
        %v1499 = vunpack.c.l.b16 %v705
        %v1500 = vunpack.c.l.b16 %v706
        %v1501 = vunpack.c.h.b16 %v706
        %v1502 = vunpack.c.l.b16 %v707
        %v1503 = vunpack.c.h.b16 %v707
        %v1504 = vunpack.c.l.b16 %v708
        %v1505 = vunpack.c.l.b16 %v709
        %v1506 = vunpack.c.h.b16 %v709
        %v1507 = vunpack.c.l.b16 %v710
        %v1508 = vunpack.c.h.b16 %v710
        %v1509 = vunpack.c.l.b16 %v711
        %v1510 = vunpack.c.l.b16 %v712
        %v1511 = vunpack.c.h.b16 %v712
        %v1512 = vunpack.c.l.b16 %v713
        %v1513 = vunpack.c.h.b16 %v713
        %v1514 = vunpack.c.l.b16 %v714
        %v1515 = vunpack.c.l.b16 %v715
        %v1516 = vunpack.c.h.b16 %v715
        %v1517 = vunpack.c.l.b16 %v716
        %v1518 = vunpack.c.h.b16 %v716
        %v1519 = vunpack.c.l.b16 %v717
        %v1520 = vunpack.c.l.b16 %v718
        %v1521 = vunpack.c.h.b16 %v718
        %v1522 = vunpack.c.l.b16 %v719
        %v1523 = vunpack.c.h.b16 %v719
        %v1524 = vunpack.c.l.b16 %v720
        %v1525 = vunpack.c.l.b16 %v721
        %v1526 = vunpack.c.h.b16 %v721
        %v1527 = vunpack.c.l.b16 %v722
        %v1528 = vunpack.c.h.b16 %v722
        %v1529 = vunpack.c.l.b16 %v723
        %v1530 = vunpack.c.l.b16 %v724
        %v1531 = vunpack.c.h.b16 %v724
        %v1532 = vunpack.c.l.b16 %v725
        %v1533 = vunpack.c.h.b16 %v725
        %v1534 = vunpack.c.l.b16 %v726
        %v1535 = vunpack.c.l.b16 %v727
        %v1536 = vunpack.c.h.b16 %v727
        %v1537 = vunpack.c.l.b16 %v728
        %v1538 = vunpack.c.h.b16 %v728
        %v1539 = vunpack.c.l.b16 %v729
        %v1540 = vunpack.c.l.b16 %v730
        %v1541 = vunpack.c.h.b16 %v730
        %v1542 = vunpack.c.l.b16 %v731
        %v1543 = vunpack.c.h.b16 %v731
        %v1544 = vunpack.c.l.b16 %v732
        %v1545 = vunpack.c.l.b16 %v733
        %v1546 = vunpack.c.h.b16 %v733
        %v1547 = vunpack.c.l.b16 %v734
        %v1548 = vunpack.c.h.b16 %v734
        %v1549 = vunpack.c.l.b16 %v735
        %v1550 = vunpack.c.l.b16 %v736
        %v1551 = vunpack.c.h.b16 %v736
        %v1552 = vunpack.c.l.b16 %v737
        %v1553 = vunpack.c.h.b16 %v737
        %v1554 = vunpack.c.l.b16 %v738
        %v1555 = vunpack.c.l.b16 %v739
        %v1556 = vunpack.c.h.b16 %v739
        %v1557 = vunpack.c.l.b16 %v740
        %v1558 = vunpack.c.h.b16 %v740
        %v1559 = vunpack.c.l.b16 %v741
        %v1560 = vunpack.c.l.b16 %v742
        %v1561 = vunpack.c.h.b16 %v742
        %v1562 = vunpack.c.l.b16 %v743
        %v1563 = vunpack.c.h.b16 %v743
        %v1564 = vunpack.c.l.b16 %v744
        %v1565 = vunpack.c.l.b16 %v745
        %v1566 = vunpack.c.h.b16 %v745
        %v1567 = vunpack.c.l.b16 %v746
        %v1568 = vunpack.c.h.b16 %v746
        %v1569 = vunpack.c.l.b16 %v747
        %v1570 = vunpack.c.l.b16 %v748
        %v1571 = vunpack.c.h.b16 %v748
        %v1572 = vunpack.c.l.b16 %v749
        %v1573 = vunpack.c.h.b16 %v749
        %v1574 = vunpack.c.l.b16 %v750
        %v1575 = vunpack.c.l.b16 %v751
        %v1576 = vunpack.c.h.b16 %v751
        %v1577 = vunpack.c.l.b16 %v752
        %v1578 = vunpack.c.h.b16 %v752
        %v1579 = vunpack.c.l.b16 %v753
        %v1580 = vunpack.c.l.b16 %v754
        %v1581 = vunpack.c.h.b16 %v754
        %v1582 = vunpack.c.l.b16 %v755
        %v1583 = vunpack.c.h.b16 %v755
        %v1584 = vunpack.c.l.b16 %v756
        %v1585 = vunpack.c.l.b16 %v757
        %v1586 = vunpack.c.h.b16 %v757
        %v1587 = vunpack.c.l.b16 %v758
        %v1588 = vunpack.c.h.b16 %v758
        %v1589 = vunpack.c.l.b16 %v759
        %v1590 = vunpack.c.l.b16 %v760
        %v1591 = vunpack.c.h.b16 %v760
        %v1592 = vunpack.c.l.b16 %v761
        %v1593 = vunpack.c.h.b16 %v761
        %v1594 = vunpack.c.l.b16 %v762
        %v1595 = vunpack.c.l.b16 %v763
        %v1596 = vunpack.c.h.b16 %v763
        %v1597 = vunpack.c.l.b16 %v764
        %v1598 = vunpack.c.h.b16 %v764
        %v1599 = vunpack.c.l.b16 %v765
        %v1600 = vunpack.c.l.b16 %v766
        %v1601 = vunpack.c.h.b16 %v766
        %v1602 = vunpack.c.l.b16 %v767
        %v1603 = vunpack.c.h.b16 %v767
        %v1604 = vunpack.c.l.b16 %v768
        %v1605 = vunpack.c.l.b16 %v769
        %v1606 = vunpack.c.h.b16 %v769
        %v1607 = vunpack.c.l.b16 %v770
        %v1608 = vunpack.c.h.b16 %v770
        %v1609 = vunpack.c.l.b16 %v771
        %v1610 = vunpack.c.l.b16 %v772
        %v1611 = vunpack.c.h.b16 %v772
        %v1612 = vunpack.c.l.b16 %v773
        %v1613 = vunpack.c.h.b16 %v773
        %v1614 = vunpack.c.l.b16 %v774
        %v1615 = vunpack.c.l.b16 %v775
        %v1616 = vunpack.c.h.b16 %v775
        %v1617 = vunpack.c.l.b16 %v776
        %v1618 = vunpack.c.h.b16 %v776
        %v1619 = vunpack.c.l.b16 %v777
        %v1620 = vunpack.c.l.b16 %v778
        %v1621 = vunpack.c.h.b16 %v778
        %v1622 = vunpack.c.l.b16 %v779
        %v1623 = vunpack.c.h.b16 %v779
        %v1624 = vunpack.c.l.b16 %v780
        %v1625 = vunpack.c.l.b16 %v781
        %v1626 = vunpack.c.h.b16 %v781
        %v1627 = vunpack.c.l.b16 %v782
        %v1628 = vunpack.c.h.b16 %v782
        %v1629 = vunpack.c.l.b16 %v783
        %v1630 = vpack.c.b16 %v1145, %v1140
        %v1631 = vpack.c.b16 %v1146, %v1141
        %v1632 = vpack.c.b16 %v1147, %v1142
        %v1633 = vpack.c.b16 %v1148, %v1143
        %v1634 = vpack.c.b16 %v1149, %v1144
        %v1635 = vpack.c.b16 %v1155, %v1150
        %v1636 = vpack.c.b16 %v1156, %v1151
        %v1637 = vpack.c.b16 %v1157, %v1152
        %v1638 = vpack.c.b16 %v1158, %v1153
        %v1639 = vpack.c.b16 %v1159, %v1154
        %v1640 = vpack.c.b16 %v1165, %v1160
        %v1641 = vpack.c.b16 %v1166, %v1161
        %v1642 = vpack.c.b16 %v1167, %v1162
        %v1643 = vpack.c.b16 %v1168, %v1163
        %v1644 = vpack.c.b16 %v1169, %v1164
        %v1645 = vpack.c.b16 %v1175, %v1170
        %v1646 = vpack.c.b16 %v1176, %v1171
        %v1647 = vpack.c.b16 %v1177, %v1172
        %v1648 = vpack.c.b16 %v1178, %v1173
        %v1649 = vpack.c.b16 %v1179, %v1174
        %v1650 = vpack.c.b16 %v1185, %v1180
        %v1651 = vpack.c.b16 %v1186, %v1181
        %v1652 = vpack.c.b16 %v1187, %v1182
        %v1653 = vpack.c.b16 %v1188, %v1183
        %v1654 = vpack.c.b16 %v1189, %v1184
        %v1655 = vpack.c.b16 %v1195, %v1190
        %v1656 = vpack.c.b16 %v1196, %v1191
        %v1657 = vpack.c.b16 %v1197, %v1192
        %v1658 = vpack.c.b16 %v1198, %v1193
        %v1659 = vpack.c.b16 %v1199, %v1194
        %v1660 = vpack.c.b16 %v1205, %v1200
        %v1661 = vpack.c.b16 %v1206, %v1201
        %v1662 = vpack.c.b16 %v1207, %v1202
        %v1663 = vpack.c.b16 %v1208, %v1203
        %v1664 = vpack.c.b16 %v1209, %v1204
        %v1665 = vpack.c.b16 %v1215, %v1210
        %v1666 = vpack.c.b16 %v1216, %v1211
        %v1667 = vpack.c.b16 %v1217, %v1212
        %v1668 = vpack.c.b16 %v1218, %v1213
        %v1669 = vpack.c.b16 %v1219, %v1214
        %v1670 = vpack.c.b16 %v1225, %v1220
        %v1671 = vpack.c.b16 %v1226, %v1221
        %v1672 = vpack.c.b16 %v1227, %v1222
        %v1673 = vpack.c.b16 %v1228, %v1223
        %v1674 = vpack.c.b16 %v1229, %v1224
        %v1675 = vpack.c.b16 %v1235, %v1230
        %v1676 = vpack.c.b16 %v1236, %v1231
        %v1677 = vpack.c.b16 %v1237, %v1232
        %v1678 = vpack.c.b16 %v1238, %v1233
        %v1679 = vpack.c.b16 %v1239, %v1234
        %v1680 = vpack.c.b16 %v1245, %v1240
        %v1681 = vpack.c.b16 %v1246, %v1241
        %v1682 = vpack.c.b16 %v1247, %v1242
        %v1683 = vpack.c.b16 %v1248, %v1243
        %v1684 = vpack.c.b16 %v1249, %v1244
        %v1685 = vpack.c.b16 %v1255, %v1250
        %v1686 = vpack.c.b16 %v1256, %v1251
        %v1687 = vpack.c.b16 %v1257, %v1252
        %v1688 = vpack.c.b16 %v1258, %v1253
        %v1689 = vpack.c.b16 %v1259, %v1254
        %v1690 = vpack.c.b16 %v1265, %v1260
        %v1691 = vpack.c.b16 %v1266, %v1261
        %v1692 = vpack.c.b16 %v1267, %v1262
        %v1693 = vpack.c.b16 %v1268, %v1263
        %v1694 = vpack.c.b16 %v1269, %v1264
        %v1695 = vpack.c.b16 %v1275, %v1270
        %v1696 = vpack.c.b16 %v1276, %v1271
        %v1697 = vpack.c.b16 %v1277, %v1272
        %v1698 = vpack.c.b16 %v1278, %v1273
        %v1699 = vpack.c.b16 %v1279, %v1274
        %v1700 = vpack.c.b16 %v1285, %v1280
        %v1701 = vpack.c.b16 %v1286, %v1281
        %v1702 = vpack.c.b16 %v1287, %v1282
        %v1703 = vpack.c.b16 %v1288, %v1283
        %v1704 = vpack.c.b16 %v1289, %v1284
        %v1705 = vpack.c.b16 %v1295, %v1290
        %v1706 = vpack.c.b16 %v1296, %v1291
        %v1707 = vpack.c.b16 %v1297, %v1292
        %v1708 = vpack.c.b16 %v1298, %v1293
        %v1709 = vpack.c.b16 %v1299, %v1294
        %v1710 = vpack.c.b16 %v1305, %v1300
        %v1711 = vpack.c.b16 %v1306, %v1301
        %v1712 = vpack.c.b16 %v1307, %v1302
        %v1713 = vpack.c.b16 %v1308, %v1303
        %v1714 = vpack.c.b16 %v1309, %v1304
        %v1715 = vpack.c.b16 %v1315, %v1310
        %v1716 = vpack.c.b16 %v1316, %v1311
        %v1717 = vpack.c.b16 %v1317, %v1312
        %v1718 = vpack.c.b16 %v1318, %v1313
        %v1719 = vpack.c.b16 %v1319, %v1314
        %v1720 = vpack.c.b16 %v1325, %v1320
        %v1721 = vpack.c.b16 %v1326, %v1321
        %v1722 = vpack.c.b16 %v1327, %v1322
        %v1723 = vpack.c.b16 %v1328, %v1323
        %v1724 = vpack.c.b16 %v1329, %v1324
        %v1725 = vpack.c.b16 %v1335, %v1330
        %v1726 = vpack.c.b16 %v1336, %v1331
        %v1727 = vpack.c.b16 %v1337, %v1332
        %v1728 = vpack.c.b16 %v1338, %v1333
        %v1729 = vpack.c.b16 %v1339, %v1334
        %v1730 = vpack.c.b16 %v1345, %v1340
        %v1731 = vpack.c.b16 %v1346, %v1341
        %v1732 = vpack.c.b16 %v1347, %v1342
        %v1733 = vpack.c.b16 %v1348, %v1343
        %v1734 = vpack.c.b16 %v1349, %v1344
        %v1735 = vpack.c.b16 %v1355, %v1350
        %v1736 = vpack.c.b16 %v1356, %v1351
        %v1737 = vpack.c.b16 %v1357, %v1352
        %v1738 = vpack.c.b16 %v1358, %v1353
        %v1739 = vpack.c.b16 %v1359, %v1354
        %v1740 = vpack.c.b16 %v1365, %v1360
        %v1741 = vpack.c.b16 %v1366, %v1361
        %v1742 = vpack.c.b16 %v1367, %v1362
        %v1743 = vpack.c.b16 %v1368, %v1363
        %v1744 = vpack.c.b16 %v1369, %v1364
        %v1745 = vpack.c.b16 %v1375, %v1370
        %v1746 = vpack.c.b16 %v1376, %v1371
        %v1747 = vpack.c.b16 %v1377, %v1372
        %v1748 = vpack.c.b16 %v1378, %v1373
        %v1749 = vpack.c.b16 %v1379, %v1374
        %v1750 = vpack.c.b16 %v1385, %v1380
        %v1751 = vpack.c.b16 %v1386, %v1381
        %v1752 = vpack.c.b16 %v1387, %v1382
        %v1753 = vpack.c.b16 %v1388, %v1383
        %v1754 = vpack.c.b16 %v1389, %v1384
        %v1755 = vpack.c.b16 %v1395, %v1390
        %v1756 = vpack.c.b16 %v1396, %v1391
        %v1757 = vpack.c.b16 %v1397, %v1392
        %v1758 = vpack.c.b16 %v1398, %v1393
        %v1759 = vpack.c.b16 %v1399, %v1394
        %v1760 = vpack.c.b16 %v1405, %v1400
        %v1761 = vpack.c.b16 %v1406, %v1401
        %v1762 = vpack.c.b16 %v1407, %v1402
        %v1763 = vpack.c.b16 %v1408, %v1403
        %v1764 = vpack.c.b16 %v1409, %v1404
        %v1765 = vpack.c.b16 %v1415, %v1410
        %v1766 = vpack.c.b16 %v1416, %v1411
        %v1767 = vpack.c.b16 %v1417, %v1412
        %v1768 = vpack.c.b16 %v1418, %v1413
        %v1769 = vpack.c.b16 %v1419, %v1414
        %v1770 = vpack.c.b16 %v1425, %v1420
        %v1771 = vpack.c.b16 %v1426, %v1421
        %v1772 = vpack.c.b16 %v1427, %v1422
        %v1773 = vpack.c.b16 %v1428, %v1423
        %v1774 = vpack.c.b16 %v1429, %v1424
        %v1775 = vpack.c.b16 %v1435, %v1430
        %v1776 = vpack.c.b16 %v1436, %v1431
        %v1777 = vpack.c.b16 %v1437, %v1432
        %v1778 = vpack.c.b16 %v1438, %v1433
        %v1779 = vpack.c.b16 %v1439, %v1434
        %v1780 = vpack.c.b16 %v1445, %v1440
        %v1781 = vpack.c.b16 %v1446, %v1441
        %v1782 = vpack.c.b16 %v1447, %v1442
        %v1783 = vpack.c.b16 %v1448, %v1443
        %v1784 = vpack.c.b16 %v1449, %v1444
        %v1785 = vpack.c.b16 %v1455, %v1450
        %v1786 = vpack.c.b16 %v1456, %v1451
        %v1787 = vpack.c.b16 %v1457, %v1452
        %v1788 = vpack.c.b16 %v1458, %v1453
        %v1789 = vpack.c.b16 %v1459, %v1454
        %v1790 = vpack.c.b16 %v1465, %v1460
        %v1791 = vpack.c.b16 %v1466, %v1461
        %v1792 = vpack.c.b16 %v1467, %v1462
        %v1793 = vpack.c.b16 %v1468, %v1463
        %v1794 = vpack.c.b16 %v1469, %v1464
        %v1795 = vpack.c.b16 %v1475, %v1470
        %v1796 = vpack.c.b16 %v1476, %v1471
        %v1797 = vpack.c.b16 %v1477, %v1472
        %v1798 = vpack.c.b16 %v1478, %v1473
        %v1799 = vpack.c.b16 %v1479, %v1474
        %v1800 = vpack.c.b16 %v1485, %v1480
        %v1801 = vpack.c.b16 %v1486, %v1481
        %v1802 = vpack.c.b16 %v1487, %v1482
        %v1803 = vpack.c.b16 %v1488, %v1483
        %v1804 = vpack.c.b16 %v1489, %v1484
        %v1805 = vpack.c.b16 %v1495, %v1490
        %v1806 = vpack.c.b16 %v1496, %v1491
        %v1807 = vpack.c.b16 %v1497, %v1492
        %v1808 = vpack.c.b16 %v1498, %v1493
        %v1809 = vpack.c.b16 %v1499, %v1494
        %v1810 = vpack.c.b16 %v1505, %v1500
        %v1811 = vpack.c.b16 %v1506, %v1501
        %v1812 = vpack.c.b16 %v1507, %v1502
        %v1813 = vpack.c.b16 %v1508, %v1503
        %v1814 = vpack.c.b16 %v1509, %v1504
        %v1815 = vpack.c.b16 %v1515, %v1510
        %v1816 = vpack.c.b16 %v1516, %v1511
        %v1817 = vpack.c.b16 %v1517, %v1512
        %v1818 = vpack.c.b16 %v1518, %v1513
        %v1819 = vpack.c.b16 %v1519, %v1514
        %v1820 = vpack.c.b16 %v1525, %v1520
        %v1821 = vpack.c.b16 %v1526, %v1521
        %v1822 = vpack.c.b16 %v1527, %v1522
        %v1823 = vpack.c.b16 %v1528, %v1523
        %v1824 = vpack.c.b16 %v1529, %v1524
        %v1825 = vpack.c.b16 %v1535, %v1530
        %v1826 = vpack.c.b16 %v1536, %v1531
        %v1827 = vpack.c.b16 %v1537, %v1532
        %v1828 = vpack.c.b16 %v1538, %v1533
        %v1829 = vpack.c.b16 %v1539, %v1534
        %v1830 = vpack.c.b16 %v1545, %v1540
        %v1831 = vpack.c.b16 %v1546, %v1541
        %v1832 = vpack.c.b16 %v1547, %v1542
        %v1833 = vpack.c.b16 %v1548, %v1543
        %v1834 = vpack.c.b16 %v1549, %v1544
        %v1835 = vpack.c.b16 %v1555, %v1550
        %v1836 = vpack.c.b16 %v1556, %v1551
        %v1837 = vpack.c.b16 %v1557, %v1552
        %v1838 = vpack.c.b16 %v1558, %v1553
        %v1839 = vpack.c.b16 %v1559, %v1554
        %v1840 = vpack.c.b16 %v1565, %v1560
        %v1841 = vpack.c.b16 %v1566, %v1561
        %v1842 = vpack.c.b16 %v1567, %v1562
        %v1843 = vpack.c.b16 %v1568, %v1563
        %v1844 = vpack.c.b16 %v1569, %v1564
        %v1845 = vpack.c.b16 %v1575, %v1570
        %v1846 = vpack.c.b16 %v1576, %v1571
        %v1847 = vpack.c.b16 %v1577, %v1572
        %v1848 = vpack.c.b16 %v1578, %v1573
        %v1849 = vpack.c.b16 %v1579, %v1574
        %v1850 = vpack.c.b16 %v1585, %v1580
        %v1851 = vpack.c.b16 %v1586, %v1581
        %v1852 = vpack.c.b16 %v1587, %v1582
        %v1853 = vpack.c.b16 %v1588, %v1583
        %v1854 = vpack.c.b16 %v1589, %v1584
        %v1855 = vpack.c.b16 %v1595, %v1590
        %v1856 = vpack.c.b16 %v1596, %v1591
        %v1857 = vpack.c.b16 %v1597, %v1592
        %v1858 = vpack.c.b16 %v1598, %v1593
        %v1859 = vpack.c.b16 %v1599, %v1594
        %v1860 = vpack.c.b16 %v1605, %v1600
        %v1861 = vpack.c.b16 %v1606, %v1601
        %v1862 = vpack.c.b16 %v1607, %v1602
        %v1863 = vpack.c.b16 %v1608, %v1603
        %v1864 = vpack.c.b16 %v1609, %v1604
        %v1865 = vpack.c.b16 %v1615, %v1610
        %v1866 = vpack.c.b16 %v1616, %v1611
        %v1867 = vpack.c.b16 %v1617, %v1612
        %v1868 = vpack.c.b16 %v1618, %v1613
        %v1869 = vpack.c.b16 %v1619, %v1614
        %v1870 = vpack.c.b16 %v1625, %v1620
        %v1871 = vpack.c.b16 %v1626, %v1621
        %v1872 = vpack.c.b16 %v1627, %v1622
        %v1873 = vpack.c.b16 %v1628, %v1623
        %v1874 = vpack.c.b16 %v1629, %v1624
        %vm2120 = vcmask 130048
        %v2122 = vsel %vm2120, %v839, 0
        %2124 = vmatprep.subr.bf16.mxu0 %v1631
        %2125 = vmatpush1.bf16.msra.mxu0 %v1630
        %2126 = vmatprep.subr.bf16.mxu0 %v1636
        %2127 = vmatpush1.bf16.msra.mxu0 %v1635
        %2128 = vmatprep.subr.bf16.mxu0 %v1641
        %2129 = vmatpush1.bf16.msra.mxu0 %v1640
        %2130 = vmatprep.subr.bf16.mxu0 %v1646
        %2131 = vmatpush1.bf16.msra.mxu0 %v1645
        %2132 = vmatprep.subr.bf16.mxu0 %v1651
        %2133 = vmatpush1.bf16.msra.mxu0 %v1650
        %2134 = vmatprep.subr.bf16.mxu0 %v1656
        %2135 = vmatpush1.bf16.msra.mxu0 %v1655
        %2136 = vmatprep.subr.bf16.mxu0 %v1661
        %2137 = vmatpush1.bf16.msra.mxu0 %v1660
        %2138 = vmatprep.subr.bf16.mxu0 %v1666
        %2139 = vmatpush1.bf16.msra.mxu0 %v1665
        %2140 = vmatprep.subr.bf16.mxu0 %v1671
        %2141 = vmatpush1.bf16.msra.mxu0 %v1670
        %2142 = vmatprep.subr.bf16.mxu0 %v1676
        %2143 = vmatpush1.bf16.msra.mxu0 %v1675
        %2144 = vmatprep.subr.bf16.mxu0 %v1681
        %2145 = vmatpush1.bf16.msra.mxu0 %v1680
        %2146 = vmatprep.subr.bf16.mxu0 %v1686
        %2147 = vmatpush1.bf16.msra.mxu0 %v1685
        %2148 = vmatprep.subr.bf16.mxu0 %v1691
        %2149 = vmatpush1.bf16.msra.mxu0 %v1690
        %2150 = vmatprep.subr.bf16.mxu0 %v1696
        %2151 = vmatpush1.bf16.msra.mxu0 %v1695
        %2152 = vmatprep.subr.bf16.mxu0 %v1701
        %2153 = vmatpush1.bf16.msra.mxu0 %v1700
        %2154 = vmatprep.subr.bf16.mxu0 %v1706
        %2155 = vmatpush1.bf16.msra.mxu0 %v1705
        %2156 = vmatprep.mubr.bf16.mxu0 %v834
        %2157 = vmatmul.mubr.bf16.gmra.mrb[0].mxu0 %v833
        %v2158 = vpop.f32.mrb[0].mxu0
        %v2159 = vadd.f32 %v789, %v2158
        %v2160 = vpop.f32.mrb[0].mxu0
        %v2161 = vadd.f32 %v793, %v2160
        %v2162 = vpop.f32.mrb[0].mxu0
        %v2163 = vadd.f32 %v789, %v2162
        %v2164 = vpop.f32.mrb[0].mxu0
        %v2165 = vadd.f32 %v793, %v2164
        %2166 = vdwg.mxu0
        %2167 = vmatprep.subr.bf16.mxu0 %v1711
        %2168 = vmatpush1.bf16.msra.mxu0 %v1710
        %2169 = vmatprep.subr.bf16.mxu0 %v1716
        %2170 = vmatpush1.bf16.msra.mxu0 %v1715
        %2171 = vmatprep.subr.bf16.mxu0 %v1721
        %2172 = vmatpush1.bf16.msra.mxu0 %v1720
        %2173 = vmatprep.subr.bf16.mxu0 %v1726
        %2174 = vmatpush1.bf16.msra.mxu0 %v1725
        %2175 = vmatprep.subr.bf16.mxu0 %v1731
        %2176 = vmatpush1.bf16.msra.mxu0 %v1730
        %2177 = vmatprep.subr.bf16.mxu0 %v1736
        %2178 = vmatpush1.bf16.msra.mxu0 %v1735
        %2179 = vmatprep.subr.bf16.mxu0 %v1741
        %2180 = vmatpush1.bf16.msra.mxu0 %v1740
        %2181 = vmatprep.subr.bf16.mxu0 %v1746
        %2182 = vmatpush1.bf16.msra.mxu0 %v1745
        %2183 = vmatprep.subr.bf16.mxu0 %v1751
        %2184 = vmatpush1.bf16.msra.mxu0 %v1750
        %2185 = vmatprep.subr.bf16.mxu0 %v1756
        %2186 = vmatpush1.bf16.msra.mxu0 %v1755
        %2187 = vmatprep.subr.bf16.mxu0 %v1761
        %2188 = vmatpush1.bf16.msra.mxu0 %v1760
        %2189 = vmatprep.subr.bf16.mxu0 %v1766
        %2190 = vmatpush1.bf16.msra.mxu0 %v1765
        %2191 = vmatprep.subr.bf16.mxu0 %v1771
        %2192 = vmatpush1.bf16.msra.mxu0 %v1770
        %2193 = vmatprep.subr.bf16.mxu0 %v1776
        %2194 = vmatpush1.bf16.msra.mxu0 %v1775
        %2195 = vmatprep.subr.bf16.mxu0 %v1781
        %2196 = vmatpush1.bf16.msra.mxu0 %v1780
        %2197 = vmatprep.subr.bf16.mxu0 %v1786
        %2198 = vmatpush1.bf16.msra.mxu0 %v1785
        %2199 = vmatprep.mubr.bf16.mxu0 %v836
        %2200 = vmatmul.mubr.bf16.gmra.mrb[0].mxu0 %v835
        %v2201 = vpop.f32.mrb[0].mxu0
        %v2202 = vadd.f32 %v2159, %v2201
        %v2203 = vpop.f32.mrb[0].mxu0
        %v2204 = vadd.f32 %v2161, %v2203
        %v2205 = vpop.f32.mrb[0].mxu0
        %v2206 = vadd.f32 %v2163, %v2205
        %v2207 = vpop.f32.mrb[0].mxu0
        %v2208 = vadd.f32 %v2165, %v2207
        %2209 = vdwg.mxu0
        %2210 = vmatprep.subr.bf16.mxu0 %v1791
        %2211 = vmatpush1.bf16.msra.mxu0 %v1790
        %2212 = vmatprep.subr.bf16.mxu0 %v1796
        %2213 = vmatpush1.bf16.msra.mxu0 %v1795
        %2214 = vmatprep.subr.bf16.mxu0 %v1801
        %2215 = vmatpush1.bf16.msra.mxu0 %v1800
        %2216 = vmatprep.subr.bf16.mxu0 %v1806
        %2217 = vmatpush1.bf16.msra.mxu0 %v1805
        %2218 = vmatprep.subr.bf16.mxu0 %v1811
        %2219 = vmatpush1.bf16.msra.mxu0 %v1810
        %2220 = vmatprep.subr.bf16.mxu0 %v1816
        %2221 = vmatpush1.bf16.msra.mxu0 %v1815
        %2222 = vmatprep.subr.bf16.mxu0 %v1821
        %2223 = vmatpush1.bf16.msra.mxu0 %v1820
        %2224 = vmatprep.subr.bf16.mxu0 %v1826
        %2225 = vmatpush1.bf16.msra.mxu0 %v1825
        %2226 = vmatprep.subr.bf16.mxu0 %v1831
        %2227 = vmatpush1.bf16.msra.mxu0 %v1830
        %2228 = vmatprep.subr.bf16.mxu0 %v1836
        %2229 = vmatpush1.bf16.msra.mxu0 %v1835
        %2230 = vmatprep.subr.bf16.mxu0 %v1841
        %2231 = vmatpush1.bf16.msra.mxu0 %v1840
        %2232 = vmatprep.subr.bf16.mxu0 %v1846
        %2233 = vmatpush1.bf16.msra.mxu0 %v1845
        %2234 = vmatprep.subr.bf16.mxu0 %v1851
        %2235 = vmatpush1.bf16.msra.mxu0 %v1850
        %2236 = vmatprep.subr.bf16.mxu0 %v1856
        %2237 = vmatpush1.bf16.msra.mxu0 %v1855
        %2238 = vmatprep.subr.bf16.mxu0 %v1861
        %2239 = vmatpush1.bf16.msra.mxu0 %v1860
        %2240 = vmatprep.subr.bf16.mxu0 %v1866
        %2241 = vmatpush1.bf16.msra.mxu0 %v1865
        %2242 = vmatprep.mubr.bf16.mxu0 %v838
        %2243 = vmatmul.mubr.bf16.gmra.mrb[0].mxu0 %v837
        %v2244 = vpop.f32.mrb[0].mxu0
        %v2245 = vadd.f32 %v2202, %v2244
        %v2246 = vpop.f32.mrb[0].mxu0
        %v2247 = vadd.f32 %v2204, %v2246
        %v2248 = vpop.f32.mrb[0].mxu0
        %v2249 = vadd.f32 %v2206, %v2248
        %v2250 = vpop.f32.mrb[0].mxu0
        %v2251 = vadd.f32 %v2208, %v2250
        %2252 = vdwg.mxu0
        %2253 = vmatprep.subr.bf16.mxu0 %v1871
        %2254 = vmatpush1.bf16.msra.mxu0 %v1870
        %2255 = vmatprep.subr.bf16.mxu0 0
        %2256 = vmatpush1.bf16.msra.mxu0 0
        %2257 = vmatprep.subr.bf16.mxu0 0
        %2258 = vmatpush1.bf16.msra.mxu0 0
        %2259 = vmatprep.subr.bf16.mxu0 0
        %2260 = vmatpush1.bf16.msra.mxu0 0
        %2261 = vmatprep.subr.bf16.mxu0 0
        %2262 = vmatpush1.bf16.msra.mxu0 0
        %2263 = vmatprep.subr.bf16.mxu0 0
        %2264 = vmatpush1.bf16.msra.mxu0 0
        %2265 = vmatprep.subr.bf16.mxu0 0
        %2266 = vmatpush1.bf16.msra.mxu0 0
        %2267 = vmatprep.subr.bf16.mxu0 0
        %2268 = vmatpush1.bf16.msra.mxu0 0
        %2269 = vmatprep.subr.bf16.mxu0 0
        %2270 = vmatpush1.bf16.msra.mxu0 0
        %2271 = vmatprep.subr.bf16.mxu0 0
        %2272 = vmatpush1.bf16.msra.mxu0 0
        %2273 = vmatprep.subr.bf16.mxu0 0
        %2274 = vmatpush1.bf16.msra.mxu0 0
        %2275 = vmatprep.subr.bf16.mxu0 0
        %2276 = vmatpush1.bf16.msra.mxu0 0
        %2277 = vmatprep.subr.bf16.mxu0 0
        %2278 = vmatpush1.bf16.msra.mxu0 0
        %2279 = vmatprep.subr.bf16.mxu0 0
        %2280 = vmatpush1.bf16.msra.mxu0 0
        %2281 = vmatprep.subr.bf16.mxu0 0
        %2282 = vmatpush1.bf16.msra.mxu0 0
        %2283 = vmatprep.subr.bf16.mxu0 0
        %2284 = vmatpush1.bf16.msra.mxu0 0
        %2285 = vmatprep.mubr.bf16.mxu0 0
        %2286 = vmatmul.mubr.bf16.gmra.mrb[0].mxu0 %v2122
        %v2287 = vpop.f32.mrb[0].mxu0
        %v2288 = vadd.f32 %v2245, %v2287
        %v2289 = vpop.f32.mrb[0].mxu0
        %v2290 = vadd.f32 %v2247, %v2289
        %v2291 = vpop.f32.mrb[0].mxu0
        %v2292 = vadd.f32 %v2249, %v2291
        %v2293 = vpop.f32.mrb[0].mxu0
        %v2294 = vadd.f32 %v2251, %v2293
        %2295 = vdwg.mxu0
        %2296 = vmatprep.subr.bf16.mxu0 %v1633
        %2297 = vmatpush1.bf16.msra.mxu0 %v1632
        %2298 = vmatprep.subr.bf16.mxu0 %v1638
        %2299 = vmatpush1.bf16.msra.mxu0 %v1637
        %2300 = vmatprep.subr.bf16.mxu0 %v1643
        %2301 = vmatpush1.bf16.msra.mxu0 %v1642
        %2302 = vmatprep.subr.bf16.mxu0 %v1648
        %2303 = vmatpush1.bf16.msra.mxu0 %v1647
        %2304 = vmatprep.subr.bf16.mxu0 %v1653
        %2305 = vmatpush1.bf16.msra.mxu0 %v1652
        %2306 = vmatprep.subr.bf16.mxu0 %v1658
        %2307 = vmatpush1.bf16.msra.mxu0 %v1657
        %2308 = vmatprep.subr.bf16.mxu0 %v1663
        %2309 = vmatpush1.bf16.msra.mxu0 %v1662
        %2310 = vmatprep.subr.bf16.mxu0 %v1668
        %2311 = vmatpush1.bf16.msra.mxu0 %v1667
        %2312 = vmatprep.subr.bf16.mxu0 %v1673
        %2313 = vmatpush1.bf16.msra.mxu0 %v1672
        %2314 = vmatprep.subr.bf16.mxu0 %v1678
        %2315 = vmatpush1.bf16.msra.mxu0 %v1677
        %2316 = vmatprep.subr.bf16.mxu0 %v1683
        %2317 = vmatpush1.bf16.msra.mxu0 %v1682
        %2318 = vmatprep.subr.bf16.mxu0 %v1688
        %2319 = vmatpush1.bf16.msra.mxu0 %v1687
        %2320 = vmatprep.subr.bf16.mxu0 %v1693
        %2321 = vmatpush1.bf16.msra.mxu0 %v1692
        %2322 = vmatprep.subr.bf16.mxu0 %v1698
        %2323 = vmatpush1.bf16.msra.mxu0 %v1697
        %2324 = vmatprep.subr.bf16.mxu0 %v1703
        %2325 = vmatpush1.bf16.msra.mxu0 %v1702
        %2326 = vmatprep.subr.bf16.mxu0 %v1708
        %2327 = vmatpush1.bf16.msra.mxu0 %v1707
        %2328 = vmatprep.mubr.bf16.mxu0 %v834
        %2329 = vmatmul.mubr.bf16.gmra.mrb[0].mxu0 %v833
        %v2330 = vpop.f32.mrb[0].mxu0
        %v2331 = vadd.f32 %v797, %v2330
        %v2332 = vpop.f32.mrb[0].mxu0
        %v2333 = vadd.f32 %v801, %v2332
        %v2334 = vpop.f32.mrb[0].mxu0
        %v2335 = vadd.f32 %v797, %v2334
        %v2336 = vpop.f32.mrb[0].mxu0
        %v2337 = vadd.f32 %v801, %v2336
        %2338 = vdwg.mxu0
        %2339 = vmatprep.subr.bf16.mxu0 %v1713
        %2340 = vmatpush1.bf16.msra.mxu0 %v1712
        %2341 = vmatprep.subr.bf16.mxu0 %v1718
        %2342 = vmatpush1.bf16.msra.mxu0 %v1717
        %2343 = vmatprep.subr.bf16.mxu0 %v1723
        %2344 = vmatpush1.bf16.msra.mxu0 %v1722
        %2345 = vmatprep.subr.bf16.mxu0 %v1728
        %2346 = vmatpush1.bf16.msra.mxu0 %v1727
        %2347 = vmatprep.subr.bf16.mxu0 %v1733
        %2348 = vmatpush1.bf16.msra.mxu0 %v1732
        %2349 = vmatprep.subr.bf16.mxu0 %v1738
        %2350 = vmatpush1.bf16.msra.mxu0 %v1737
        %2351 = vmatprep.subr.bf16.mxu0 %v1743
        %2352 = vmatpush1.bf16.msra.mxu0 %v1742
        %2353 = vmatprep.subr.bf16.mxu0 %v1748
        %2354 = vmatpush1.bf16.msra.mxu0 %v1747
        %2355 = vmatprep.subr.bf16.mxu0 %v1753
        %2356 = vmatpush1.bf16.msra.mxu0 %v1752
        %2357 = vmatprep.subr.bf16.mxu0 %v1758
        %2358 = vmatpush1.bf16.msra.mxu0 %v1757
        %2359 = vmatprep.subr.bf16.mxu0 %v1763
        %2360 = vmatpush1.bf16.msra.mxu0 %v1762
        %2361 = vmatprep.subr.bf16.mxu0 %v1768
        %2362 = vmatpush1.bf16.msra.mxu0 %v1767
        %2363 = vmatprep.subr.bf16.mxu0 %v1773
        %2364 = vmatpush1.bf16.msra.mxu0 %v1772
        %2365 = vmatprep.subr.bf16.mxu0 %v1778
        %2366 = vmatpush1.bf16.msra.mxu0 %v1777
        %2367 = vmatprep.subr.bf16.mxu0 %v1783
        %2368 = vmatpush1.bf16.msra.mxu0 %v1782
        %2369 = vmatprep.subr.bf16.mxu0 %v1788
        %2370 = vmatpush1.bf16.msra.mxu0 %v1787
        %2371 = vmatprep.mubr.bf16.mxu0 %v836
        %2372 = vmatmul.mubr.bf16.gmra.mrb[0].mxu0 %v835
        %v2373 = vpop.f32.mrb[0].mxu0
        %v2374 = vadd.f32 %v2331, %v2373
        %v2375 = vpop.f32.mrb[0].mxu0
        %v2376 = vadd.f32 %v2333, %v2375
        %v2377 = vpop.f32.mrb[0].mxu0
        %v2378 = vadd.f32 %v2335, %v2377
        %v2379 = vpop.f32.mrb[0].mxu0
        %v2380 = vadd.f32 %v2337, %v2379
        %2381 = vdwg.mxu0
        %2382 = vmatprep.subr.bf16.mxu0 %v1793
        %2383 = vmatpush1.bf16.msra.mxu0 %v1792
        %2384 = vmatprep.subr.bf16.mxu0 %v1798
        %2385 = vmatpush1.bf16.msra.mxu0 %v1797
        %2386 = vmatprep.subr.bf16.mxu0 %v1803
        %2387 = vmatpush1.bf16.msra.mxu0 %v1802
        %2388 = vmatprep.subr.bf16.mxu0 %v1808
        %2389 = vmatpush1.bf16.msra.mxu0 %v1807
        %2390 = vmatprep.subr.bf16.mxu0 %v1813
        %2391 = vmatpush1.bf16.msra.mxu0 %v1812
        %2392 = vmatprep.subr.bf16.mxu0 %v1818
        %2393 = vmatpush1.bf16.msra.mxu0 %v1817
        %2394 = vmatprep.subr.bf16.mxu0 %v1823
        %2395 = vmatpush1.bf16.msra.mxu0 %v1822
        %2396 = vmatprep.subr.bf16.mxu0 %v1828
        %2397 = vmatpush1.bf16.msra.mxu0 %v1827
        %2398 = vmatprep.subr.bf16.mxu0 %v1833
        %2399 = vmatpush1.bf16.msra.mxu0 %v1832
        %2400 = vmatprep.subr.bf16.mxu0 %v1838
        %2401 = vmatpush1.bf16.msra.mxu0 %v1837
        %2402 = vmatprep.subr.bf16.mxu0 %v1843
        %2403 = vmatpush1.bf16.msra.mxu0 %v1842
        %2404 = vmatprep.subr.bf16.mxu0 %v1848
        %2405 = vmatpush1.bf16.msra.mxu0 %v1847
        %2406 = vmatprep.subr.bf16.mxu0 %v1853
        %2407 = vmatpush1.bf16.msra.mxu0 %v1852
        %2408 = vmatprep.subr.bf16.mxu0 %v1858
        %2409 = vmatpush1.bf16.msra.mxu0 %v1857
        %2410 = vmatprep.subr.bf16.mxu0 %v1863
        %2411 = vmatpush1.bf16.msra.mxu0 %v1862
        %2412 = vmatprep.subr.bf16.mxu0 %v1868
        %2413 = vmatpush1.bf16.msra.mxu0 %v1867
        %2414 = vmatprep.mubr.bf16.mxu0 %v838
        %2415 = vmatmul.mubr.bf16.gmra.mrb[0].mxu0 %v837
        %v2416 = vpop.f32.mrb[0].mxu0
        %v2417 = vadd.f32 %v2374, %v2416
        %v2418 = vpop.f32.mrb[0].mxu0
        %v2419 = vadd.f32 %v2376, %v2418
        %v2420 = vpop.f32.mrb[0].mxu0
        %v2421 = vadd.f32 %v2378, %v2420
        %v2422 = vpop.f32.mrb[0].mxu0
        %v2423 = vadd.f32 %v2380, %v2422
        %2424 = vdwg.mxu0
        %2425 = vmatprep.subr.bf16.mxu0 %v1873
        %2426 = vmatpush1.bf16.msra.mxu0 %v1872
        %2427 = vmatprep.subr.bf16.mxu0 0
        %2428 = vmatpush1.bf16.msra.mxu0 0
        %2429 = vmatprep.subr.bf16.mxu0 0
        %2430 = vmatpush1.bf16.msra.mxu0 0
        %2431 = vmatprep.subr.bf16.mxu0 0
        %2432 = vmatpush1.bf16.msra.mxu0 0
        %2433 = vmatprep.subr.bf16.mxu0 0
        %2434 = vmatpush1.bf16.msra.mxu0 0
        %2435 = vmatprep.subr.bf16.mxu0 0
        %2436 = vmatpush1.bf16.msra.mxu0 0
        %2437 = vmatprep.subr.bf16.mxu0 0
        %2438 = vmatpush1.bf16.msra.mxu0 0
        %2439 = vmatprep.subr.bf16.mxu0 0
        %2440 = vmatpush1.bf16.msra.mxu0 0
        %2441 = vmatprep.subr.bf16.mxu0 0
        %2442 = vmatpush1.bf16.msra.mxu0 0
        %2443 = vmatprep.subr.bf16.mxu0 0
        %2444 = vmatpush1.bf16.msra.mxu0 0
        %2445 = vmatprep.subr.bf16.mxu0 0
        %2446 = vmatpush1.bf16.msra.mxu0 0
        %2447 = vmatprep.subr.bf16.mxu0 0
        %2448 = vmatpush1.bf16.msra.mxu0 0
        %2449 = vmatprep.subr.bf16.mxu0 0
        %2450 = vmatpush1.bf16.msra.mxu0 0
        %2451 = vmatprep.subr.bf16.mxu0 0
        %2452 = vmatpush1.bf16.msra.mxu0 0
        %2453 = vmatprep.subr.bf16.mxu0 0
        %2454 = vmatpush1.bf16.msra.mxu0 0
        %2455 = vmatprep.subr.bf16.mxu0 0
        %2456 = vmatpush1.bf16.msra.mxu0 0
        %2457 = vmatprep.mubr.bf16.mxu0 0
        %2458 = vmatmul.mubr.bf16.gmra.mrb[0].mxu0 %v2122
        %v2459 = vpop.f32.mrb[0].mxu0
        %v2460 = vadd.f32 %v2417, %v2459
        %v2461 = vpop.f32.mrb[0].mxu0
        %v2462 = vadd.f32 %v2419, %v2461
        %v2463 = vpop.f32.mrb[0].mxu0
        %v2464 = vadd.f32 %v2421, %v2463
        %v2465 = vpop.f32.mrb[0].mxu0
        %v2466 = vadd.f32 %v2423, %v2465
        %2467 = vdwg.mxu0
        %2468 = vmatprep.subr.bf16.mxu0 0
        %2469 = vmatpush1.bf16.msra.mxu0 %v1634
        %2470 = vmatprep.subr.bf16.mxu0 0
        %2471 = vmatpush1.bf16.msra.mxu0 %v1639
        %2472 = vmatprep.subr.bf16.mxu0 0
        %2473 = vmatpush1.bf16.msra.mxu0 %v1644
        %2474 = vmatprep.subr.bf16.mxu0 0
        %2475 = vmatpush1.bf16.msra.mxu0 %v1649
        %2476 = vmatprep.subr.bf16.mxu0 0
        %2477 = vmatpush1.bf16.msra.mxu0 %v1654
        %2478 = vmatprep.subr.bf16.mxu0 0
        %2479 = vmatpush1.bf16.msra.mxu0 %v1659
        %2480 = vmatprep.subr.bf16.mxu0 0
        %2481 = vmatpush1.bf16.msra.mxu0 %v1664
        %2482 = vmatprep.subr.bf16.mxu0 0
        %2483 = vmatpush1.bf16.msra.mxu0 %v1669
        %2484 = vmatprep.subr.bf16.mxu0 0
        %2485 = vmatpush1.bf16.msra.mxu0 %v1674
        %2486 = vmatprep.subr.bf16.mxu0 0
        %2487 = vmatpush1.bf16.msra.mxu0 %v1679
        %2488 = vmatprep.subr.bf16.mxu0 0
        %2489 = vmatpush1.bf16.msra.mxu0 %v1684
        %2490 = vmatprep.subr.bf16.mxu0 0
        %2491 = vmatpush1.bf16.msra.mxu0 %v1689
        %2492 = vmatprep.subr.bf16.mxu0 0
        %2493 = vmatpush1.bf16.msra.mxu0 %v1694
        %2494 = vmatprep.subr.bf16.mxu0 0
        %2495 = vmatpush1.bf16.msra.mxu0 %v1699
        %2496 = vmatprep.subr.bf16.mxu0 0
        %2497 = vmatpush1.bf16.msra.mxu0 %v1704
        %2498 = vmatprep.subr.bf16.mxu0 0
        %2499 = vmatpush1.bf16.msra.mxu0 %v1709
        %2500 = vmatprep.mubr.bf16.mxu0 %v834
        %2501 = vmatmul.mubr.bf16.gmra.mrb[0].mxu0 %v833
        %v2502 = vpop.f32.mrb[0].mxu0
        %v2503 = vadd.f32 %v805, %v2502
        %v2504 = vpop.f32.mrb[0].mxu0
        %v2505 = vpop.f32.mrb[0].mxu0
        %v2506 = vadd.f32 %v805, %v2505
        %v2507 = vpop.f32.mrb[0].mxu0
        %2508 = vdwg.mxu0
        %2509 = vmatprep.subr.bf16.mxu0 0
        %2510 = vmatpush1.bf16.msra.mxu0 %v1714
        %2511 = vmatprep.subr.bf16.mxu0 0
        %2512 = vmatpush1.bf16.msra.mxu0 %v1719
        %2513 = vmatprep.subr.bf16.mxu0 0
        %2514 = vmatpush1.bf16.msra.mxu0 %v1724
        %2515 = vmatprep.subr.bf16.mxu0 0
        %2516 = vmatpush1.bf16.msra.mxu0 %v1729
        %2517 = vmatprep.subr.bf16.mxu0 0
        %2518 = vmatpush1.bf16.msra.mxu0 %v1734
        %2519 = vmatprep.subr.bf16.mxu0 0
        %2520 = vmatpush1.bf16.msra.mxu0 %v1739
        %2521 = vmatprep.subr.bf16.mxu0 0
        %2522 = vmatpush1.bf16.msra.mxu0 %v1744
        %2523 = vmatprep.subr.bf16.mxu0 0
        %2524 = vmatpush1.bf16.msra.mxu0 %v1749
        %2525 = vmatprep.subr.bf16.mxu0 0
        %2526 = vmatpush1.bf16.msra.mxu0 %v1754
        %2527 = vmatprep.subr.bf16.mxu0 0
        %2528 = vmatpush1.bf16.msra.mxu0 %v1759
        %2529 = vmatprep.subr.bf16.mxu0 0
        %2530 = vmatpush1.bf16.msra.mxu0 %v1764
        %2531 = vmatprep.subr.bf16.mxu0 0
        %2532 = vmatpush1.bf16.msra.mxu0 %v1769
        %2533 = vmatprep.subr.bf16.mxu0 0
        %2534 = vmatpush1.bf16.msra.mxu0 %v1774
        %2535 = vmatprep.subr.bf16.mxu0 0
        %2536 = vmatpush1.bf16.msra.mxu0 %v1779
        %2537 = vmatprep.subr.bf16.mxu0 0
        %2538 = vmatpush1.bf16.msra.mxu0 %v1784
        %2539 = vmatprep.subr.bf16.mxu0 0
        %2540 = vmatpush1.bf16.msra.mxu0 %v1789
        %2541 = vmatprep.mubr.bf16.mxu0 %v836
        %2542 = vmatmul.mubr.bf16.gmra.mrb[0].mxu0 %v835
        %v2543 = vpop.f32.mrb[0].mxu0
        %v2544 = vadd.f32 %v2503, %v2543
        %v2545 = vpop.f32.mrb[0].mxu0
        %v2546 = vpop.f32.mrb[0].mxu0
        %v2547 = vadd.f32 %v2506, %v2546
        %v2548 = vpop.f32.mrb[0].mxu0
        %2549 = vdwg.mxu0
        %2550 = vmatprep.subr.bf16.mxu0 0
        %2551 = vmatpush1.bf16.msra.mxu0 %v1794
        %2552 = vmatprep.subr.bf16.mxu0 0
        %2553 = vmatpush1.bf16.msra.mxu0 %v1799
        %2554 = vmatprep.subr.bf16.mxu0 0
        %2555 = vmatpush1.bf16.msra.mxu0 %v1804
        %2556 = vmatprep.subr.bf16.mxu0 0
        %2557 = vmatpush1.bf16.msra.mxu0 %v1809
        %2558 = vmatprep.subr.bf16.mxu0 0
        %2559 = vmatpush1.bf16.msra.mxu0 %v1814
        %2560 = vmatprep.subr.bf16.mxu0 0
        %2561 = vmatpush1.bf16.msra.mxu0 %v1819
        %2562 = vmatprep.subr.bf16.mxu0 0
        %2563 = vmatpush1.bf16.msra.mxu0 %v1824
        %2564 = vmatprep.subr.bf16.mxu0 0
        %2565 = vmatpush1.bf16.msra.mxu0 %v1829
        %2566 = vmatprep.subr.bf16.mxu0 0
        %2567 = vmatpush1.bf16.msra.mxu0 %v1834
        %2568 = vmatprep.subr.bf16.mxu0 0
        %2569 = vmatpush1.bf16.msra.mxu0 %v1839
        %2570 = vmatprep.subr.bf16.mxu0 0
        %2571 = vmatpush1.bf16.msra.mxu0 %v1844
        %2572 = vmatprep.subr.bf16.mxu0 0
        %2573 = vmatpush1.bf16.msra.mxu0 %v1849
        %2574 = vmatprep.subr.bf16.mxu0 0
        %2575 = vmatpush1.bf16.msra.mxu0 %v1854
        %2576 = vmatprep.subr.bf16.mxu0 0
        %2577 = vmatpush1.bf16.msra.mxu0 %v1859
        %2578 = vmatprep.subr.bf16.mxu0 0
        %2579 = vmatpush1.bf16.msra.mxu0 %v1864
        %2580 = vmatprep.subr.bf16.mxu0 0
        %2581 = vmatpush1.bf16.msra.mxu0 %v1869
        %2582 = vmatprep.mubr.bf16.mxu0 %v838
        %2583 = vmatmul.mubr.bf16.gmra.mrb[0].mxu0 %v837
        %v2584 = vpop.f32.mrb[0].mxu0
        %v2585 = vadd.f32 %v2544, %v2584
        %v2586 = vpop.f32.mrb[0].mxu0
        %v2587 = vpop.f32.mrb[0].mxu0
        %v2588 = vadd.f32 %v2547, %v2587
        %v2589 = vpop.f32.mrb[0].mxu0
        %2590 = vdwg.mxu0
        %2591 = vmatprep.subr.bf16.mxu0 0
        %2592 = vmatpush1.bf16.msra.mxu0 %v1874
        %2593 = vmatprep.subr.bf16.mxu0 0
        %2594 = vmatpush1.bf16.msra.mxu0 0
        %2595 = vmatprep.subr.bf16.mxu0 0
        %2596 = vmatpush1.bf16.msra.mxu0 0
        %2597 = vmatprep.subr.bf16.mxu0 0
        %2598 = vmatpush1.bf16.msra.mxu0 0
        %2599 = vmatprep.subr.bf16.mxu0 0
        %2600 = vmatpush1.bf16.msra.mxu0 0
        %2601 = vmatprep.subr.bf16.mxu0 0
        %2602 = vmatpush1.bf16.msra.mxu0 0
        %2603 = vmatprep.subr.bf16.mxu0 0
        %2604 = vmatpush1.bf16.msra.mxu0 0
        %2605 = vmatprep.subr.bf16.mxu0 0
        %2606 = vmatpush1.bf16.msra.mxu0 0
        %2607 = vmatprep.subr.bf16.mxu0 0
        %2608 = vmatpush1.bf16.msra.mxu0 0
        %2609 = vmatprep.subr.bf16.mxu0 0
        %2610 = vmatpush1.bf16.msra.mxu0 0
        %2611 = vmatprep.subr.bf16.mxu0 0
        %2612 = vmatpush1.bf16.msra.mxu0 0
        %2613 = vmatprep.subr.bf16.mxu0 0
        %2614 = vmatpush1.bf16.msra.mxu0 0
        %2615 = vmatprep.subr.bf16.mxu0 0
        %2616 = vmatpush1.bf16.msra.mxu0 0
        %2617 = vmatprep.subr.bf16.mxu0 0
        %2618 = vmatpush1.bf16.msra.mxu0 0
        %2619 = vmatprep.subr.bf16.mxu0 0
        %2620 = vmatpush1.bf16.msra.mxu0 0
        %2621 = vmatprep.subr.bf16.mxu0 0
        %2622 = vmatpush1.bf16.msra.mxu0 0
        %2623 = vmatprep.mubr.bf16.mxu0 0
        %2624 = vmatmul.mubr.bf16.gmra.mrb[0].mxu0 %v2122
        %v2625 = vpop.f32.mrb[0].mxu0
        %v2626 = vadd.f32 %v2585, %v2625
        %v2627 = vpop.f32.mrb[0].mxu0
        %v2628 = vpop.f32.mrb[0].mxu0
        %v2629 = vadd.f32 %v2588, %v2628
        %v2630 = vpop.f32.mrb[0].mxu0
        %2631 = vdwg.mxu0
        %v2632 = vmax.f32 %v2288, 0.0
        %v2633 = vmax.f32 %v2290, 0.0
        %v2634 = vmax.f32 %v2460, 0.0
        %v2635 = vmax.f32 %v2462, 0.0
        %v2636 = vmax.f32 %v2626, 0.0
        %v2637 = vmax.f32 %v2292, 0.0
        %v2638 = vmax.f32 %v2294, 0.0
        %v2639 = vmax.f32 %v2464, 0.0
        %v2640 = vmax.f32 %v2466, 0.0
        %v2641 = vmax.f32 %v2629, 0.0
        %v2642 = vpack.c.bf16 %v2637, %v2632
        %v2643 = vpack.c.bf16 %v2638, %v2633
        %v2644 = vpack.c.bf16 %v2639, %v2634
        %v2645 = vpack.c.bf16 %v2640, %v2635
        %v2646 = vpack.c.bf16 %v2641, %v2636
        %v2647 = vld [vmem:[#allocation7] sm:$0xff]
        %v2648 = vld [vmem:[#allocation7 + $0x8] sm:$0xf]
        %v2649 = vld [vmem:[#allocation7 + $0xc] sm:$0xff]
        %v2650 = vld [vmem:[#allocation7 + $0x14] sm:$0xf]
        %v2651 = vld [vmem:[#allocation7 + $0x18] sm:$0xff]
        %v2652 = vld [vmem:[#allocation7 + $0x20] sm:$0xf]
        %v2653 = vld [vmem:[#allocation7 + $0x24] sm:$0xff]
        %v2654 = vld [vmem:[#allocation7 + $0x2c] sm:$0xf]
        %v2655 = vld [vmem:[#allocation7 + $0x30] sm:$0xff]
        %v2656 = vld [vmem:[#allocation7 + $0x38] sm:$0xf]
        %v2657 = vld [vmem:[#allocation7 + $0x3c] sm:$0xff]
        %v2658 = vld [vmem:[#allocation7 + $0x44] sm:$0xf]
        %v2659 = vld [vmem:[#allocation7 + $0x48] sm:$0xff]
        %v2660 = vld [vmem:[#allocation7 + $0x50] sm:$0xf]
        %v2661 = vld [vmem:[#allocation7 + $0x54] sm:$0xff]
        %v2662 = vld [vmem:[#allocation7 + $0x5c] sm:$0xf]
        %v2663 = vld [vmem:[#allocation7 + $0x60] sm:$0xff]
        %v2664 = vld [vmem:[#allocation7 + $0x68] sm:$0xf]
        %v2665 = vld [vmem:[#allocation7 + $0x6c] sm:$0xff]
        %v2666 = vld [vmem:[#allocation7 + $0x74] sm:$0xf]
        %v2667 = vld [vmem:[#allocation7 + $0x78] sm:$0xff]
        %v2668 = vld [vmem:[#allocation7 + $0x80] sm:$0xf]
        %v2669 = vld [vmem:[#allocation7 + $0x84] sm:$0xff]
        %v2670 = vld [vmem:[#allocation7 + $0x8c] sm:$0xf]
        %v2671 = vld [vmem:[#allocation7 + $0x90] sm:$0xff]
        %v2672 = vld [vmem:[#allocation7 + $0x98] sm:$0xf]
        %v2673 = vld [vmem:[#allocation7 + $0x9c] sm:$0xff]
        %v2674 = vld [vmem:[#allocation7 + $0xa4] sm:$0xf]
        %v2675 = vld [vmem:[#allocation7 + $0xa8] sm:$0xff]
        %v2676 = vld [vmem:[#allocation7 + $0xb0] sm:$0xf]
        %v2677 = vld [vmem:[#allocation7 + $0xb4] sm:$0xff]
        %v2678 = vld [vmem:[#allocation7 + $0xbc] sm:$0xf]
        %v2679 = vld [vmem:[#allocation7 + $0xc0] sm:$0xff]
        %v2680 = vld [vmem:[#allocation7 + $0xc8] sm:$0xf]
        %v2681 = vld [vmem:[#allocation7 + $0xcc] sm:$0xff]
        %v2682 = vld [vmem:[#allocation7 + $0xd4] sm:$0xf]
        %v2683 = vld [vmem:[#allocation7 + $0xd8] sm:$0xff]
        %v2684 = vld [vmem:[#allocation7 + $0xe0] sm:$0xf]
        %v2685 = vld [vmem:[#allocation7 + $0xe4] sm:$0xff]
        %v2686 = vld [vmem:[#allocation7 + $0xec] sm:$0xf]
        %v2687 = vld [vmem:[#allocation7 + $0xf0] sm:$0xff]
        %v2688 = vld [vmem:[#allocation7 + $0xf8] sm:$0xf]
        %v2689 = vld [vmem:[#allocation7 + $0xfc] sm:$0xff]
        %v2690 = vld [vmem:[#allocation7 + $0x104] sm:$0xf]
        %v2691 = vld [vmem:[#allocation7 + $0x108] sm:$0xff]
        %v2692 = vld [vmem:[#allocation7 + $0x110] sm:$0xf]
        %v2693 = vld [vmem:[#allocation7 + $0x114] sm:$0xff]
        %v2694 = vld [vmem:[#allocation7 + $0x11c] sm:$0xf]
        %v2695 = vld [vmem:[#allocation7 + $0x120] sm:$0xff]
        %v2696 = vld [vmem:[#allocation7 + $0x128] sm:$0xf]
        %v2697 = vld [vmem:[#allocation7 + $0x12c] sm:$0xff]
        %v2698 = vld [vmem:[#allocation7 + $0x134] sm:$0xf]
        %v2699 = vld [vmem:[#allocation7 + $0x138] sm:$0xff]
        %v2700 = vld [vmem:[#allocation7 + $0x140] sm:$0xf]
        %v2701 = vld [vmem:[#allocation7 + $0x144] sm:$0xff]
        %v2702 = vld [vmem:[#allocation7 + $0x14c] sm:$0xf]
        %v2703 = vld [vmem:[#allocation7 + $0x150] sm:$0xff]
        %v2704 = vld [vmem:[#allocation7 + $0x158] sm:$0xf]
        %v2705 = vld [vmem:[#allocation7 + $0x15c] sm:$0xff]
        %v2706 = vld [vmem:[#allocation7 + $0x164] sm:$0xf]
        %v2707 = vld [vmem:[#allocation7 + $0x168] sm:$0xff]
        %v2708 = vld [vmem:[#allocation7 + $0x170] sm:$0xf]
        %v2709 = vld [vmem:[#allocation7 + $0x174] sm:$0xff]
        %v2710 = vld [vmem:[#allocation7 + $0x17c] sm:$0xf]
        %v2711 = vld [vmem:[#allocation7 + $0x180] sm:$0xff]
        %v2712 = vld [vmem:[#allocation7 + $0x188] sm:$0xf]
        %v2713 = vld [vmem:[#allocation7 + $0x18c] sm:$0xff]
        %v2714 = vld [vmem:[#allocation7 + $0x194] sm:$0xf]
        %v2715 = vld [vmem:[#allocation7 + $0x198] sm:$0xff]
        %v2716 = vld [vmem:[#allocation7 + $0x1a0] sm:$0xf]
        %v2717 = vld [vmem:[#allocation7 + $0x1a4] sm:$0xff]
        %v2718 = vld [vmem:[#allocation7 + $0x1ac] sm:$0xf]
        %v2719 = vld [vmem:[#allocation7 + $0x1b0] sm:$0xff]
        %v2720 = vld [vmem:[#allocation7 + $0x1b8] sm:$0xf]
        %v2721 = vld [vmem:[#allocation7 + $0x1bc] sm:$0xff]
        %v2722 = vld [vmem:[#allocation7 + $0x1c4] sm:$0xf]
        %v2723 = vld [vmem:[#allocation7 + $0x1c8] sm:$0xff]
        %v2724 = vld [vmem:[#allocation7 + $0x1d0] sm:$0xf]
        %v2725 = vld [vmem:[#allocation7 + $0x1d4] sm:$0xff]
        %v2726 = vld [vmem:[#allocation7 + $0x1dc] sm:$0xf]
        %v2727 = vld [vmem:[#allocation7 + $0x1e0] sm:$0xff]
        %v2728 = vld [vmem:[#allocation7 + $0x1e8] sm:$0xf]
        %v2729 = vld [vmem:[#allocation7 + $0x1ec] sm:$0xff]
        %v2730 = vld [vmem:[#allocation7 + $0x1f4] sm:$0xf]
        %v2731 = vld [vmem:[#allocation7 + $0x1f8] sm:$0xff]
        %v2732 = vld [vmem:[#allocation7 + $0x200] sm:$0xf]
        %v2733 = vld [vmem:[#allocation7 + $0x204] sm:$0xff]
        %v2734 = vld [vmem:[#allocation7 + $0x20c] sm:$0xf]
        %v2735 = vld [vmem:[#allocation7 + $0x210] sm:$0xff]
        %v2736 = vld [vmem:[#allocation7 + $0x218] sm:$0xf]
        %v2737 = vld [vmem:[#allocation7 + $0x21c] sm:$0xff]
        %v2738 = vld [vmem:[#allocation7 + $0x224] sm:$0xf]
        %v2739 = vld [vmem:[#allocation7 + $0x228] sm:$0xff]
        %v2740 = vld [vmem:[#allocation7 + $0x230] sm:$0xf]
        %v2741 = vld [vmem:[#allocation7 + $0x234] sm:$0xff]
        %v2742 = vld [vmem:[#allocation7 + $0x23c] sm:$0xf]
        %v2743 = vld [vmem:[#allocation7 + $0x240] sm:$0xff]
        %v2744 = vld [vmem:[#allocation7 + $0x248] sm:$0xf]
        %v2745 = vld [vmem:[#allocation7 + $0x24c] sm:$0xff]
        %v2746 = vld [vmem:[#allocation7 + $0x254] sm:$0xf]
        %v2747 = vld [vmem:[#allocation7 + $0x258] sm:$0xff]
        %v2748 = vld [vmem:[#allocation7 + $0x260] sm:$0xf]
        %v2749 = vld [vmem:[#allocation7 + $0x264] sm:$0xff]
        %v2750 = vld [vmem:[#allocation7 + $0x26c] sm:$0xf]
        %v2751 = vld [vmem:[#allocation7 + $0x270] sm:$0xff]
        %v2752 = vld [vmem:[#allocation7 + $0x278] sm:$0xf]
        %v2753 = vld [vmem:[#allocation7 + $0x27c] sm:$0xff]
        %v2754 = vld [vmem:[#allocation7 + $0x284] sm:$0xf]
        %v2755 = vld [vmem:[#allocation7 + $0x288] sm:$0xff]
        %v2756 = vld [vmem:[#allocation7 + $0x290] sm:$0xf]
        %v2757 = vld [vmem:[#allocation7 + $0x294] sm:$0xff]
        %v2758 = vld [vmem:[#allocation7 + $0x29c] sm:$0xf]
        %v2759 = vld [vmem:[#allocation7 + $0x2a0] sm:$0xff]
        %v2760 = vld [vmem:[#allocation7 + $0x2a8] sm:$0xf]
        %v2761 = vld [vmem:[#allocation7 + $0x2ac] sm:$0xff]
        %v2762 = vld [vmem:[#allocation7 + $0x2b4] sm:$0xf]
        %v2763 = vld [vmem:[#allocation7 + $0x2b8] sm:$0xff]
        %v2764 = vld [vmem:[#allocation7 + $0x2c0] sm:$0xf]
        %v2765 = vld [vmem:[#allocation7 + $0x2c4] sm:$0xff]
        %v2766 = vld [vmem:[#allocation7 + $0x2cc] sm:$0xf]
        %v2767 = vld [vmem:[#allocation7 + $0x2d0] sm:$0xff]
        %v2768 = vld [vmem:[#allocation7 + $0x2d8] sm:$0xf]
        %v2769 = vld [vmem:[#allocation7 + $0x2dc] sm:$0xff]
        %v2770 = vld [vmem:[#allocation7 + $0x2e4] sm:$0xf]
        %v2771 = vld [vmem:[#allocation7 + $0x2e8] sm:$0xff]
        %v2772 = vld [vmem:[#allocation7 + $0x2f0] sm:$0xf]
        %v2773 = vld [vmem:[#allocation7 + $0x2f4] sm:$0xff]
        %v2774 = vld [vmem:[#allocation7 + $0x2fc] sm:$0xf]
        %v2775 = vld [vmem:[#allocation7 + $0x300] sm:$0xff]
        %v2776 = vld [vmem:[#allocation7 + $0x308] sm:$0xf]
        %v2777 = vld [vmem:[#allocation7 + $0x30c] sm:$0xff]
        %v2778 = vld [vmem:[#allocation7 + $0x314] sm:$0xf]
        %v2779 = vld [vmem:[#allocation7 + $0x318] sm:$0xff]
        %v2780 = vld [vmem:[#allocation7 + $0x320] sm:$0xf]
        %v2781 = vld [vmem:[#allocation7 + $0x324] sm:$0xff]
        %v2782 = vld [vmem:[#allocation7 + $0x32c] sm:$0xf]
        %v2783 = vld [vmem:[#allocation7 + $0x330] sm:$0xff]
        %v2784 = vld [vmem:[#allocation7 + $0x338] sm:$0xf]
        %v2785 = vld [vmem:[#allocation7 + $0x33c] sm:$0xff]
        %v2786 = vld [vmem:[#allocation7 + $0x344] sm:$0xf]
        %v2787 = vld [vmem:[#allocation7 + $0x348] sm:$0xff]
        %v2788 = vld [vmem:[#allocation7 + $0x350] sm:$0xf]
        %v2789 = vld [vmem:[#allocation7 + $0x354] sm:$0xff]
        %v2790 = vld [vmem:[#allocation7 + $0x35c] sm:$0xf]
        %v2791 = vld [vmem:[#allocation7 + $0x360] sm:$0xff]
        %v2792 = vld [vmem:[#allocation7 + $0x368] sm:$0xf]
        %v2793 = vld [vmem:[#allocation7 + $0x36c] sm:$0xff]
        %v2794 = vld [vmem:[#allocation7 + $0x374] sm:$0xf]
        %v2795 = vld [vmem:[#allocation7 + $0x378] sm:$0xff]
        %v2796 = vld [vmem:[#allocation7 + $0x380] sm:$0xf]
        %v2797 = vld [vmem:[#allocation7 + $0x384] sm:$0xff]
        %v2798 = vld [vmem:[#allocation7 + $0x38c] sm:$0xf]
        %v2799 = vld [vmem:[#allocation7 + $0x390] sm:$0xff]
        %v2800 = vld [vmem:[#allocation7 + $0x398] sm:$0xf]
        %v2801 = vld [vmem:[#allocation7 + $0x39c] sm:$0xff]
        %v2802 = vld [vmem:[#allocation7 + $0x3a4] sm:$0xf]
        %v2803 = vld [vmem:[#allocation7 + $0x3a8] sm:$0xff]
        %v2804 = vld [vmem:[#allocation7 + $0x3b0] sm:$0xf]
        %v2805 = vld [vmem:[#allocation7 + $0x3b4] sm:$0xff]
        %v2806 = vld [vmem:[#allocation7 + $0x3bc] sm:$0xf]
        %v2807 = vld [vmem:[%s4] sm:$0x7]
        %v2809 = vlaneseq
        %v2810 = vshrl.u32 %v2809, 7
        %v2811 = vsub.s32 0, %v2810
        %v2812 = vrot.slane %v2807, %v2811
        %v2813 = vlaneseq
        %v2814 = vshrl.u32 %v2813, 7
        %v2815 = vsub.s32 1, %v2814
        %v2816 = vrot.slane %v2807, %v2815
        %v2817 = vlaneseq
        %v2818 = vshrl.u32 %v2817, 7
        %v2819 = vsub.s32 2, %v2818
        %v2820 = vrot.slane %v2807, %v2819
        %v2984 = vunpack.c.l.b16 %v2647
        %v2985 = vunpack.c.h.b16 %v2647
        %v2986 = vunpack.c.l.b16 %v2648
        %v2987 = vunpack.c.l.b16 %v2649
        %v2988 = vunpack.c.h.b16 %v2649
        %v2989 = vunpack.c.l.b16 %v2650
        %v2990 = vunpack.c.l.b16 %v2651
        %v2991 = vunpack.c.h.b16 %v2651
        %v2992 = vunpack.c.l.b16 %v2652
        %v2993 = vunpack.c.l.b16 %v2653
        %v2994 = vunpack.c.h.b16 %v2653
        %v2995 = vunpack.c.l.b16 %v2654
        %v2996 = vunpack.c.l.b16 %v2655
        %v2997 = vunpack.c.h.b16 %v2655
        %v2998 = vunpack.c.l.b16 %v2656
        %v2999 = vunpack.c.l.b16 %v2657
        %v3000 = vunpack.c.h.b16 %v2657
        %v3001 = vunpack.c.l.b16 %v2658
        %v3002 = vunpack.c.l.b16 %v2659
        %v3003 = vunpack.c.h.b16 %v2659
        %v3004 = vunpack.c.l.b16 %v2660
        %v3005 = vunpack.c.l.b16 %v2661
        %v3006 = vunpack.c.h.b16 %v2661
        %v3007 = vunpack.c.l.b16 %v2662
        %v3008 = vunpack.c.l.b16 %v2663
        %v3009 = vunpack.c.h.b16 %v2663
        %v3010 = vunpack.c.l.b16 %v2664
        %v3011 = vunpack.c.l.b16 %v2665
        %v3012 = vunpack.c.h.b16 %v2665
        %v3013 = vunpack.c.l.b16 %v2666
        %v3014 = vunpack.c.l.b16 %v2667
        %v3015 = vunpack.c.h.b16 %v2667
        %v3016 = vunpack.c.l.b16 %v2668
        %v3017 = vunpack.c.l.b16 %v2669
        %v3018 = vunpack.c.h.b16 %v2669
        %v3019 = vunpack.c.l.b16 %v2670
        %v3020 = vunpack.c.l.b16 %v2671
        %v3021 = vunpack.c.h.b16 %v2671
        %v3022 = vunpack.c.l.b16 %v2672
        %v3023 = vunpack.c.l.b16 %v2673
        %v3024 = vunpack.c.h.b16 %v2673
        %v3025 = vunpack.c.l.b16 %v2674
        %v3026 = vunpack.c.l.b16 %v2675
        %v3027 = vunpack.c.h.b16 %v2675
        %v3028 = vunpack.c.l.b16 %v2676
        %v3029 = vunpack.c.l.b16 %v2677
        %v3030 = vunpack.c.h.b16 %v2677
        %v3031 = vunpack.c.l.b16 %v2678
        %v3032 = vunpack.c.l.b16 %v2679
        %v3033 = vunpack.c.h.b16 %v2679
        %v3034 = vunpack.c.l.b16 %v2680
        %v3035 = vunpack.c.l.b16 %v2681
        %v3036 = vunpack.c.h.b16 %v2681
        %v3037 = vunpack.c.l.b16 %v2682
        %v3038 = vunpack.c.l.b16 %v2683
        %v3039 = vunpack.c.h.b16 %v2683
        %v3040 = vunpack.c.l.b16 %v2684
        %v3041 = vunpack.c.l.b16 %v2685
        %v3042 = vunpack.c.h.b16 %v2685
        %v3043 = vunpack.c.l.b16 %v2686
        %v3044 = vunpack.c.l.b16 %v2687
        %v3045 = vunpack.c.h.b16 %v2687
        %v3046 = vunpack.c.l.b16 %v2688
        %v3047 = vunpack.c.l.b16 %v2689
        %v3048 = vunpack.c.h.b16 %v2689
        %v3049 = vunpack.c.l.b16 %v2690
        %v3050 = vunpack.c.l.b16 %v2691
        %v3051 = vunpack.c.h.b16 %v2691
        %v3052 = vunpack.c.l.b16 %v2692
        %v3053 = vunpack.c.l.b16 %v2693
        %v3054 = vunpack.c.h.b16 %v2693
        %v3055 = vunpack.c.l.b16 %v2694
        %v3056 = vunpack.c.l.b16 %v2695
        %v3057 = vunpack.c.h.b16 %v2695
        %v3058 = vunpack.c.l.b16 %v2696
        %v3059 = vunpack.c.l.b16 %v2697
        %v3060 = vunpack.c.h.b16 %v2697
        %v3061 = vunpack.c.l.b16 %v2698
        %v3062 = vunpack.c.l.b16 %v2699
        %v3063 = vunpack.c.h.b16 %v2699
        %v3064 = vunpack.c.l.b16 %v2700
        %v3065 = vunpack.c.l.b16 %v2701
        %v3066 = vunpack.c.h.b16 %v2701
        %v3067 = vunpack.c.l.b16 %v2702
        %v3068 = vunpack.c.l.b16 %v2703
        %v3069 = vunpack.c.h.b16 %v2703
        %v3070 = vunpack.c.l.b16 %v2704
        %v3071 = vunpack.c.l.b16 %v2705
        %v3072 = vunpack.c.h.b16 %v2705
        %v3073 = vunpack.c.l.b16 %v2706
        %v3074 = vunpack.c.l.b16 %v2707
        %v3075 = vunpack.c.h.b16 %v2707
        %v3076 = vunpack.c.l.b16 %v2708
        %v3077 = vunpack.c.l.b16 %v2709
        %v3078 = vunpack.c.h.b16 %v2709
        %v3079 = vunpack.c.l.b16 %v2710
        %v3080 = vunpack.c.l.b16 %v2711
        %v3081 = vunpack.c.h.b16 %v2711
        %v3082 = vunpack.c.l.b16 %v2712
        %v3083 = vunpack.c.l.b16 %v2713
        %v3084 = vunpack.c.h.b16 %v2713
        %v3085 = vunpack.c.l.b16 %v2714
        %v3086 = vunpack.c.l.b16 %v2715
        %v3087 = vunpack.c.h.b16 %v2715
        %v3088 = vunpack.c.l.b16 %v2716
        %v3089 = vunpack.c.l.b16 %v2717
        %v3090 = vunpack.c.h.b16 %v2717
        %v3091 = vunpack.c.l.b16 %v2718
        %v3092 = vunpack.c.l.b16 %v2719
        %v3093 = vunpack.c.h.b16 %v2719
        %v3094 = vunpack.c.l.b16 %v2720
        %v3095 = vunpack.c.l.b16 %v2721
        %v3096 = vunpack.c.h.b16 %v2721
        %v3097 = vunpack.c.l.b16 %v2722
        %v3098 = vunpack.c.l.b16 %v2723
        %v3099 = vunpack.c.h.b16 %v2723
        %v3100 = vunpack.c.l.b16 %v2724
        %v3101 = vunpack.c.l.b16 %v2725
        %v3102 = vunpack.c.h.b16 %v2725
        %v3103 = vunpack.c.l.b16 %v2726
        %v3104 = vunpack.c.l.b16 %v2727
        %v3105 = vunpack.c.h.b16 %v2727
        %v3106 = vunpack.c.l.b16 %v2728
        %v3107 = vunpack.c.l.b16 %v2729
        %v3108 = vunpack.c.h.b16 %v2729
        %v3109 = vunpack.c.l.b16 %v2730
        %v3110 = vunpack.c.l.b16 %v2731
        %v3111 = vunpack.c.h.b16 %v2731
        %v3112 = vunpack.c.l.b16 %v2732
        %v3113 = vunpack.c.l.b16 %v2733
        %v3114 = vunpack.c.h.b16 %v2733
        %v3115 = vunpack.c.l.b16 %v2734
        %v3116 = vunpack.c.l.b16 %v2735
        %v3117 = vunpack.c.h.b16 %v2735
        %v3118 = vunpack.c.l.b16 %v2736
        %v3119 = vunpack.c.l.b16 %v2737
        %v3120 = vunpack.c.h.b16 %v2737
        %v3121 = vunpack.c.l.b16 %v2738
        %v3122 = vunpack.c.l.b16 %v2739
        %v3123 = vunpack.c.h.b16 %v2739
        %v3124 = vunpack.c.l.b16 %v2740
        %v3125 = vunpack.c.l.b16 %v2741
        %v3126 = vunpack.c.h.b16 %v2741
        %v3127 = vunpack.c.l.b16 %v2742
        %v3128 = vunpack.c.l.b16 %v2743
        %v3129 = vunpack.c.h.b16 %v2743
        %v3130 = vunpack.c.l.b16 %v2744
        %v3131 = vunpack.c.l.b16 %v2745
        %v3132 = vunpack.c.h.b16 %v2745
        %v3133 = vunpack.c.l.b16 %v2746
        %v3134 = vunpack.c.l.b16 %v2747
        %v3135 = vunpack.c.h.b16 %v2747
        %v3136 = vunpack.c.l.b16 %v2748
        %v3137 = vunpack.c.l.b16 %v2749
        %v3138 = vunpack.c.h.b16 %v2749
        %v3139 = vunpack.c.l.b16 %v2750
        %v3140 = vunpack.c.l.b16 %v2751
        %v3141 = vunpack.c.h.b16 %v2751
        %v3142 = vunpack.c.l.b16 %v2752
        %v3143 = vunpack.c.l.b16 %v2753
        %v3144 = vunpack.c.h.b16 %v2753
        %v3145 = vunpack.c.l.b16 %v2754
        %v3146 = vunpack.c.l.b16 %v2755
        %v3147 = vunpack.c.h.b16 %v2755
        %v3148 = vunpack.c.l.b16 %v2756
        %v3149 = vunpack.c.l.b16 %v2757
        %v3150 = vunpack.c.h.b16 %v2757
        %v3151 = vunpack.c.l.b16 %v2758
        %v3152 = vunpack.c.l.b16 %v2759
        %v3153 = vunpack.c.h.b16 %v2759
        %v3154 = vunpack.c.l.b16 %v2760
        %v3155 = vunpack.c.l.b16 %v2761
        %v3156 = vunpack.c.h.b16 %v2761
        %v3157 = vunpack.c.l.b16 %v2762
        %v3158 = vunpack.c.l.b16 %v2763
        %v3159 = vunpack.c.h.b16 %v2763
        %v3160 = vunpack.c.l.b16 %v2764
        %v3161 = vunpack.c.l.b16 %v2765
        %v3162 = vunpack.c.h.b16 %v2765
        %v3163 = vunpack.c.l.b16 %v2766
        %v3164 = vunpack.c.l.b16 %v2767
        %v3165 = vunpack.c.h.b16 %v2767
        %v3166 = vunpack.c.l.b16 %v2768
        %v3167 = vunpack.c.l.b16 %v2769
        %v3168 = vunpack.c.h.b16 %v2769
        %v3169 = vunpack.c.l.b16 %v2770
        %v3170 = vunpack.c.l.b16 %v2771
        %v3171 = vunpack.c.h.b16 %v2771
        %v3172 = vunpack.c.l.b16 %v2772
        %v3173 = vunpack.c.l.b16 %v2773
        %v3174 = vunpack.c.h.b16 %v2773
        %v3175 = vunpack.c.l.b16 %v2774
        %v3176 = vunpack.c.l.b16 %v2775
        %v3177 = vunpack.c.h.b16 %v2775
        %v3178 = vunpack.c.l.b16 %v2776
        %v3179 = vunpack.c.l.b16 %v2777
        %v3180 = vunpack.c.h.b16 %v2777
        %v3181 = vunpack.c.l.b16 %v2778
        %v3182 = vunpack.c.l.b16 %v2779
        %v3183 = vunpack.c.h.b16 %v2779
        %v3184 = vunpack.c.l.b16 %v2780
        %v3185 = vunpack.c.l.b16 %v2781
        %v3186 = vunpack.c.h.b16 %v2781
        %v3187 = vunpack.c.l.b16 %v2782
        %v3188 = vunpack.c.l.b16 %v2783
        %v3189 = vunpack.c.h.b16 %v2783
        %v3190 = vunpack.c.l.b16 %v2784
        %v3191 = vunpack.c.l.b16 %v2785
        %v3192 = vunpack.c.h.b16 %v2785
        %v3193 = vunpack.c.l.b16 %v2786
        %v3194 = vunpack.c.l.b16 %v2787
        %v3195 = vunpack.c.h.b16 %v2787
        %v3196 = vunpack.c.l.b16 %v2788
        %v3197 = vunpack.c.l.b16 %v2789
        %v3198 = vunpack.c.h.b16 %v2789
        %v3199 = vunpack.c.l.b16 %v2790
        %v3200 = vunpack.c.l.b16 %v2791
        %v3201 = vunpack.c.h.b16 %v2791
        %v3202 = vunpack.c.l.b16 %v2792
        %v3203 = vunpack.c.l.b16 %v2793
        %v3204 = vunpack.c.h.b16 %v2793
        %v3205 = vunpack.c.l.b16 %v2794
        %v3206 = vunpack.c.l.b16 %v2795
        %v3207 = vunpack.c.h.b16 %v2795
        %v3208 = vunpack.c.l.b16 %v2796
        %v3209 = vunpack.c.l.b16 %v2797
        %v3210 = vunpack.c.h.b16 %v2797
        %v3211 = vunpack.c.l.b16 %v2798
        %v3212 = vunpack.c.l.b16 %v2799
        %v3213 = vunpack.c.h.b16 %v2799
        %v3214 = vunpack.c.l.b16 %v2800
        %v3215 = vunpack.c.l.b16 %v2801
        %v3216 = vunpack.c.h.b16 %v2801
        %v3217 = vunpack.c.l.b16 %v2802
        %v3218 = vunpack.c.l.b16 %v2803
        %v3219 = vunpack.c.h.b16 %v2803
        %v3220 = vunpack.c.l.b16 %v2804
        %v3221 = vunpack.c.l.b16 %v2805
        %v3222 = vunpack.c.h.b16 %v2805
        %v3223 = vunpack.c.l.b16 %v2806
        %v3224 = vpack.c.b16 %v2987, %v2984
        %v3225 = vpack.c.b16 %v2988, %v2985
        %v3226 = vpack.c.b16 %v2989, %v2986
        %v3227 = vpack.c.b16 %v2993, %v2990
        %v3228 = vpack.c.b16 %v2994, %v2991
        %v3229 = vpack.c.b16 %v2995, %v2992
        %v3230 = vpack.c.b16 %v2999, %v2996
        %v3231 = vpack.c.b16 %v3000, %v2997
        %v3232 = vpack.c.b16 %v3001, %v2998
        %v3233 = vpack.c.b16 %v3005, %v3002
        %v3234 = vpack.c.b16 %v3006, %v3003
        %v3235 = vpack.c.b16 %v3007, %v3004
        %v3236 = vpack.c.b16 %v3011, %v3008
        %v3237 = vpack.c.b16 %v3012, %v3009
        %v3238 = vpack.c.b16 %v3013, %v3010
        %v3239 = vpack.c.b16 %v3017, %v3014
        %v3240 = vpack.c.b16 %v3018, %v3015
        %v3241 = vpack.c.b16 %v3019, %v3016
        %v3242 = vpack.c.b16 %v3023, %v3020
        %v3243 = vpack.c.b16 %v3024, %v3021
        %v3244 = vpack.c.b16 %v3025, %v3022
        %v3245 = vpack.c.b16 %v3029, %v3026
        %v3246 = vpack.c.b16 %v3030, %v3027
        %v3247 = vpack.c.b16 %v3031, %v3028
        %v3248 = vpack.c.b16 %v3035, %v3032
        %v3249 = vpack.c.b16 %v3036, %v3033
        %v3250 = vpack.c.b16 %v3037, %v3034
        %v3251 = vpack.c.b16 %v3041, %v3038
        %v3252 = vpack.c.b16 %v3042, %v3039
        %v3253 = vpack.c.b16 %v3043, %v3040
        %v3254 = vpack.c.b16 %v3047, %v3044
        %v3255 = vpack.c.b16 %v3048, %v3045
        %v3256 = vpack.c.b16 %v3049, %v3046
        %v3257 = vpack.c.b16 %v3053, %v3050
        %v3258 = vpack.c.b16 %v3054, %v3051
        %v3259 = vpack.c.b16 %v3055, %v3052
        %v3260 = vpack.c.b16 %v3059, %v3056
        %v3261 = vpack.c.b16 %v3060, %v3057
        %v3262 = vpack.c.b16 %v3061, %v3058
        %v3263 = vpack.c.b16 %v3065, %v3062
        %v3264 = vpack.c.b16 %v3066, %v3063
        %v3265 = vpack.c.b16 %v3067, %v3064
        %v3266 = vpack.c.b16 %v3071, %v3068
        %v3267 = vpack.c.b16 %v3072, %v3069
        %v3268 = vpack.c.b16 %v3073, %v3070
        %v3269 = vpack.c.b16 %v3077, %v3074
        %v3270 = vpack.c.b16 %v3078, %v3075
        %v3271 = vpack.c.b16 %v3079, %v3076
        %v3272 = vpack.c.b16 %v3083, %v3080
        %v3273 = vpack.c.b16 %v3084, %v3081
        %v3274 = vpack.c.b16 %v3085, %v3082
        %v3275 = vpack.c.b16 %v3089, %v3086
        %v3276 = vpack.c.b16 %v3090, %v3087
        %v3277 = vpack.c.b16 %v3091, %v3088
        %v3278 = vpack.c.b16 %v3095, %v3092
        %v3279 = vpack.c.b16 %v3096, %v3093
        %v3280 = vpack.c.b16 %v3097, %v3094
        %v3281 = vpack.c.b16 %v3101, %v3098
        %v3282 = vpack.c.b16 %v3102, %v3099
        %v3283 = vpack.c.b16 %v3103, %v3100
        %v3284 = vpack.c.b16 %v3107, %v3104
        %v3285 = vpack.c.b16 %v3108, %v3105
        %v3286 = vpack.c.b16 %v3109, %v3106
        %v3287 = vpack.c.b16 %v3113, %v3110
        %v3288 = vpack.c.b16 %v3114, %v3111
        %v3289 = vpack.c.b16 %v3115, %v3112
        %v3290 = vpack.c.b16 %v3119, %v3116
        %v3291 = vpack.c.b16 %v3120, %v3117
        %v3292 = vpack.c.b16 %v3121, %v3118
        %v3293 = vpack.c.b16 %v3125, %v3122
        %v3294 = vpack.c.b16 %v3126, %v3123
        %v3295 = vpack.c.b16 %v3127, %v3124
        %v3296 = vpack.c.b16 %v3131, %v3128
        %v3297 = vpack.c.b16 %v3132, %v3129
        %v3298 = vpack.c.b16 %v3133, %v3130
        %v3299 = vpack.c.b16 %v3137, %v3134
        %v3300 = vpack.c.b16 %v3138, %v3135
        %v3301 = vpack.c.b16 %v3139, %v3136
        %v3302 = vpack.c.b16 %v3143, %v3140
        %v3303 = vpack.c.b16 %v3144, %v3141
        %v3304 = vpack.c.b16 %v3145, %v3142
        %v3305 = vpack.c.b16 %v3149, %v3146
        %v3306 = vpack.c.b16 %v3150, %v3147
        %v3307 = vpack.c.b16 %v3151, %v3148
        %v3308 = vpack.c.b16 %v3155, %v3152
        %v3309 = vpack.c.b16 %v3156, %v3153
        %v3310 = vpack.c.b16 %v3157, %v3154
        %v3311 = vpack.c.b16 %v3161, %v3158
        %v3312 = vpack.c.b16 %v3162, %v3159
        %v3313 = vpack.c.b16 %v3163, %v3160
        %v3314 = vpack.c.b16 %v3167, %v3164
        %v3315 = vpack.c.b16 %v3168, %v3165
        %v3316 = vpack.c.b16 %v3169, %v3166
        %v3317 = vpack.c.b16 %v3173, %v3170
        %v3318 = vpack.c.b16 %v3174, %v3171
        %v3319 = vpack.c.b16 %v3175, %v3172
        %v3320 = vpack.c.b16 %v3179, %v3176
        %v3321 = vpack.c.b16 %v3180, %v3177
        %v3322 = vpack.c.b16 %v3181, %v3178
        %v3323 = vpack.c.b16 %v3185, %v3182
        %v3324 = vpack.c.b16 %v3186, %v3183
        %v3325 = vpack.c.b16 %v3187, %v3184
        %v3326 = vpack.c.b16 %v3191, %v3188
        %v3327 = vpack.c.b16 %v3192, %v3189
        %v3328 = vpack.c.b16 %v3193, %v3190
        %v3329 = vpack.c.b16 %v3197, %v3194
        %v3330 = vpack.c.b16 %v3198, %v3195
        %v3331 = vpack.c.b16 %v3199, %v3196
        %v3332 = vpack.c.b16 %v3203, %v3200
        %v3333 = vpack.c.b16 %v3204, %v3201
        %v3334 = vpack.c.b16 %v3205, %v3202
        %v3335 = vpack.c.b16 %v3209, %v3206
        %v3336 = vpack.c.b16 %v3210, %v3207
        %v3337 = vpack.c.b16 %v3211, %v3208
        %v3338 = vpack.c.b16 %v3215, %v3212
        %v3339 = vpack.c.b16 %v3216, %v3213
        %v3340 = vpack.c.b16 %v3217, %v3214
        %v3341 = vpack.c.b16 %v3221, %v3218
        %v3342 = vpack.c.b16 %v3222, %v3219
        %v3343 = vpack.c.b16 %v3223, %v3220
        %3464 = vmatprep.subr.bf16.mxu0 %v3225
        %3465 = vmatpush1.bf16.msra.mxu0 %v3224
        %3466 = vmatprep.subr.bf16.mxu0 %v3228
        %3467 = vmatpush1.bf16.msra.mxu0 %v3227
        %3468 = vmatprep.subr.bf16.mxu0 %v3231
        %3469 = vmatpush1.bf16.msra.mxu0 %v3230
        %3470 = vmatprep.subr.bf16.mxu0 %v3234
        %3471 = vmatpush1.bf16.msra.mxu0 %v3233
        %3472 = vmatprep.subr.bf16.mxu0 %v3237
        %3473 = vmatpush1.bf16.msra.mxu0 %v3236
        %3474 = vmatprep.subr.bf16.mxu0 %v3240
        %3475 = vmatpush1.bf16.msra.mxu0 %v3239
        %3476 = vmatprep.subr.bf16.mxu0 %v3243
        %3477 = vmatpush1.bf16.msra.mxu0 %v3242
        %3478 = vmatprep.subr.bf16.mxu0 %v3246
        %3479 = vmatpush1.bf16.msra.mxu0 %v3245
        %3480 = vmatprep.subr.bf16.mxu0 %v3249
        %3481 = vmatpush1.bf16.msra.mxu0 %v3248
        %3482 = vmatprep.subr.bf16.mxu0 %v3252
        %3483 = vmatpush1.bf16.msra.mxu0 %v3251
        %3484 = vmatprep.subr.bf16.mxu0 %v3255
        %3485 = vmatpush1.bf16.msra.mxu0 %v3254
        %3486 = vmatprep.subr.bf16.mxu0 %v3258
        %3487 = vmatpush1.bf16.msra.mxu0 %v3257
        %3488 = vmatprep.subr.bf16.mxu0 %v3261
        %3489 = vmatpush1.bf16.msra.mxu0 %v3260
        %3490 = vmatprep.subr.bf16.mxu0 %v3264
        %3491 = vmatpush1.bf16.msra.mxu0 %v3263
        %3492 = vmatprep.subr.bf16.mxu0 %v3267
        %3493 = vmatpush1.bf16.msra.mxu0 %v3266
        %3494 = vmatprep.subr.bf16.mxu0 %v3270
        %3495 = vmatpush1.bf16.msra.mxu0 %v3269
        %3496 = vmatprep.mubr.bf16.mxu0 %v2643
        %3497 = vmatmul.mubr.bf16.gmra.mrb[0].mxu0 %v2642
        %v3498 = vpop.f32.mrb[0].mxu0
        %v3499 = vadd.f32 %v2812, %v3498
        %v3500 = vpop.f32.mrb[0].mxu0
        %v3501 = vadd.f32 %v2816, %v3500
        %v3502 = vpop.f32.mrb[0].mxu0
        %v3503 = vadd.f32 %v2812, %v3502
        %v3504 = vpop.f32.mrb[0].mxu0
        %v3505 = vadd.f32 %v2816, %v3504
        %3506 = vdwg.mxu0
        %3507 = vmatprep.subr.bf16.mxu0 %v3273
        %3508 = vmatpush1.bf16.msra.mxu0 %v3272
        %3509 = vmatprep.subr.bf16.mxu0 %v3276
        %3510 = vmatpush1.bf16.msra.mxu0 %v3275
        %3511 = vmatprep.subr.bf16.mxu0 %v3279
        %3512 = vmatpush1.bf16.msra.mxu0 %v3278
        %3513 = vmatprep.subr.bf16.mxu0 %v3282
        %3514 = vmatpush1.bf16.msra.mxu0 %v3281
        %3515 = vmatprep.subr.bf16.mxu0 %v3285
        %3516 = vmatpush1.bf16.msra.mxu0 %v3284
        %3517 = vmatprep.subr.bf16.mxu0 %v3288
        %3518 = vmatpush1.bf16.msra.mxu0 %v3287
        %3519 = vmatprep.subr.bf16.mxu0 %v3291
        %3520 = vmatpush1.bf16.msra.mxu0 %v3290
        %3521 = vmatprep.subr.bf16.mxu0 %v3294
        %3522 = vmatpush1.bf16.msra.mxu0 %v3293
        %3523 = vmatprep.subr.bf16.mxu0 %v3297
        %3524 = vmatpush1.bf16.msra.mxu0 %v3296
        %3525 = vmatprep.subr.bf16.mxu0 %v3300
        %3526 = vmatpush1.bf16.msra.mxu0 %v3299
        %3527 = vmatprep.subr.bf16.mxu0 %v3303
        %3528 = vmatpush1.bf16.msra.mxu0 %v3302
        %3529 = vmatprep.subr.bf16.mxu0 %v3306
        %3530 = vmatpush1.bf16.msra.mxu0 %v3305
        %3531 = vmatprep.subr.bf16.mxu0 %v3309
        %3532 = vmatpush1.bf16.msra.mxu0 %v3308
        %3533 = vmatprep.subr.bf16.mxu0 %v3312
        %3534 = vmatpush1.bf16.msra.mxu0 %v3311
        %3535 = vmatprep.subr.bf16.mxu0 %v3315
        %3536 = vmatpush1.bf16.msra.mxu0 %v3314
        %3537 = vmatprep.subr.bf16.mxu0 %v3318
        %3538 = vmatpush1.bf16.msra.mxu0 %v3317
        %3539 = vmatprep.mubr.bf16.mxu0 %v2645
        %3540 = vmatmul.mubr.bf16.gmra.mrb[0].mxu0 %v2644
        %v3541 = vpop.f32.mrb[0].mxu0
        %v3542 = vadd.f32 %v3499, %v3541
        %v3543 = vpop.f32.mrb[0].mxu0
        %v3544 = vadd.f32 %v3501, %v3543
        %v3545 = vpop.f32.mrb[0].mxu0
        %v3546 = vadd.f32 %v3503, %v3545
        %v3547 = vpop.f32.mrb[0].mxu0
        %v3548 = vadd.f32 %v3505, %v3547
        %3549 = vdwg.mxu0
        %3550 = vmatprep.subr.bf16.mxu0 %v3321
        %3551 = vmatpush1.bf16.msra.mxu0 %v3320
        %3552 = vmatprep.subr.bf16.mxu0 %v3324
        %3553 = vmatpush1.bf16.msra.mxu0 %v3323
        %3554 = vmatprep.subr.bf16.mxu0 %v3327
        %3555 = vmatpush1.bf16.msra.mxu0 %v3326
        %3556 = vmatprep.subr.bf16.mxu0 %v3330
        %3557 = vmatpush1.bf16.msra.mxu0 %v3329
        %3558 = vmatprep.subr.bf16.mxu0 %v3333
        %3559 = vmatpush1.bf16.msra.mxu0 %v3332
        %3560 = vmatprep.subr.bf16.mxu0 %v3336
        %3561 = vmatpush1.bf16.msra.mxu0 %v3335
        %3562 = vmatprep.subr.bf16.mxu0 %v3339
        %3563 = vmatpush1.bf16.msra.mxu0 %v3338
        %3564 = vmatprep.subr.bf16.mxu0 %v3342
        %3565 = vmatpush1.bf16.msra.mxu0 %v3341
        %3566 = vmatprep.subr.bf16.mxu0 0
        %3567 = vmatpush1.bf16.msra.mxu0 0
        %3568 = vmatprep.subr.bf16.mxu0 0
        %3569 = vmatpush1.bf16.msra.mxu0 0
        %3570 = vmatprep.subr.bf16.mxu0 0
        %3571 = vmatpush1.bf16.msra.mxu0 0
        %3572 = vmatprep.subr.bf16.mxu0 0
        %3573 = vmatpush1.bf16.msra.mxu0 0
        %3574 = vmatprep.subr.bf16.mxu0 0
        %3575 = vmatpush1.bf16.msra.mxu0 0
        %3576 = vmatprep.subr.bf16.mxu0 0
        %3577 = vmatpush1.bf16.msra.mxu0 0
        %3578 = vmatprep.subr.bf16.mxu0 0
        %3579 = vmatpush1.bf16.msra.mxu0 0
        %3580 = vmatprep.subr.bf16.mxu0 0
        %3581 = vmatpush1.bf16.msra.mxu0 0
        %3582 = vmatprep.mubr.bf16.mxu0 0
        %3583 = vmatmul.mubr.bf16.gmra.mrb[0].mxu0 %v2646
        %v3584 = vpop.f32.mrb[0].mxu0
        %v3585 = vadd.f32 %v3542, %v3584
        %v3586 = vpop.f32.mrb[0].mxu0
        %v3587 = vadd.f32 %v3544, %v3586
        %v3588 = vpop.f32.mrb[0].mxu0
        %v3589 = vadd.f32 %v3546, %v3588
        %v3590 = vpop.f32.mrb[0].mxu0
        %v3591 = vadd.f32 %v3548, %v3590
        %3592 = vdwg.mxu0
        %3593 = vmatprep.subr.bf16.mxu0 0
        %3594 = vmatpush1.bf16.msra.mxu0 %v3226
        %3595 = vmatprep.subr.bf16.mxu0 0
        %3596 = vmatpush1.bf16.msra.mxu0 %v3229
        %3597 = vmatprep.subr.bf16.mxu0 0
        %3598 = vmatpush1.bf16.msra.mxu0 %v3232
        %3599 = vmatprep.subr.bf16.mxu0 0
        %3600 = vmatpush1.bf16.msra.mxu0 %v3235
        %3601 = vmatprep.subr.bf16.mxu0 0
        %3602 = vmatpush1.bf16.msra.mxu0 %v3238
        %3603 = vmatprep.subr.bf16.mxu0 0
        %3604 = vmatpush1.bf16.msra.mxu0 %v3241
        %3605 = vmatprep.subr.bf16.mxu0 0
        %3606 = vmatpush1.bf16.msra.mxu0 %v3244
        %3607 = vmatprep.subr.bf16.mxu0 0
        %3608 = vmatpush1.bf16.msra.mxu0 %v3247
        %3609 = vmatprep.subr.bf16.mxu0 0
        %3610 = vmatpush1.bf16.msra.mxu0 %v3250
        %3611 = vmatprep.subr.bf16.mxu0 0
        %3612 = vmatpush1.bf16.msra.mxu0 %v3253
        %3613 = vmatprep.subr.bf16.mxu0 0
        %3614 = vmatpush1.bf16.msra.mxu0 %v3256
        %3615 = vmatprep.subr.bf16.mxu0 0
        %3616 = vmatpush1.bf16.msra.mxu0 %v3259
        %3617 = vmatprep.subr.bf16.mxu0 0
        %3618 = vmatpush1.bf16.msra.mxu0 %v3262
        %3619 = vmatprep.subr.bf16.mxu0 0
        %3620 = vmatpush1.bf16.msra.mxu0 %v3265
        %3621 = vmatprep.subr.bf16.mxu0 0
        %3622 = vmatpush1.bf16.msra.mxu0 %v3268
        %3623 = vmatprep.subr.bf16.mxu0 0
        %3624 = vmatpush1.bf16.msra.mxu0 %v3271
        %3625 = vmatprep.mubr.bf16.mxu0 %v2643
        %3626 = vmatmul.mubr.bf16.gmra.mrb[0].mxu0 %v2642
        %v3627 = vpop.f32.mrb[0].mxu0
        %v3628 = vadd.f32 %v2820, %v3627
        %v3629 = vpop.f32.mrb[0].mxu0
        %v3630 = vpop.f32.mrb[0].mxu0
        %v3631 = vadd.f32 %v2820, %v3630
        %v3632 = vpop.f32.mrb[0].mxu0
        %3633 = vdwg.mxu0
        %3634 = vmatprep.subr.bf16.mxu0 0
        %3635 = vmatpush1.bf16.msra.mxu0 %v3274
        %3636 = vmatprep.subr.bf16.mxu0 0
        %3637 = vmatpush1.bf16.msra.mxu0 %v3277
        %3638 = vmatprep.subr.bf16.mxu0 0
        %3639 = vmatpush1.bf16.msra.mxu0 %v3280
        %3640 = vmatprep.subr.bf16.mxu0 0
        %3641 = vmatpush1.bf16.msra.mxu0 %v3283
        %3642 = vmatprep.subr.bf16.mxu0 0
        %3643 = vmatpush1.bf16.msra.mxu0 %v3286
        %3644 = vmatprep.subr.bf16.mxu0 0
        %3645 = vmatpush1.bf16.msra.mxu0 %v3289
        %3646 = vmatprep.subr.bf16.mxu0 0
        %3647 = vmatpush1.bf16.msra.mxu0 %v3292
        %3648 = vmatprep.subr.bf16.mxu0 0
        %3649 = vmatpush1.bf16.msra.mxu0 %v3295
        %3650 = vmatprep.subr.bf16.mxu0 0
        %3651 = vmatpush1.bf16.msra.mxu0 %v3298
        %3652 = vmatprep.subr.bf16.mxu0 0
        %3653 = vmatpush1.bf16.msra.mxu0 %v3301
        %3654 = vmatprep.subr.bf16.mxu0 0
        %3655 = vmatpush1.bf16.msra.mxu0 %v3304
        %3656 = vmatprep.subr.bf16.mxu0 0
        %3657 = vmatpush1.bf16.msra.mxu0 %v3307
        %3658 = vmatprep.subr.bf16.mxu0 0
        %3659 = vmatpush1.bf16.msra.mxu0 %v3310
        %3660 = vmatprep.subr.bf16.mxu0 0
        %3661 = vmatpush1.bf16.msra.mxu0 %v3313
        %3662 = vmatprep.subr.bf16.mxu0 0
        %3663 = vmatpush1.bf16.msra.mxu0 %v3316
        %3664 = vmatprep.subr.bf16.mxu0 0
        %3665 = vmatpush1.bf16.msra.mxu0 %v3319
        %3666 = vmatprep.mubr.bf16.mxu0 %v2645
        %3667 = vmatmul.mubr.bf16.gmra.mrb[0].mxu0 %v2644
        %v3668 = vpop.f32.mrb[0].mxu0
        %v3669 = vadd.f32 %v3628, %v3668
        %v3670 = vpop.f32.mrb[0].mxu0
        %v3671 = vpop.f32.mrb[0].mxu0
        %v3672 = vadd.f32 %v3631, %v3671
        %v3673 = vpop.f32.mrb[0].mxu0
        %3674 = vdwg.mxu0
        %3675 = vmatprep.subr.bf16.mxu0 0
        %3676 = vmatpush1.bf16.msra.mxu0 %v3322
        %3677 = vmatprep.subr.bf16.mxu0 0
        %3678 = vmatpush1.bf16.msra.mxu0 %v3325
        %3679 = vmatprep.subr.bf16.mxu0 0
        %3680 = vmatpush1.bf16.msra.mxu0 %v3328
        %3681 = vmatprep.subr.bf16.mxu0 0
        %3682 = vmatpush1.bf16.msra.mxu0 %v3331
        %3683 = vmatprep.subr.bf16.mxu0 0
        %3684 = vmatpush1.bf16.msra.mxu0 %v3334
        %3685 = vmatprep.subr.bf16.mxu0 0
        %3686 = vmatpush1.bf16.msra.mxu0 %v3337
        %3687 = vmatprep.subr.bf16.mxu0 0
        %3688 = vmatpush1.bf16.msra.mxu0 %v3340
        %3689 = vmatprep.subr.bf16.mxu0 0
        %3690 = vmatpush1.bf16.msra.mxu0 %v3343
        %3691 = vmatprep.subr.bf16.mxu0 0
        %3692 = vmatpush1.bf16.msra.mxu0 0
        %3693 = vmatprep.subr.bf16.mxu0 0
        %3694 = vmatpush1.bf16.msra.mxu0 0
        %3695 = vmatprep.subr.bf16.mxu0 0
        %3696 = vmatpush1.bf16.msra.mxu0 0
        %3697 = vmatprep.subr.bf16.mxu0 0
        %3698 = vmatpush1.bf16.msra.mxu0 0
        %3699 = vmatprep.subr.bf16.mxu0 0
        %3700 = vmatpush1.bf16.msra.mxu0 0
        %3701 = vmatprep.subr.bf16.mxu0 0
        %3702 = vmatpush1.bf16.msra.mxu0 0
        %3703 = vmatprep.subr.bf16.mxu0 0
        %3704 = vmatpush1.bf16.msra.mxu0 0
        %3705 = vmatprep.subr.bf16.mxu0 0
        %3706 = vmatpush1.bf16.msra.mxu0 0
        %3707 = vmatprep.mubr.bf16.mxu0 0
        %3708 = vmatmul.mubr.bf16.gmra.mrb[0].mxu0 %v2646
        %v3709 = vpop.f32.mrb[0].mxu0
        %v3710 = vadd.f32 %v3669, %v3709
        %v3711 = vpop.f32.mrb[0].mxu0
        %v3712 = vpop.f32.mrb[0].mxu0
        %v3713 = vadd.f32 %v3672, %v3712
        %v3714 = vpop.f32.mrb[0].mxu0
        %3715 = vdwg.mxu0
        %v3716 = vmax.f32 %v3585, 0.0
        %v3717 = vmax.f32 %v3587, 0.0
        %v3718 = vmax.f32 %v3710, 0.0
        %v3719 = vmax.f32 %v3589, 0.0
        %v3720 = vmax.f32 %v3591, 0.0
        %v3721 = vmax.f32 %v3713, 0.0
        %v3722 = vpack.c.bf16 %v3719, %v3716
        %v3723 = vpack.c.bf16 %v3720, %v3717
        %v3724 = vpack.c.bf16 %v3721, %v3718
        %v3725 = vld [vmem:[#allocation8] sm:$0xff]
        %v3726 = vld [vmem:[#allocation8 + $0x8] sm:$0xff]
        %v3727 = vld [vmem:[#allocation8 + $0x10] sm:$0xff]
        %v3728 = vld [vmem:[#allocation8 + $0x18] sm:$0xff]
        %v3729 = vld [vmem:[#allocation8 + $0x20] sm:$0xff]
        %v3730 = vld [vmem:[#allocation8 + $0x28] sm:$0xff]
        %v3731 = vld [vmem:[#allocation8 + $0x30] sm:$0xff]
        %v3732 = vld [vmem:[#allocation8 + $0x38] sm:$0xff]
        %v3733 = vld [vmem:[#allocation8 + $0x40] sm:$0xff]
        %v3734 = vld [vmem:[#allocation8 + $0x48] sm:$0xff]
        %v3735 = vld [vmem:[#allocation8 + $0x50] sm:$0xff]
        %v3736 = vld [vmem:[#allocation8 + $0x58] sm:$0xff]
        %v3737 = vld [vmem:[#allocation8 + $0x60] sm:$0xff]
        %v3738 = vld [vmem:[#allocation8 + $0x68] sm:$0xff]
        %v3739 = vld [vmem:[#allocation8 + $0x70] sm:$0xff]
        %v3740 = vld [vmem:[#allocation8 + $0x78] sm:$0xff]
        %v3741 = vld [vmem:[#allocation8 + $0x80] sm:$0xff]
        %v3742 = vld [vmem:[#allocation8 + $0x88] sm:$0xff]
        %v3743 = vld [vmem:[#allocation8 + $0x90] sm:$0xff]
        %v3744 = vld [vmem:[#allocation8 + $0x98] sm:$0xff]
        %v3745 = vld [vmem:[#allocation8 + $0xa0] sm:$0xff]
        %v3746 = vld [vmem:[#allocation8 + $0xa8] sm:$0xff]
        %v3747 = vld [vmem:[#allocation8 + $0xb0] sm:$0xff]
        %v3748 = vld [vmem:[#allocation8 + $0xb8] sm:$0xff]
        %v3749 = vld [vmem:[#allocation8 + $0xc0] sm:$0xff]
        %v3750 = vld [vmem:[#allocation8 + $0xc8] sm:$0xff]
        %v3751 = vld [vmem:[#allocation8 + $0xd0] sm:$0xff]
        %v3752 = vld [vmem:[#allocation8 + $0xd8] sm:$0xff]
        %v3753 = vld [vmem:[#allocation8 + $0xe0] sm:$0xff]
        %v3754 = vld [vmem:[#allocation8 + $0xe8] sm:$0xff]
        %v3755 = vld [vmem:[#allocation8 + $0xf0] sm:$0xff]
        %v3756 = vld [vmem:[#allocation8 + $0xf8] sm:$0xff]
        %v3757 = vld [vmem:[#allocation8 + $0x100] sm:$0xff]
        %v3758 = vld [vmem:[#allocation8 + $0x108] sm:$0xff]
        %v3759 = vld [vmem:[#allocation8 + $0x110] sm:$0xff]
        %v3760 = vld [vmem:[#allocation8 + $0x118] sm:$0xff]
        %v3761 = vld [vmem:[#allocation8 + $0x120] sm:$0xff]
        %v3762 = vld [vmem:[#allocation8 + $0x128] sm:$0xff]
        %v3763 = vld [vmem:[#allocation8 + $0x130] sm:$0xff]
        %v3764 = vld [vmem:[#allocation8 + $0x138] sm:$0xff]
        %v3765 = vld [vmem:[#allocation8 + $0x140] sm:$0xff]
        %v3766 = vld [vmem:[#allocation8 + $0x148] sm:$0xff]
        %v3767 = vld [vmem:[#allocation8 + $0x150] sm:$0xff]
        %v3768 = vld [vmem:[#allocation8 + $0x158] sm:$0xff]
        %v3769 = vld [vmem:[#allocation8 + $0x160] sm:$0xff]
        %v3770 = vld [vmem:[#allocation8 + $0x168] sm:$0xff]
        %v3771 = vld [vmem:[#allocation8 + $0x170] sm:$0xff]
        %v3772 = vld [vmem:[#allocation8 + $0x178] sm:$0xff]
        %v3773 = vld [vmem:[%s6] sm:$0x3]
        %v3775 = vlaneseq
        %v3776 = vshrl.u32 %v3775, 7
        %v3777 = vsub.s32 0, %v3776
        %v3778 = vrot.slane %v3773, %v3777
        %v3779 = vlaneseq
        %v3780 = vshrl.u32 %v3779, 7
        %v3781 = vsub.s32 1, %v3780
        %v3782 = vrot.slane %v3773, %v3781
        %v3833 = vunpack.c.l.b16 %v3725
        %v3834 = vunpack.c.h.b16 %v3725
        %v3835 = vunpack.c.l.b16 %v3726
        %v3836 = vunpack.c.h.b16 %v3726
        %v3837 = vunpack.c.l.b16 %v3727
        %v3838 = vunpack.c.h.b16 %v3727
        %v3839 = vunpack.c.l.b16 %v3728
        %v3840 = vunpack.c.h.b16 %v3728
        %v3841 = vunpack.c.l.b16 %v3729
        %v3842 = vunpack.c.h.b16 %v3729
        %v3843 = vunpack.c.l.b16 %v3730
        %v3844 = vunpack.c.h.b16 %v3730
        %v3845 = vunpack.c.l.b16 %v3731
        %v3846 = vunpack.c.h.b16 %v3731
        %v3847 = vunpack.c.l.b16 %v3732
        %v3848 = vunpack.c.h.b16 %v3732
        %v3849 = vunpack.c.l.b16 %v3733
        %v3850 = vunpack.c.h.b16 %v3733
        %v3851 = vunpack.c.l.b16 %v3734
        %v3852 = vunpack.c.h.b16 %v3734
        %v3853 = vunpack.c.l.b16 %v3735
        %v3854 = vunpack.c.h.b16 %v3735
        %v3855 = vunpack.c.l.b16 %v3736
        %v3856 = vunpack.c.h.b16 %v3736
        %v3857 = vunpack.c.l.b16 %v3737
        %v3858 = vunpack.c.h.b16 %v3737
        %v3859 = vunpack.c.l.b16 %v3738
        %v3860 = vunpack.c.h.b16 %v3738
        %v3861 = vunpack.c.l.b16 %v3739
        %v3862 = vunpack.c.h.b16 %v3739
        %v3863 = vunpack.c.l.b16 %v3740
        %v3864 = vunpack.c.h.b16 %v3740
        %v3865 = vunpack.c.l.b16 %v3741
        %v3866 = vunpack.c.h.b16 %v3741
        %v3867 = vunpack.c.l.b16 %v3742
        %v3868 = vunpack.c.h.b16 %v3742
        %v3869 = vunpack.c.l.b16 %v3743
        %v3870 = vunpack.c.h.b16 %v3743
        %v3871 = vunpack.c.l.b16 %v3744
        %v3872 = vunpack.c.h.b16 %v3744
        %v3873 = vunpack.c.l.b16 %v3745
        %v3874 = vunpack.c.h.b16 %v3745
        %v3875 = vunpack.c.l.b16 %v3746
        %v3876 = vunpack.c.h.b16 %v3746
        %v3877 = vunpack.c.l.b16 %v3747
        %v3878 = vunpack.c.h.b16 %v3747
        %v3879 = vunpack.c.l.b16 %v3748
        %v3880 = vunpack.c.h.b16 %v3748
        %v3881 = vunpack.c.l.b16 %v3749
        %v3882 = vunpack.c.h.b16 %v3749
        %v3883 = vunpack.c.l.b16 %v3750
        %v3884 = vunpack.c.h.b16 %v3750
        %v3885 = vunpack.c.l.b16 %v3751
        %v3886 = vunpack.c.h.b16 %v3751
        %v3887 = vunpack.c.l.b16 %v3752
        %v3888 = vunpack.c.h.b16 %v3752
        %v3889 = vunpack.c.l.b16 %v3753
        %v3890 = vunpack.c.h.b16 %v3753
        %v3891 = vunpack.c.l.b16 %v3754
        %v3892 = vunpack.c.h.b16 %v3754
        %v3893 = vunpack.c.l.b16 %v3755
        %v3894 = vunpack.c.h.b16 %v3755
        %v3895 = vunpack.c.l.b16 %v3756
        %v3896 = vunpack.c.h.b16 %v3756
        %v3897 = vunpack.c.l.b16 %v3757
        %v3898 = vunpack.c.h.b16 %v3757
        %v3899 = vunpack.c.l.b16 %v3758
        %v3900 = vunpack.c.h.b16 %v3758
        %v3901 = vunpack.c.l.b16 %v3759
        %v3902 = vunpack.c.h.b16 %v3759
        %v3903 = vunpack.c.l.b16 %v3760
        %v3904 = vunpack.c.h.b16 %v3760
        %v3905 = vunpack.c.l.b16 %v3761
        %v3906 = vunpack.c.h.b16 %v3761
        %v3907 = vunpack.c.l.b16 %v3762
        %v3908 = vunpack.c.h.b16 %v3762
        %v3909 = vunpack.c.l.b16 %v3763
        %v3910 = vunpack.c.h.b16 %v3763
        %v3911 = vunpack.c.l.b16 %v3764
        %v3912 = vunpack.c.h.b16 %v3764
        %v3913 = vunpack.c.l.b16 %v3765
        %v3914 = vunpack.c.h.b16 %v3765
        %v3915 = vunpack.c.l.b16 %v3766
        %v3916 = vunpack.c.h.b16 %v3766
        %v3917 = vunpack.c.l.b16 %v3767
        %v3918 = vunpack.c.h.b16 %v3767
        %v3919 = vunpack.c.l.b16 %v3768
        %v3920 = vunpack.c.h.b16 %v3768
        %v3921 = vunpack.c.l.b16 %v3769
        %v3922 = vunpack.c.h.b16 %v3769
        %v3923 = vunpack.c.l.b16 %v3770
        %v3924 = vunpack.c.h.b16 %v3770
        %v3925 = vunpack.c.l.b16 %v3771
        %v3926 = vunpack.c.h.b16 %v3771
        %v3927 = vunpack.c.l.b16 %v3772
        %v3928 = vunpack.c.h.b16 %v3772
        %v3929 = vpack.c.b16 %v3835, %v3833
        %v3930 = vpack.c.b16 %v3836, %v3834
        %v3931 = vpack.c.b16 %v3839, %v3837
        %v3932 = vpack.c.b16 %v3840, %v3838
        %v3933 = vpack.c.b16 %v3843, %v3841
        %v3934 = vpack.c.b16 %v3844, %v3842
        %v3935 = vpack.c.b16 %v3847, %v3845
        %v3936 = vpack.c.b16 %v3848, %v3846
        %v3937 = vpack.c.b16 %v3851, %v3849
        %v3938 = vpack.c.b16 %v3852, %v3850
        %v3939 = vpack.c.b16 %v3855, %v3853
        %v3940 = vpack.c.b16 %v3856, %v3854
        %v3941 = vpack.c.b16 %v3859, %v3857
        %v3942 = vpack.c.b16 %v3860, %v3858
        %v3943 = vpack.c.b16 %v3863, %v3861
        %v3944 = vpack.c.b16 %v3864, %v3862
        %v3945 = vpack.c.b16 %v3867, %v3865
        %v3946 = vpack.c.b16 %v3868, %v3866
        %v3947 = vpack.c.b16 %v3871, %v3869
        %v3948 = vpack.c.b16 %v3872, %v3870
        %v3949 = vpack.c.b16 %v3875, %v3873
        %v3950 = vpack.c.b16 %v3876, %v3874
        %v3951 = vpack.c.b16 %v3879, %v3877
        %v3952 = vpack.c.b16 %v3880, %v3878
        %v3953 = vpack.c.b16 %v3883, %v3881
        %v3954 = vpack.c.b16 %v3884, %v3882
        %v3955 = vpack.c.b16 %v3887, %v3885
        %v3956 = vpack.c.b16 %v3888, %v3886
        %v3957 = vpack.c.b16 %v3891, %v3889
        %v3958 = vpack.c.b16 %v3892, %v3890
        %v3959 = vpack.c.b16 %v3895, %v3893
        %v3960 = vpack.c.b16 %v3896, %v3894
        %v3961 = vpack.c.b16 %v3899, %v3897
        %v3962 = vpack.c.b16 %v3900, %v3898
        %v3963 = vpack.c.b16 %v3903, %v3901
        %v3964 = vpack.c.b16 %v3904, %v3902
        %v3965 = vpack.c.b16 %v3907, %v3905
        %v3966 = vpack.c.b16 %v3908, %v3906
        %v3967 = vpack.c.b16 %v3911, %v3909
        %v3968 = vpack.c.b16 %v3912, %v3910
        %v3969 = vpack.c.b16 %v3915, %v3913
        %v3970 = vpack.c.b16 %v3916, %v3914
        %v3971 = vpack.c.b16 %v3919, %v3917
        %v3972 = vpack.c.b16 %v3920, %v3918
        %v3973 = vpack.c.b16 %v3923, %v3921
        %v3974 = vpack.c.b16 %v3924, %v3922
        %v3975 = vpack.c.b16 %v3927, %v3925
        %v3976 = vpack.c.b16 %v3928, %v3926
        %4025 = vmatprep.subr.bf16.mxu0 %v3930
        %4026 = vmatpush1.bf16.msra.mxu0 %v3929
        %4027 = vmatprep.subr.bf16.mxu0 %v3932
        %4028 = vmatpush1.bf16.msra.mxu0 %v3931
        %4029 = vmatprep.subr.bf16.mxu0 %v3934
        %4030 = vmatpush1.bf16.msra.mxu0 %v3933
        %4031 = vmatprep.subr.bf16.mxu0 %v3936
        %4032 = vmatpush1.bf16.msra.mxu0 %v3935
        %4033 = vmatprep.subr.bf16.mxu0 %v3938
        %4034 = vmatpush1.bf16.msra.mxu0 %v3937
        %4035 = vmatprep.subr.bf16.mxu0 %v3940
        %4036 = vmatpush1.bf16.msra.mxu0 %v3939
        %4037 = vmatprep.subr.bf16.mxu0 %v3942
        %4038 = vmatpush1.bf16.msra.mxu0 %v3941
        %4039 = vmatprep.subr.bf16.mxu0 %v3944
        %4040 = vmatpush1.bf16.msra.mxu0 %v3943
        %4041 = vmatprep.subr.bf16.mxu0 %v3946
        %4042 = vmatpush1.bf16.msra.mxu0 %v3945
        %4043 = vmatprep.subr.bf16.mxu0 %v3948
        %4044 = vmatpush1.bf16.msra.mxu0 %v3947
        %4045 = vmatprep.subr.bf16.mxu0 %v3950
        %4046 = vmatpush1.bf16.msra.mxu0 %v3949
        %4047 = vmatprep.subr.bf16.mxu0 %v3952
        %4048 = vmatpush1.bf16.msra.mxu0 %v3951
        %4049 = vmatprep.subr.bf16.mxu0 %v3954
        %4050 = vmatpush1.bf16.msra.mxu0 %v3953
        %4051 = vmatprep.subr.bf16.mxu0 %v3956
        %4052 = vmatpush1.bf16.msra.mxu0 %v3955
        %4053 = vmatprep.subr.bf16.mxu0 %v3958
        %4054 = vmatpush1.bf16.msra.mxu0 %v3957
        %4055 = vmatprep.subr.bf16.mxu0 %v3960
        %4056 = vmatpush1.bf16.msra.mxu0 %v3959
        %4057 = vmatprep.mubr.bf16.mxu0 %v3723
        %4058 = vmatmul.mubr.bf16.gmra.mrb[0].mxu0 %v3722
        %v4059 = vpop.f32.mrb[0].mxu0
        %v4060 = vadd.f32 %v3778, %v4059
        %v4061 = vpop.f32.mrb[0].mxu0
        %v4062 = vadd.f32 %v3782, %v4061
        %v4063 = vpop.f32.mrb[0].mxu0
        %v4064 = vadd.f32 %v3778, %v4063
        %v4065 = vpop.f32.mrb[0].mxu0
        %v4066 = vadd.f32 %v3782, %v4065
        %4067 = vdwg.mxu0
        %4068 = vmatprep.subr.bf16.mxu0 %v3962
        %4069 = vmatpush1.bf16.msra.mxu0 %v3961
        %4070 = vmatprep.subr.bf16.mxu0 %v3964
        %4071 = vmatpush1.bf16.msra.mxu0 %v3963
        %4072 = vmatprep.subr.bf16.mxu0 %v3966
        %4073 = vmatpush1.bf16.msra.mxu0 %v3965
        %4074 = vmatprep.subr.bf16.mxu0 %v3968
        %4075 = vmatpush1.bf16.msra.mxu0 %v3967
        %4076 = vmatprep.subr.bf16.mxu0 %v3970
        %4077 = vmatpush1.bf16.msra.mxu0 %v3969
        %4078 = vmatprep.subr.bf16.mxu0 %v3972
        %4079 = vmatpush1.bf16.msra.mxu0 %v3971
        %4080 = vmatprep.subr.bf16.mxu0 %v3974
        %4081 = vmatpush1.bf16.msra.mxu0 %v3973
        %4082 = vmatprep.subr.bf16.mxu0 %v3976
        %4083 = vmatpush1.bf16.msra.mxu0 %v3975
        %4084 = vmatprep.subr.bf16.mxu0 0
        %4085 = vmatpush1.bf16.msra.mxu0 0
        %4086 = vmatprep.subr.bf16.mxu0 0
        %4087 = vmatpush1.bf16.msra.mxu0 0
        %4088 = vmatprep.subr.bf16.mxu0 0
        %4089 = vmatpush1.bf16.msra.mxu0 0
        %4090 = vmatprep.subr.bf16.mxu0 0
        %4091 = vmatpush1.bf16.msra.mxu0 0
        %4092 = vmatprep.subr.bf16.mxu0 0
        %4093 = vmatpush1.bf16.msra.mxu0 0
        %4094 = vmatprep.subr.bf16.mxu0 0
        %4095 = vmatpush1.bf16.msra.mxu0 0
        %4096 = vmatprep.subr.bf16.mxu0 0
        %4097 = vmatpush1.bf16.msra.mxu0 0
        %4098 = vmatprep.subr.bf16.mxu0 0
        %4099 = vmatpush1.bf16.msra.mxu0 0
        %4100 = vmatprep.mubr.bf16.mxu0 0
        %4101 = vmatmul.mubr.bf16.gmra.mrb[0].mxu0 %v3724
        %v4102 = vpop.f32.mrb[0].mxu0
        %v4103 = vadd.f32 %v4060, %v4102
        %v4104 = vpop.f32.mrb[0].mxu0
        %v4105 = vadd.f32 %v4062, %v4104
        %v4106 = vpop.f32.mrb[0].mxu0
        %v4107 = vadd.f32 %v4064, %v4106
        %v4108 = vpop.f32.mrb[0].mxu0
        %v4109 = vadd.f32 %v4066, %v4108
        %4110 = vdwg.mxu0
        %v4111 = vmax.f32 %v4103, 0.0
        %v4112 = vmax.f32 %v4105, 0.0
        %v4113 = vmax.f32 %v4107, 0.0
        %v4114 = vmax.f32 %v4109, 0.0
        %v4115 = vpack.c.bf16 %v4113, %v4111
        %v4116 = vpack.c.bf16 %v4114, %v4112
        %v4117 = vld [vmem:[#allocation10] sm:$0xf]
        %v4118 = vld [vmem:[#allocation10 + $0x4] sm:$0xf]
        %v4119 = vld [vmem:[#allocation10 + $0x8] sm:$0xf]
        %v4120 = vld [vmem:[#allocation10 + $0xc] sm:$0xf]
        %v4121 = vld [vmem:[#allocation10 + $0x10] sm:$0xf]
        %v4122 = vld [vmem:[#allocation10 + $0x14] sm:$0xf]
        %v4123 = vld [vmem:[#allocation10 + $0x18] sm:$0xf]
        %v4124 = vld [vmem:[#allocation10 + $0x1c] sm:$0xf]
        %v4125 = vld [vmem:[#allocation10 + $0x20] sm:$0xf]
        %v4126 = vld [vmem:[#allocation10 + $0x24] sm:$0xf]
        %v4127 = vld [vmem:[#allocation10 + $0x28] sm:$0xf]
        %v4128 = vld [vmem:[#allocation10 + $0x2c] sm:$0xf]
        %v4129 = vld [vmem:[#allocation10 + $0x30] sm:$0xf]
        %v4130 = vld [vmem:[#allocation10 + $0x34] sm:$0xf]
        %v4131 = vld [vmem:[#allocation10 + $0x38] sm:$0xf]
        %v4132 = vld [vmem:[#allocation10 + $0x3c] sm:$0xf]
        %v4133 = vld [vmem:[#allocation10 + $0x40] sm:$0xf]
        %v4134 = vld [vmem:[#allocation10 + $0x44] sm:$0xf]
        %v4135 = vld [vmem:[#allocation10 + $0x48] sm:$0xf]
        %v4136 = vld [vmem:[#allocation10 + $0x4c] sm:$0xf]
        %v4137 = vld [vmem:[#allocation10 + $0x50] sm:$0xf]
        %v4138 = vld [vmem:[#allocation10 + $0x54] sm:$0xf]
        %v4139 = vld [vmem:[#allocation10 + $0x58] sm:$0xf]
        %v4140 = vld [vmem:[#allocation10 + $0x5c] sm:$0xf]
        %v4141 = vld [vmem:[#allocation10 + $0x60] sm:$0xf]
        %v4142 = vld [vmem:[#allocation10 + $0x64] sm:$0xf]
        %v4143 = vld [vmem:[#allocation10 + $0x68] sm:$0xf]
        %v4144 = vld [vmem:[#allocation10 + $0x6c] sm:$0xf]
        %v4145 = vld [vmem:[#allocation10 + $0x70] sm:$0xf]
        %v4146 = vld [vmem:[#allocation10 + $0x74] sm:$0xf]
        %v4147 = vld [vmem:[#allocation10 + $0x78] sm:$0xf]
        %v4148 = vld [vmem:[#allocation10 + $0x7c] sm:$0xf]
        %v4149 = vld [vmem:[%s8] sm:$0x1]
        %v4151 = vlaneseq
        %v4152 = vshrl.u32 %v4151, 7
        %v4153 = vsub.s32 0, %v4152
        %v4154 = vrot.slane %v4149, %v4153
        %v4188 = vunpack.c.l.b16 %v4117
        %v4189 = vunpack.c.l.b16 %v4118
        %v4190 = vunpack.c.l.b16 %v4119
        %v4191 = vunpack.c.l.b16 %v4120
        %v4192 = vunpack.c.l.b16 %v4121
        %v4193 = vunpack.c.l.b16 %v4122
        %v4194 = vunpack.c.l.b16 %v4123
        %v4195 = vunpack.c.l.b16 %v4124
        %v4196 = vunpack.c.l.b16 %v4125
        %v4197 = vunpack.c.l.b16 %v4126
        %v4198 = vunpack.c.l.b16 %v4127
        %v4199 = vunpack.c.l.b16 %v4128
        %v4200 = vunpack.c.l.b16 %v4129
        %v4201 = vunpack.c.l.b16 %v4130
        %v4202 = vunpack.c.l.b16 %v4131
        %v4203 = vunpack.c.l.b16 %v4132
        %v4204 = vunpack.c.l.b16 %v4133
        %v4205 = vunpack.c.l.b16 %v4134
        %v4206 = vunpack.c.l.b16 %v4135
        %v4207 = vunpack.c.l.b16 %v4136
        %v4208 = vunpack.c.l.b16 %v4137
        %v4209 = vunpack.c.l.b16 %v4138
        %v4210 = vunpack.c.l.b16 %v4139
        %v4211 = vunpack.c.l.b16 %v4140
        %v4212 = vunpack.c.l.b16 %v4141
        %v4213 = vunpack.c.l.b16 %v4142
        %v4214 = vunpack.c.l.b16 %v4143
        %v4215 = vunpack.c.l.b16 %v4144
        %v4216 = vunpack.c.l.b16 %v4145
        %v4217 = vunpack.c.l.b16 %v4146
        %v4218 = vunpack.c.l.b16 %v4147
        %v4219 = vunpack.c.l.b16 %v4148
        %v4220 = vpack.c.b16 %v4189, %v4188
        %v4221 = vpack.c.b16 %v4191, %v4190
        %v4222 = vpack.c.b16 %v4193, %v4192
        %v4223 = vpack.c.b16 %v4195, %v4194
        %v4224 = vpack.c.b16 %v4197, %v4196
        %v4225 = vpack.c.b16 %v4199, %v4198
        %v4226 = vpack.c.b16 %v4201, %v4200
        %v4227 = vpack.c.b16 %v4203, %v4202
        %v4228 = vpack.c.b16 %v4205, %v4204
        %v4229 = vpack.c.b16 %v4207, %v4206
        %v4230 = vpack.c.b16 %v4209, %v4208
        %v4231 = vpack.c.b16 %v4211, %v4210
        %v4232 = vpack.c.b16 %v4213, %v4212
        %v4233 = vpack.c.b16 %v4215, %v4214
        %v4234 = vpack.c.b16 %v4217, %v4216
        %v4235 = vpack.c.b16 %v4219, %v4218
        %4252 = vmatprep.subr.bf16.mxu0 0
        %4253 = vmatpush1.bf16.msra.mxu0 %v4220
        %4254 = vmatprep.subr.bf16.mxu0 0
        %4255 = vmatpush1.bf16.msra.mxu0 %v4221
        %4256 = vmatprep.subr.bf16.mxu0 0
        %4257 = vmatpush1.bf16.msra.mxu0 %v4222
        %4258 = vmatprep.subr.bf16.mxu0 0
        %4259 = vmatpush1.bf16.msra.mxu0 %v4223
        %4260 = vmatprep.subr.bf16.mxu0 0
        %4261 = vmatpush1.bf16.msra.mxu0 %v4224
        %4262 = vmatprep.subr.bf16.mxu0 0
        %4263 = vmatpush1.bf16.msra.mxu0 %v4225
        %4264 = vmatprep.subr.bf16.mxu0 0
        %4265 = vmatpush1.bf16.msra.mxu0 %v4226
        %4266 = vmatprep.subr.bf16.mxu0 0
        %4267 = vmatpush1.bf16.msra.mxu0 %v4227
        %4268 = vmatprep.subr.bf16.mxu0 0
        %4269 = vmatpush1.bf16.msra.mxu0 %v4228
        %4270 = vmatprep.subr.bf16.mxu0 0
        %4271 = vmatpush1.bf16.msra.mxu0 %v4229
        %4272 = vmatprep.subr.bf16.mxu0 0
        %4273 = vmatpush1.bf16.msra.mxu0 %v4230
        %4274 = vmatprep.subr.bf16.mxu0 0
        %4275 = vmatpush1.bf16.msra.mxu0 %v4231
        %4276 = vmatprep.subr.bf16.mxu0 0
        %4277 = vmatpush1.bf16.msra.mxu0 %v4232
        %4278 = vmatprep.subr.bf16.mxu0 0
        %4279 = vmatpush1.bf16.msra.mxu0 %v4233
        %4280 = vmatprep.subr.bf16.mxu0 0
        %4281 = vmatpush1.bf16.msra.mxu0 %v4234
        %4282 = vmatprep.subr.bf16.mxu0 0
        %4283 = vmatpush1.bf16.msra.mxu0 %v4235
        %4284 = vmatprep.mubr.bf16.mxu0 %v4116
        %4285 = vmatmul.mubr.bf16.gmra.mrb[0].mxu0 %v4115
        %v4286 = vpop.f32.mrb[0].mxu0
        %v4287 = vadd.f32 %v4154, %v4286
        %v4288 = vpop.f32.mrb[0].mxu0
        %v4289 = vpop.f32.mrb[0].mxu0
        %v4290 = vadd.f32 %v4154, %v4289
        %v4291 = vpop.f32.mrb[0].mxu0
        %4292 = vdwg.mxu0
        %v4293 = vmax.f32 %v4287, 0.0
        %v4294 = vmax.f32 %v4290, 0.0
        %v4295 = vpack.c.bf16 %v4294, %v4293
        %v4296 = vld [vmem:[#allocation11] sm:$0xf]
        %v4297 = vld [vmem:[#allocation11 + $0x4] sm:$0xf]
        %v4298 = vld [vmem:[#allocation11 + $0x8] sm:$0xf]
        %v4299 = vld [vmem:[#allocation11 + $0xc] sm:$0xf]
        %v4300 = vld [vmem:[#allocation11 + $0x10] sm:$0xf]
        %v4301 = vld [vmem:[#allocation11 + $0x14] sm:$0xf]
        %v4302 = vld [vmem:[#allocation11 + $0x18] sm:$0xf]
        %v4303 = vld [vmem:[#allocation11 + $0x1c] sm:$0xf]
        %v4304 = vld [vmem:[#allocation11 + $0x20] sm:$0xf]
        %v4305 = vld [vmem:[#allocation11 + $0x24] sm:$0xf]
        %v4306 = vld [vmem:[#allocation11 + $0x28] sm:$0xf]
        %v4307 = vld [vmem:[#allocation11 + $0x2c] sm:$0xf]
        %v4308 = vld [vmem:[#allocation11 + $0x30] sm:$0xf]
        %v4309 = vld [vmem:[#allocation11 + $0x34] sm:$0xf]
        %v4310 = vld [vmem:[#allocation11 + $0x38] sm:$0xf]
        %v4311 = vld [vmem:[#allocation11 + $0x3c] sm:$0xf]
        %v4312 = vld [vmem:[%s10] sm:$0x1]
        %v4314 = vlaneseq
        %v4315 = vshrl.u32 %v4314, 7
        %v4316 = vsub.s32 0, %v4315
        %v4317 = vrot.slane %v4312, %v4316
        %v4335 = vunpack.c.l.b16 %v4296
        %v4336 = vunpack.c.l.b16 %v4297
        %v4337 = vunpack.c.l.b16 %v4298
        %v4338 = vunpack.c.l.b16 %v4299
        %v4339 = vunpack.c.l.b16 %v4300
        %v4340 = vunpack.c.l.b16 %v4301
        %v4341 = vunpack.c.l.b16 %v4302
        %v4342 = vunpack.c.l.b16 %v4303
        %v4343 = vunpack.c.l.b16 %v4304
        %v4344 = vunpack.c.l.b16 %v4305
        %v4345 = vunpack.c.l.b16 %v4306
        %v4346 = vunpack.c.l.b16 %v4307
        %v4347 = vunpack.c.l.b16 %v4308
        %v4348 = vunpack.c.l.b16 %v4309
        %v4349 = vunpack.c.l.b16 %v4310
        %v4350 = vunpack.c.l.b16 %v4311
        %v4351 = vpack.c.b16 %v4336, %v4335
        %v4352 = vpack.c.b16 %v4338, %v4337
        %v4353 = vpack.c.b16 %v4340, %v4339
        %v4354 = vpack.c.b16 %v4342, %v4341
        %v4355 = vpack.c.b16 %v4344, %v4343
        %v4356 = vpack.c.b16 %v4346, %v4345
        %v4357 = vpack.c.b16 %v4348, %v4347
        %v4358 = vpack.c.b16 %v4350, %v4349
        %4367 = vmatprep.subr.bf16.mxu0 0
        %4368 = vmatpush1.bf16.msra.mxu0 %v4351
        %4369 = vmatprep.subr.bf16.mxu0 0
        %4370 = vmatpush1.bf16.msra.mxu0 %v4352
        %4371 = vmatprep.subr.bf16.mxu0 0
        %4372 = vmatpush1.bf16.msra.mxu0 %v4353
        %4373 = vmatprep.subr.bf16.mxu0 0
        %4374 = vmatpush1.bf16.msra.mxu0 %v4354
        %4375 = vmatprep.subr.bf16.mxu0 0
        %4376 = vmatpush1.bf16.msra.mxu0 %v4355
        %4377 = vmatprep.subr.bf16.mxu0 0
        %4378 = vmatpush1.bf16.msra.mxu0 %v4356
        %4379 = vmatprep.subr.bf16.mxu0 0
        %4380 = vmatpush1.bf16.msra.mxu0 %v4357
        %4381 = vmatprep.subr.bf16.mxu0 0
        %4382 = vmatpush1.bf16.msra.mxu0 %v4358
        %4383 = vmatprep.subr.bf16.mxu0 0
        %4384 = vmatpush1.bf16.msra.mxu0 0
        %4385 = vmatprep.subr.bf16.mxu0 0
        %4386 = vmatpush1.bf16.msra.mxu0 0
        %4387 = vmatprep.subr.bf16.mxu0 0
        %4388 = vmatpush1.bf16.msra.mxu0 0
        %4389 = vmatprep.subr.bf16.mxu0 0
        %4390 = vmatpush1.bf16.msra.mxu0 0
        %4391 = vmatprep.subr.bf16.mxu0 0
        %4392 = vmatpush1.bf16.msra.mxu0 0
        %4393 = vmatprep.subr.bf16.mxu0 0
        %4394 = vmatpush1.bf16.msra.mxu0 0
        %4395 = vmatprep.subr.bf16.mxu0 0
        %4396 = vmatpush1.bf16.msra.mxu0 0
        %4397 = vmatprep.subr.bf16.mxu0 0
        %4398 = vmatpush1.bf16.msra.mxu0 0
        %4399 = vmatprep.mubr.bf16.mxu0 0
        %4400 = vmatmul.mubr.bf16.gmra.mrb[0].mxu0 %v4295
        %v4401 = vpop.f32.mrb[0].mxu0
        %v4402 = vadd.f32 %v4317, %v4401
        %v4403 = vpop.f32.mrb[0].mxu0
        %v4404 = vpop.f32.mrb[0].mxu0
        %v4405 = vadd.f32 %v4317, %v4404
        %v4406 = vpop.f32.mrb[0].mxu0
        %4407 = vdwg.mxu0
        %v4408 = vlaneseq
        %v4409 = vand.u32 %v4408, 127
        %vm4410 = vcmp.lt.s32.totalorder %v4409, 10
        %v4411 = vsel %vm4410, %v4402, -inf
        %v4412 = vsel %vm4410, %v4405, -inf
        %4413 = vmax.xlane.f32.xlu0 %v4411
        %v4414 = vpop.xlane.xlu0 %4413
        %4415 = vmax.xlane.f32.xlu0 %v4412
        %v4416 = vpop.xlane.xlu0 %4415
        %v4417 = vsub.f32 %v4411, %v4414
        %v4418 = vsub.f32 %v4412, %v4416
        %v4419 = vmul.f32 %v4417, 1.442695
        %v4420 = vpow.pop %v4419
        %v4421 = vmul.f32 %v4418, 1.442695
        %v4422 = vpow.pop %v4421
        %4423 = vadd.xlane.f32.xlu0 %v4420
        %v4424 = vpop.xlane.xlu0 %4423
        %4425 = vadd.xlane.f32.xlu0 %v4422
        %v4426 = vpop.xlane.xlu0 %4425
        %v4427 = vrcp.pop %v4424
        %v4428 = vrcp.pop %v4426
        %v4429 = vmul.f32 %v4420, %v4427
        %v4430 = vmul.f32 %v4422, %v4428
        %v4431 = vpack.c.bf16 %v4430, %v4429
        %v4433 = vunpack.c.l.b16 %v4431
        %v4434 = vunpack.c.h.b16 %v4431
        %v4435 = vpack.c.b16 %v4433, %v4433
        %v4436 = vpack.c.b16 %v4434, %v4434
        %4439 = vst [vmem:[%s478] sm:$0xf] %v4435
        %4440 = vst [vmem:[%s478 + $0x4] sm:$0xf] %v4436
        %s4441 = sand.u32 %s275, 1
        %s4442 = scalar_lea.sflag [#allocation4], %s4441
        %s4443 = sand.u32 %s275, 1
        %s4444 = smul.addr %s4443, 8
        %s4445 = scalar_lea.vmem [#allocation13], %s4444
        // Predicated region
        $region89: #{tpu_custom_call.1} parent=63 // pred_check
          %p4446 = pneg %p285
        $region90: #{tpu_custom_call.1} parent=63 // pred_check_branch
          %4448 = sbr.rel (%p4446) target = $region92
        $region91: #{tpu_custom_call.1} parent=63 // pred_region
          %s4449 = smul.u32 2, %s31
          %s4451 = ssub.s32 128, 128
          %4452 = vsyncadd %s4442, %s4451
          %s4453 = smul.addr %s4449, 64
          %s4454 = scalar_lea.hbm %s11, %s4453
          %s4455 = sshll.u32 %s4445, 4
          %s4456 = int_to_ptr.vmem [resolvable:$true] %s4455
          %4461 = dma.vmem_to_hbm [thread:$0]  %s4456, 128, %s4454, %s4442, 64, 64, 4
        $region92: #{tpu_custom_call.1} parent=63 // pred_fallthru
          _
      $region64: #{tpu_custom_call.1} parent=5 // pred_fallthru
        _
      %p4462 = scmp.le.s32.totalorder 2, %s26
      // Predicated region
      $region93: #{tpu_custom_call.1} parent=5 // pred_check
        %p4463 = pneg %p4462
      $region94: #{tpu_custom_call.1} parent=5 // pred_check_branch
        %4465 = sbr.rel (%p4463) target = $region96
      $region95: #{tpu_custom_call.1} parent=5 // pred_region
        %s4466 = ssub.s32 %s26, 2
        // Predicated region
        $region97: #{tpu_custom_call.1} parent=95 // pred_check
          %p4467 = pneg %p291
        $region98: #{tpu_custom_call.1} parent=95 // pred_check_branch
          %4469 = sbr.rel (%p4467) target = $region100
        $region99: #{tpu_custom_call.1} parent=95 // pred_region
          %s4470 = sand.u32 %s276, 1
          %s4471 = scalar_lea.sflag [#allocation4], %s4470
          %s4472 = sand.u32 %s276, 1
          %s4473 = smul.addr %s4472, 8
          %s4474 = scalar_lea.vmem [#allocation13], %s4473
          %4475 = dma.done %s4471, 128
        $region100: #{tpu_custom_call.1} parent=95 // pred_fallthru
          _
      $region96: #{tpu_custom_call.1} parent=5 // pred_fallthru
        _
    $region6: #{tpu_custom_call.1} parent=1 // loop_footer
      %s30 = sadd.s32 1, %s26
    $region7: #{tpu_custom_call.1} parent=1 // loop_footer_branch
      %25 = sbr.rel target = $region3
    $region8: #{tpu_custom_call.1} parent=1 // loop_exit
      _
    %4476 = vsyncpa [#allocation3], 1
    %s4477 = scalar_lea.sflag [#allocation3], 1
    %4478 = vsyncpa %s4477, 1
    %4479 = vsyncpa [#allocation6], 1
    %4480 = vsyncpa [#allocation9], 1
    %4481 = vsyncpa [#allocation12], 1
    %4482 = vsyncpa [#allocation4], 1
    %s4483 = scalar_lea.sflag [#allocation4], 1
    %4484 = vsyncpa %s4483, 1

</llo_original>
